<compile_context>
chip_gen: v5e
topology: v5e:2x2
jax: 0.10.0
libtpu: 0.0.40
codegen_flags: <defaults>
</compile_context>

<pallas_src>
import functools
import math

import jax
import jax.numpy as jnp
from jax import lax
from jax.experimental import pallas as pl
from jax.experimental.pallas import tpu as pltpu


# ----------------------------------------------------------------------------
# Fused kernel
# ----------------------------------------------------------------------------
def fused_multitask_kernel(x_ref, wih1_ref, whh1_ref, b1_ref,
                           wih2_ref, whh2_ref, b2_ref,
                           ws_ref, bs_ref, wh_ref, bh_ref,
                           out_ref, xp_ref, seq_ref, *, T, Bp, H):
    """x_ref: (T*Bp, D) time-major rows (row = t*Bp + b).

    Fused weight layouts (built in init_params):
      W_ih: (D_in, 8H), W_hh: (2H, 8H) block-diagonal over directions, b: (1, 8H)
      column order is gate-major: [i_f i_b | f_f f_b | g_f g_b | o_f o_b].
    Scratch:
      xp_ref : (T*Bp, 8H) gate pre-activations of the current layer,
      seq_ref: (T*Bp, 2H) layer-1 bidirectional hidden sequence (never HBM).
    """
    f32 = jnp.float32
    H2, H4, H6, H8 = 2 * H, 4 * H, 6 * H, 8 * H

    # Lane mask selecting forward-direction columns of the gate-major layout.
    lane = lax.broadcasted_iota(jnp.int32, (Bp, H8), 1)
    fwd_lane = (lane % H2) < H

    def bidir_sweep(whh_ref_l, store_seq):
        h0 = jnp.zeros((Bp, H2), f32)   # [h_f | h_b]
        c0 = jnp.zeros((Bp, H2), f32)   # [c_f | c_b]

        def body(s, carry):
            h, c = carry
            row_f = pl.multiple_of(s * Bp, Bp)            # fwd cell: time s
            row_b = pl.multiple_of((T - 1 - s) * Bp, Bp)  # bwd cell: time T-1-s
            xp_f = xp_ref[pl.ds(row_f, Bp), :]
            xp_b = xp_ref[pl.ds(row_b, Bp), :]
            # One 256-lane recurrence matmul drives BOTH directions (block-diag W_hh);
            # fwd/bwd input projections are merged with a VPU lane select.
            gates = (jnp.where(fwd_lane, xp_f, xp_b)
                     + jnp.dot(h, whh_ref_l[...], preferred_element_type=f32))
            # One wide sigmoid + two narrow tanh instead of 10 per-gate transcendentals.
            sig = jax.nn.sigmoid(gates)
            i_g = sig[:, 0:H2]
            f_g = sig[:, H2:H4]
            o_g = sig[:, H6:H8]
            g_g = jnp.tanh(gates[:, H4:H6])
            c_new = f_g * c + i_g * g_g
            h_new = o_g * jnp.tanh(c_new)
            if store_seq:
                # Layer-1 output sequence stays in VMEM scratch (aligned rows,
                # same lane offsets as h_new -> no relayout).
                seq_ref[pl.ds(row_f, Bp), 0:H] = h_new[:, 0:H]
                seq_ref[pl.ds(row_b, Bp), H:H2] = h_new[:, H:H2]
            return h_new, c_new

        return lax.fori_loop(0, T, body, (h0, c0), unroll=True)

    # ---- LSTM layer 1 (input projection hoisted out of the recurrence) -------
    xp_ref[...] = jnp.dot(x_ref[...], wih1_ref[...],
                          preferred_element_type=f32) + b1_ref[...]
    bidir_sweep(whh1_ref, store_seq=True)

    # ---- LSTM layer 2 (inter-layer dropout p=0.3 is train-only -> identity) --
    xp_ref[...] = jnp.dot(seq_ref[...], wih2_ref[...],
                          preferred_element_type=f32) + b2_ref[...]
    (h2, _) = bidir_sweep(whh2_ref, store_seq=False)

    # ---- shared MLP + 3 classifier heads (heads fused, lane-padded output) ---
    # h2 == cat(h_n[-2], h_n[-1]) of the PyTorch reference.
    shared = jnp.maximum(
        jnp.dot(h2, ws_ref[...], preferred_element_type=f32) + bs_ref[...], 0.0)
    out_ref[...] = (jnp.dot(shared, wh_ref[...],
                            preferred_element_type=f32) + bh_ref[...])


# ----------------------------------------------------------------------------
# Parameters (PyTorch-style uniform(-1/sqrt(H), 1/sqrt(H)); the two LSTM biases
# b_ih + b_hh are folded; columns are laid out gate-major for the fused kernel).
# ----------------------------------------------------------------------------
def init_params(key, input_dim, hidden_dim, num_gesture, num_chinese, num_english):
    H = hidden_dim
    k = 1.0 / math.sqrt(H)

    def uni(rng, shape, bound):
        return jax.random.uniform(rng, shape, jnp.float32, -bound, bound)

    def gate_major(f_mat, b_mat):
        # (..., 4H) fwd + (..., 4H) bwd  ->  (..., 8H) [i_f i_b f_f f_b g_f g_b o_f o_b]
        parts = []
        for g in range(4):
            parts.append(f_mat[..., g * H:(g + 1) * H])
            parts.append(b_mat[..., g * H:(g + 1) * H])
        return jnp.concatenate(parts, axis=-1)

    def lstm_layer(rng, d_in):
        ks = jax.random.split(rng, 8)
        wih_f = uni(ks[0], (d_in, 4 * H), k)
        whh_f = uni(ks[1], (H, 4 * H), k)
        b_f = uni(ks[2], (1, 4 * H), k) + uni(ks[3], (1, 4 * H), k)   # b_ih + b_hh
        wih_b = uni(ks[4], (d_in, 4 * H), k)
        whh_b = uni(ks[5], (H, 4 * H), k)
        b_b = uni(ks[6], (1, 4 * H), k) + uni(ks[7], (1, 4 * H), k)
        wih = gate_major(wih_f, wih_b)                                 # (d_in, 8H)
        z = jnp.zeros_like(whh_f)
        whh = jnp.concatenate([gate_major(whh_f, z),                   # rows 0:H  = h_f
                               gate_major(z, whh_b)], axis=0)          # rows H:2H = h_b
        b = gate_major(b_f, b_b)                                       # (1, 8H)
        return wih, whh, b

    k1, k2, k3 = jax.random.split(key, 3)
    wih1, whh1, b1 = lstm_layer(k1, input_dim)
    wih2, whh2, b2 = lstm_layer(k2, 2 * H)

    ks = jax.random.split(k3, 8)
    ksh = 1.0 / math.sqrt(2 * H)
    ws = uni(ks[0], (2 * H, H), ksh)
    bs = uni(ks[1], (1, H), ksh)
    kh = 1.0 / math.sqrt(H)
    wg = uni(ks[2], (H, num_gesture), kh); bg = uni(ks[3], (1, num_gesture), kh)
    wc = uni(ks[4], (H, num_chinese), kh); bc = uni(ks[5], (1, num_chinese), kh)
    we = uni(ks[6], (H, num_english), kh); be = uni(ks[7], (1, num_english), kh)

    total_c = num_gesture + num_chinese + num_english
    c_pad = max(128, ((total_c + 127) // 128) * 128)   # lane-dense head output
    wh = jnp.zeros((H, c_pad), jnp.float32).at[:, :total_c].set(
        jnp.concatenate([wg, wc, we], axis=1))
    bh = jnp.zeros((1, c_pad), jnp.float32).at[:, :total_c].set(
        jnp.concatenate([bg, bc, be], axis=1))
    return (wih1, whh1, b1, wih2, whh2, b2, ws, bs, wh, bh)


# ----------------------------------------------------------------------------
# Forward pass (matches MultiTaskModel.forward with backbone='lstm', eval mode)
# ----------------------------------------------------------------------------
@functools.partial(jax.jit, static_argnames=("hidden_dim", "num_classes"))
def multitask_forward(x_btd, params, *, hidden_dim, num_classes):
    (wih1, whh1, b1, wih2, whh2, b2, ws, bs, wh, bh) = params
    B, T, D = x_btd.shape
    H = hidden_dim
    Bp = ((B + 7) // 8) * 8            # pad batch to a full sublane tile
    Bp = max(Bp, 8)
    c_pad = wh.shape[1]

    # batch-first -> time-major rows (row = t*Bp + b), zero-padded batch.
    x_tbd = jnp.transpose(x_btd, (1, 0, 2)).astype(jnp.float32)
    x_tbd = jnp.pad(x_tbd, ((0, 0), (0, Bp - B), (0, 0)))
    x_rows = x_tbd.reshape(T * Bp, D)

    vmem_specs = [pl.BlockSpec(memory_space=pltpu.MemorySpace.VMEM)
                  for _ in range(11)]
    out = pl.pallas_call(
        functools.partial(fused_multitask_kernel, T=T, Bp=Bp, H=H),
        out_shape=jax.ShapeDtypeStruct((Bp, c_pad), jnp.float32),
        in_specs=vmem_specs,
        out_specs=pl.BlockSpec(memory_space=pltpu.MemorySpace.VMEM),
        scratch_shapes=[
            pltpu.VMEM((T * Bp, 8 * H), jnp.float32),   # gate pre-activations
            pltpu.VMEM((T * Bp, 2 * H), jnp.float32),   # layer-1 hidden sequence
        ],
    )(x_rows, wih1, whh1, b1, wih2, whh2, b2, ws, bs, wh, bh)

    cg, cc, ce = num_classes
    return {
        "gesture": out[:B, :cg],
        "chinese": out[:B, cg:cg + cc],
        "english": out[:B, cg + cc:cg + cc + ce],
    }


if __name__ == "__main__":
    # Small shapes consistent with the module: batch=2, seq=8, input_dim=16,
    # hidden_dim=32, 10 classes per task (gesture / chinese / english).
    B, T, D = 2, 8, 16
    HIDDEN = 32
    NUM_CLASSES = (10, 10, 10)

    key = jax.random.PRNGKey(0)
    key, xk = jax.random.split(key)
    x = jax.random.normal(xk, (B, T, D), dtype=jnp.float32)
    params = init_params(key, D, HIDDEN, *NUM_CLASSES)

    out = multitask_forward(x, params, hidden_dim=HIDDEN, num_classes=NUM_CLASSES)
    out = jax.block_until_ready(out)
    assert out["gesture"].shape == (B, NUM_CLASSES[0]), out["gesture"].shape
    assert out["chinese"].shape == (B, NUM_CLASSES[1]), out["chinese"].shape
    assert out["english"].shape == (B, NUM_CLASSES[2]), out["english"].shape
    assert all(bool(jnp.all(jnp.isfinite(v))) for v in out.values())
    print("KERNEL_OK")
</pallas_src>

<mosaic_0001>
module attributes {stable_mosaic.version = 11 : i64} {
  func.func @fused_multitask_kernel(%arg0: memref<64x16xf32, #tpu.memory_space<vmem>>, %arg1: memref<16x256xf32, #tpu.memory_space<vmem>>, %arg2: memref<64x256xf32, #tpu.memory_space<vmem>>, %arg3: memref<1x256xf32, #tpu.memory_space<vmem>>, %arg4: memref<64x256xf32, #tpu.memory_space<vmem>>, %arg5: memref<64x256xf32, #tpu.memory_space<vmem>>, %arg6: memref<1x256xf32, #tpu.memory_space<vmem>>, %arg7: memref<64x32xf32, #tpu.memory_space<vmem>>, %arg8: memref<1x32xf32, #tpu.memory_space<vmem>>, %arg9: memref<32x128xf32, #tpu.memory_space<vmem>>, %arg10: memref<1x128xf32, #tpu.memory_space<vmem>>, %arg11: memref<8x128xf32, #tpu.memory_space<vmem>>, %arg12: memref<64x256xf32, #tpu.memory_space<vmem>>, %arg13: memref<64x64xf32, #tpu.memory_space<vmem>>) attributes {dimension_semantics = [], scalar_prefetch = 0 : i64, scratch_operands = 2 : i64, tpu.core_type = #tpu.core_type<tc>} {
    %0 = tpu.iota {dimensions = array<i32: 1>} : vector<8x256xi32>
    %c64_i32 = arith.constant 64 : i32
    %c0_i32 = arith.constant 0 : i32
    %1 = arith.cmpi eq, %c64_i32, %c0_i32 : i32
    %c1_i32 = arith.constant 1 : i32
    %2 = arith.select %1, %c1_i32, %c64_i32 : i32
    %3 = vector.broadcast %2 : i32 to vector<8x256xi32>
    %4 = arith.remsi %0, %3 : vector<8x256xi32>
    %c0_i32_0 = arith.constant 0 : i32
    %5 = vector.broadcast %c0_i32_0 : i32 to vector<8x256xi32>
    %6 = arith.cmpi ne, %4, %5 : vector<8x256xi32>
    %c0_i32_1 = arith.constant 0 : i32
    %7 = vector.broadcast %c0_i32_1 : i32 to vector<8x256xi32>
    %8 = arith.cmpi slt, %4, %7 : vector<8x256xi32>
    %c0_i32_2 = arith.constant 0 : i32
    %9 = arith.cmpi slt, %2, %c0_i32_2 : i32
    %10 = vector.broadcast %9 : i1 to vector<8x256xi1>
    %11 = vector.broadcast %10 : vector<8x256xi1> to vector<8x256xi1>
    %12 = arith.xori %8, %11 : vector<8x256xi1>
    %13 = arith.andi %12, %6 : vector<8x256xi1>
    %14 = vector.broadcast %2 : i32 to vector<8x256xi32>
    %15 = arith.addi %4, %14 : vector<8x256xi32>
    %16 = arith.select %13, %15, %4 : vector<8x256xi1>, vector<8x256xi32>
    %c32_i32 = arith.constant 32 : i32
    %17 = vector.broadcast %c32_i32 : i32 to vector<8x256xi32>
    %18 = arith.cmpi slt, %16, %17 : vector<8x256xi32>
    %c0 = arith.constant 0 : index
    %c0_3 = arith.constant 0 : index
    %19 = vector.load %arg0[%c0, %c0_3] : memref<64x16xf32, #tpu.memory_space<vmem>>, vector<64x16xf32>
    %c0_4 = arith.constant 0 : index
    %c0_5 = arith.constant 0 : index
    %20 = vector.load %arg1[%c0_4, %c0_5] : memref<16x256xf32, #tpu.memory_space<vmem>>, vector<16x256xf32>
    %cst = arith.constant dense<0.000000e+00> : vector<64x256xf32>
    %21 = tpu.matmul %19, %20, %cst {dimension_numbers = #tpu.dot_dimension_numbers<[1], [0], [0], [1], [0, 0, 1, 1], [], []>} : vector<64x16xf32>, vector<16x256xf32>, vector<64x256xf32> -> vector<64x256xf32>
    %c0_6 = arith.constant 0 : index
    %c0_7 = arith.constant 0 : index
    %22 = vector.load %arg3[%c0_6, %c0_7] : memref<1x256xf32, #tpu.memory_space<vmem>>, vector<1x256xf32>
    %23 = vector.broadcast %22 : vector<1x256xf32> to vector<64x256xf32>
    %24 = arith.addf %21, %23 : vector<64x256xf32>
    %c0_8 = arith.constant 0 : index
    %c0_9 = arith.constant 0 : index
    %25 = vector.load %arg12[%c0_8, %c0_9] : memref<64x256xf32, #tpu.memory_space<vmem>>, vector<64x256xf32>
    tpu.vector_store %arg12[%c0_8, %c0_9], %24 {strides = array<i32>} : memref<64x256xf32, #tpu.memory_space<vmem>>, vector<64x256xf32>,
    %cst_10 = arith.constant 0.000000e+00 : f32
    %26 = vector.broadcast %cst_10 : f32 to vector<8x64xf32>
    %cst_11 = arith.constant 0.000000e+00 : f32
    %27 = vector.broadcast %cst_11 : f32 to vector<8x64xf32>
    %c0_i32_12 = arith.constant 0 : i32
    %c8_i32 = arith.constant 8 : i32
    %28 = arith.muli %c0_i32_12, %c8_i32 : i32
    %29 = tpu.assume_multiple %28, 8 : i32
    %c7_i32 = arith.constant 7 : i32
    %30 = arith.subi %c7_i32, %c0_i32_12 : i32
    %c8_i32_13 = arith.constant 8 : i32
    %31 = arith.muli %30, %c8_i32_13 : i32
    %32 = tpu.assume_multiple %31, 8 : i32
    %33 = arith.index_cast %29 : i32 to index
    %c0_14 = arith.constant 0 : index
    %34 = vector.load %arg12[%33, %c0_14] : memref<64x256xf32, #tpu.memory_space<vmem>>, vector<8x256xf32>
    %35 = arith.index_cast %32 : i32 to index
    %c0_15 = arith.constant 0 : index
    %36 = vector.load %arg12[%35, %c0_15] : memref<64x256xf32, #tpu.memory_space<vmem>>, vector<8x256xf32>
    %37 = arith.select %18, %34, %36 : vector<8x256xi1>, vector<8x256xf32>
    %c0_16 = arith.constant 0 : index
    %c0_17 = arith.constant 0 : index
    %38 = vector.load %arg2[%c0_16, %c0_17] : memref<64x256xf32, #tpu.memory_space<vmem>>, vector<64x256xf32>
    %cst_18 = arith.constant dense<0.000000e+00> : vector<8x256xf32>
    %39 = tpu.matmul %26, %38, %cst_18 {dimension_numbers = #tpu.dot_dimension_numbers<[1], [0], [0], [1], [0, 0, 1, 1], [], []>} : vector<8x64xf32>, vector<64x256xf32>, vector<8x256xf32> -> vector<8x256xf32>
    %40 = arith.addf %37, %39 : vector<8x256xf32>
    %41 = arith.negf %40 : vector<8x256xf32>
    %42 = math.exp %41 : vector<8x256xf32>
    %cst_19 = arith.constant 1.000000e+00 : f32
    %43 = vector.broadcast %cst_19 : f32 to vector<8x256xf32>
    %44 = arith.addf %43, %42 : vector<8x256xf32>
    %45 = arith.divf %43, %44 : vector<8x256xf32>
    %46 = vector.extract_strided_slice %45 {offsets = [0, 0], sizes = [8, 64], strides = [1, 1]} : vector<8x256xf32> to vector<8x64xf32>
    %47 = vector.extract_strided_slice %45 {offsets = [0, 64], sizes = [8, 64], strides = [1, 1]} : vector<8x256xf32> to vector<8x64xf32>
    %48 = vector.extract_strided_slice %45 {offsets = [0, 192], sizes = [8, 64], strides = [1, 1]} : vector<8x256xf32> to vector<8x64xf32>
    %49 = vector.extract_strided_slice %40 {offsets = [0, 128], sizes = [8, 64], strides = [1, 1]} : vector<8x256xf32> to vector<8x64xf32>
    %50 = math.tanh %49 : vector<8x64xf32>
    %51 = arith.mulf %47, %27 : vector<8x64xf32>
    %52 = arith.mulf %46, %50 : vector<8x64xf32>
    %53 = arith.addf %51, %52 : vector<8x64xf32>
    %54 = math.tanh %53 : vector<8x64xf32>
    %55 = arith.mulf %48, %54 : vector<8x64xf32>
    %56 = vector.extract_strided_slice %55 {offsets = [0, 0], sizes = [8, 32], strides = [1, 1]} : vector<8x64xf32> to vector<8x32xf32>
    %57 = arith.index_cast %29 : i32 to index
    %c0_20 = arith.constant 0 : index
    %58 = vector.load %arg13[%57, %c0_20] : memref<64x64xf32, #tpu.memory_space<vmem>>, vector<8x32xf32>
    tpu.vector_store %arg13[%57, %c0_20], %56 {strides = array<i32>} : memref<64x64xf32, #tpu.memory_space<vmem>>, vector<8x32xf32>,
    %59 = vector.extract_strided_slice %55 {offsets = [0, 32], sizes = [8, 32], strides = [1, 1]} : vector<8x64xf32> to vector<8x32xf32>
    %60 = arith.index_cast %32 : i32 to index
    %c32 = arith.constant 32 : index
    %61 = vector.load %arg13[%60, %c32] : memref<64x64xf32, #tpu.memory_space<vmem>>, vector<8x32xf32>
    tpu.vector_store %arg13[%60, %c32], %59 {strides = array<i32>} : memref<64x64xf32, #tpu.memory_space<vmem>>, vector<8x32xf32>,
    %c1_i32_21 = arith.constant 1 : i32
    %c8_i32_22 = arith.constant 8 : i32
    %62 = arith.muli %c1_i32_21, %c8_i32_22 : i32
    %63 = tpu.assume_multiple %62, 8 : i32
    %c7_i32_23 = arith.constant 7 : i32
    %64 = arith.subi %c7_i32_23, %c1_i32_21 : i32
    %c8_i32_24 = arith.constant 8 : i32
    %65 = arith.muli %64, %c8_i32_24 : i32
    %66 = tpu.assume_multiple %65, 8 : i32
    %67 = arith.index_cast %63 : i32 to index
    %c0_25 = arith.constant 0 : index
    %68 = vector.load %arg12[%67, %c0_25] : memref<64x256xf32, #tpu.memory_space<vmem>>, vector<8x256xf32>
    %69 = arith.index_cast %66 : i32 to index
    %c0_26 = arith.constant 0 : index
    %70 = vector.load %arg12[%69, %c0_26] : memref<64x256xf32, #tpu.memory_space<vmem>>, vector<8x256xf32>
    %71 = arith.select %18, %68, %70 : vector<8x256xi1>, vector<8x256xf32>
    %c0_27 = arith.constant 0 : index
    %c0_28 = arith.constant 0 : index
    %72 = vector.load %arg2[%c0_27, %c0_28] : memref<64x256xf32, #tpu.memory_space<vmem>>, vector<64x256xf32>
    %cst_29 = arith.constant dense<0.000000e+00> : vector<8x256xf32>
    %73 = tpu.matmul %55, %72, %cst_29 {dimension_numbers = #tpu.dot_dimension_numbers<[1], [0], [0], [1], [0, 0, 1, 1], [], []>} : vector<8x64xf32>, vector<64x256xf32>, vector<8x256xf32> -> vector<8x256xf32>
    %74 = arith.addf %71, %73 : vector<8x256xf32>
    %75 = arith.negf %74 : vector<8x256xf32>
    %76 = math.exp %75 : vector<8x256xf32>
    %cst_30 = arith.constant 1.000000e+00 : f32
    %77 = vector.broadcast %cst_30 : f32 to vector<8x256xf32>
    %78 = arith.addf %77, %76 : vector<8x256xf32>
    %79 = arith.divf %77, %78 : vector<8x256xf32>
    %80 = vector.extract_strided_slice %79 {offsets = [0, 0], sizes = [8, 64], strides = [1, 1]} : vector<8x256xf32> to vector<8x64xf32>
    %81 = vector.extract_strided_slice %79 {offsets = [0, 64], sizes = [8, 64], strides = [1, 1]} : vector<8x256xf32> to vector<8x64xf32>
    %82 = vector.extract_strided_slice %79 {offsets = [0, 192], sizes = [8, 64], strides = [1, 1]} : vector<8x256xf32> to vector<8x64xf32>
    %83 = vector.extract_strided_slice %74 {offsets = [0, 128], sizes = [8, 64], strides = [1, 1]} : vector<8x256xf32> to vector<8x64xf32>
    %84 = math.tanh %83 : vector<8x64xf32>
    %85 = arith.mulf %81, %53 : vector<8x64xf32>
    %86 = arith.mulf %80, %84 : vector<8x64xf32>
    %87 = arith.addf %85, %86 : vector<8x64xf32>
    %88 = math.tanh %87 : vector<8x64xf32>
    %89 = arith.mulf %82, %88 : vector<8x64xf32>
    %90 = vector.extract_strided_slice %89 {offsets = [0, 0], sizes = [8, 32], strides = [1, 1]} : vector<8x64xf32> to vector<8x32xf32>
    %91 = arith.index_cast %63 : i32 to index
    %c0_31 = arith.constant 0 : index
    %92 = vector.load %arg13[%91, %c0_31] : memref<64x64xf32, #tpu.memory_space<vmem>>, vector<8x32xf32>
    tpu.vector_store %arg13[%91, %c0_31], %90 {strides = array<i32>} : memref<64x64xf32, #tpu.memory_space<vmem>>, vector<8x32xf32>,
    %93 = vector.extract_strided_slice %89 {offsets = [0, 32], sizes = [8, 32], strides = [1, 1]} : vector<8x64xf32> to vector<8x32xf32>
    %94 = arith.index_cast %66 : i32 to index
    %c32_32 = arith.constant 32 : index
    %95 = vector.load %arg13[%94, %c32_32] : memref<64x64xf32, #tpu.memory_space<vmem>>, vector<8x32xf32>
    tpu.vector_store %arg13[%94, %c32_32], %93 {strides = array<i32>} : memref<64x64xf32, #tpu.memory_space<vmem>>, vector<8x32xf32>,
    %c2_i32 = arith.constant 2 : i32
    %c8_i32_33 = arith.constant 8 : i32
    %96 = arith.muli %c2_i32, %c8_i32_33 : i32
    %97 = tpu.assume_multiple %96, 8 : i32
    %c7_i32_34 = arith.constant 7 : i32
    %98 = arith.subi %c7_i32_34, %c2_i32 : i32
    %c8_i32_35 = arith.constant 8 : i32
    %99 = arith.muli %98, %c8_i32_35 : i32
    %100 = tpu.assume_multiple %99, 8 : i32
    %101 = arith.index_cast %97 : i32 to index
    %c0_36 = arith.constant 0 : index
    %102 = vector.load %arg12[%101, %c0_36] : memref<64x256xf32, #tpu.memory_space<vmem>>, vector<8x256xf32>
    %103 = arith.index_cast %100 : i32 to index
    %c0_37 = arith.constant 0 : index
    %104 = vector.load %arg12[%103, %c0_37] : memref<64x256xf32, #tpu.memory_space<vmem>>, vector<8x256xf32>
    %105 = arith.select %18, %102, %104 : vector<8x256xi1>, vector<8x256xf32>
    %c0_38 = arith.constant 0 : index
    %c0_39 = arith.constant 0 : index
    %106 = vector.load %arg2[%c0_38, %c0_39] : memref<64x256xf32, #tpu.memory_space<vmem>>, vector<64x256xf32>
    %cst_40 = arith.constant dense<0.000000e+00> : vector<8x256xf32>
    %107 = tpu.matmul %89, %106, %cst_40 {dimension_numbers = #tpu.dot_dimension_numbers<[1], [0], [0], [1], [0, 0, 1, 1], [], []>} : vector<8x64xf32>, vector<64x256xf32>, vector<8x256xf32> -> vector<8x256xf32>
    %108 = arith.addf %105, %107 : vector<8x256xf32>
    %109 = arith.negf %108 : vector<8x256xf32>
    %110 = math.exp %109 : vector<8x256xf32>
    %cst_41 = arith.constant 1.000000e+00 : f32
    %111 = vector.broadcast %cst_41 : f32 to vector<8x256xf32>
    %112 = arith.addf %111, %110 : vector<8x256xf32>
    %113 = arith.divf %111, %112 : vector<8x256xf32>
    %114 = vector.extract_strided_slice %113 {offsets = [0, 0], sizes = [8, 64], strides = [1, 1]} : vector<8x256xf32> to vector<8x64xf32>
    %115 = vector.extract_strided_slice %113 {offsets = [0, 64], sizes = [8, 64], strides = [1, 1]} : vector<8x256xf32> to vector<8x64xf32>
    %116 = vector.extract_strided_slice %113 {offsets = [0, 192], sizes = [8, 64], strides = [1, 1]} : vector<8x256xf32> to vector<8x64xf32>
    %117 = vector.extract_strided_slice %108 {offsets = [0, 128], sizes = [8, 64], strides = [1, 1]} : vector<8x256xf32> to vector<8x64xf32>
    %118 = math.tanh %117 : vector<8x64xf32>
    %119 = arith.mulf %115, %87 : vector<8x64xf32>
    %120 = arith.mulf %114, %118 : vector<8x64xf32>
    %121 = arith.addf %119, %120 : vector<8x64xf32>
    %122 = math.tanh %121 : vector<8x64xf32>
    %123 = arith.mulf %116, %122 : vector<8x64xf32>
    %124 = vector.extract_strided_slice %123 {offsets = [0, 0], sizes = [8, 32], strides = [1, 1]} : vector<8x64xf32> to vector<8x32xf32>
    %125 = arith.index_cast %97 : i32 to index
    %c0_42 = arith.constant 0 : index
    %126 = vector.load %arg13[%125, %c0_42] : memref<64x64xf32, #tpu.memory_space<vmem>>, vector<8x32xf32>
    tpu.vector_store %arg13[%125, %c0_42], %124 {strides = array<i32>} : memref<64x64xf32, #tpu.memory_space<vmem>>, vector<8x32xf32>,
    %127 = vector.extract_strided_slice %123 {offsets = [0, 32], sizes = [8, 32], strides = [1, 1]} : vector<8x64xf32> to vector<8x32xf32>
    %128 = arith.index_cast %100 : i32 to index
    %c32_43 = arith.constant 32 : index
    %129 = vector.load %arg13[%128, %c32_43] : memref<64x64xf32, #tpu.memory_space<vmem>>, vector<8x32xf32>
    tpu.vector_store %arg13[%128, %c32_43], %127 {strides = array<i32>} : memref<64x64xf32, #tpu.memory_space<vmem>>, vector<8x32xf32>,
    %c3_i32 = arith.constant 3 : i32
    %c8_i32_44 = arith.constant 8 : i32
    %130 = arith.muli %c3_i32, %c8_i32_44 : i32
    %131 = tpu.assume_multiple %130, 8 : i32
    %c7_i32_45 = arith.constant 7 : i32
    %132 = arith.subi %c7_i32_45, %c3_i32 : i32
    %c8_i32_46 = arith.constant 8 : i32
    %133 = arith.muli %132, %c8_i32_46 : i32
    %134 = tpu.assume_multiple %133, 8 : i32
    %135 = arith.index_cast %131 : i32 to index
    %c0_47 = arith.constant 0 : index
    %136 = vector.load %arg12[%135, %c0_47] : memref<64x256xf32, #tpu.memory_space<vmem>>, vector<8x256xf32>
    %137 = arith.index_cast %134 : i32 to index
    %c0_48 = arith.constant 0 : index
    %138 = vector.load %arg12[%137, %c0_48] : memref<64x256xf32, #tpu.memory_space<vmem>>, vector<8x256xf32>
    %139 = arith.select %18, %136, %138 : vector<8x256xi1>, vector<8x256xf32>
    %c0_49 = arith.constant 0 : index
    %c0_50 = arith.constant 0 : index
    %140 = vector.load %arg2[%c0_49, %c0_50] : memref<64x256xf32, #tpu.memory_space<vmem>>, vector<64x256xf32>
    %cst_51 = arith.constant dense<0.000000e+00> : vector<8x256xf32>
    %141 = tpu.matmul %123, %140, %cst_51 {dimension_numbers = #tpu.dot_dimension_numbers<[1], [0], [0], [1], [0, 0, 1, 1], [], []>} : vector<8x64xf32>, vector<64x256xf32>, vector<8x256xf32> -> vector<8x256xf32>
    %142 = arith.addf %139, %141 : vector<8x256xf32>
    %143 = arith.negf %142 : vector<8x256xf32>
    %144 = math.exp %143 : vector<8x256xf32>
    %cst_52 = arith.constant 1.000000e+00 : f32
    %145 = vector.broadcast %cst_52 : f32 to vector<8x256xf32>
    %146 = arith.addf %145, %144 : vector<8x256xf32>
    %147 = arith.divf %145, %146 : vector<8x256xf32>
    %148 = vector.extract_strided_slice %147 {offsets = [0, 0], sizes = [8, 64], strides = [1, 1]} : vector<8x256xf32> to vector<8x64xf32>
    %149 = vector.extract_strided_slice %147 {offsets = [0, 64], sizes = [8, 64], strides = [1, 1]} : vector<8x256xf32> to vector<8x64xf32>
    %150 = vector.extract_strided_slice %147 {offsets = [0, 192], sizes = [8, 64], strides = [1, 1]} : vector<8x256xf32> to vector<8x64xf32>
    %151 = vector.extract_strided_slice %142 {offsets = [0, 128], sizes = [8, 64], strides = [1, 1]} : vector<8x256xf32> to vector<8x64xf32>
    %152 = math.tanh %151 : vector<8x64xf32>
    %153 = arith.mulf %149, %121 : vector<8x64xf32>
    %154 = arith.mulf %148, %152 : vector<8x64xf32>
    %155 = arith.addf %153, %154 : vector<8x64xf32>
    %156 = math.tanh %155 : vector<8x64xf32>
    %157 = arith.mulf %150, %156 : vector<8x64xf32>
    %158 = vector.extract_strided_slice %157 {offsets = [0, 0], sizes = [8, 32], strides = [1, 1]} : vector<8x64xf32> to vector<8x32xf32>
    %159 = arith.index_cast %131 : i32 to index
    %c0_53 = arith.constant 0 : index
    %160 = vector.load %arg13[%159, %c0_53] : memref<64x64xf32, #tpu.memory_space<vmem>>, vector<8x32xf32>
    tpu.vector_store %arg13[%159, %c0_53], %158 {strides = array<i32>} : memref<64x64xf32, #tpu.memory_space<vmem>>, vector<8x32xf32>,
    %161 = vector.extract_strided_slice %157 {offsets = [0, 32], sizes = [8, 32], strides = [1, 1]} : vector<8x64xf32> to vector<8x32xf32>
    %162 = arith.index_cast %134 : i32 to index
    %c32_54 = arith.constant 32 : index
    %163 = vector.load %arg13[%162, %c32_54] : memref<64x64xf32, #tpu.memory_space<vmem>>, vector<8x32xf32>
    tpu.vector_store %arg13[%162, %c32_54], %161 {strides = array<i32>} : memref<64x64xf32, #tpu.memory_space<vmem>>, vector<8x32xf32>,
    %c4_i32 = arith.constant 4 : i32
    %c8_i32_55 = arith.constant 8 : i32
    %164 = arith.muli %c4_i32, %c8_i32_55 : i32
    %165 = tpu.assume_multiple %164, 8 : i32
    %c7_i32_56 = arith.constant 7 : i32
    %166 = arith.subi %c7_i32_56, %c4_i32 : i32
    %c8_i32_57 = arith.constant 8 : i32
    %167 = arith.muli %166, %c8_i32_57 : i32
    %168 = tpu.assume_multiple %167, 8 : i32
    %169 = arith.index_cast %165 : i32 to index
    %c0_58 = arith.constant 0 : index
    %170 = vector.load %arg12[%169, %c0_58] : memref<64x256xf32, #tpu.memory_space<vmem>>, vector<8x256xf32>
    %171 = arith.index_cast %168 : i32 to index
    %c0_59 = arith.constant 0 : index
    %172 = vector.load %arg12[%171, %c0_59] : memref<64x256xf32, #tpu.memory_space<vmem>>, vector<8x256xf32>
    %173 = arith.select %18, %170, %172 : vector<8x256xi1>, vector<8x256xf32>
    %c0_60 = arith.constant 0 : index
    %c0_61 = arith.constant 0 : index
    %174 = vector.load %arg2[%c0_60, %c0_61] : memref<64x256xf32, #tpu.memory_space<vmem>>, vector<64x256xf32>
    %cst_62 = arith.constant dense<0.000000e+00> : vector<8x256xf32>
    %175 = tpu.matmul %157, %174, %cst_62 {dimension_numbers = #tpu.dot_dimension_numbers<[1], [0], [0], [1], [0, 0, 1, 1], [], []>} : vector<8x64xf32>, vector<64x256xf32>, vector<8x256xf32> -> vector<8x256xf32>
    %176 = arith.addf %173, %175 : vector<8x256xf32>
    %177 = arith.negf %176 : vector<8x256xf32>
    %178 = math.exp %177 : vector<8x256xf32>
    %cst_63 = arith.constant 1.000000e+00 : f32
    %179 = vector.broadcast %cst_63 : f32 to vector<8x256xf32>
    %180 = arith.addf %179, %178 : vector<8x256xf32>
    %181 = arith.divf %179, %180 : vector<8x256xf32>
    %182 = vector.extract_strided_slice %181 {offsets = [0, 0], sizes = [8, 64], strides = [1, 1]} : vector<8x256xf32> to vector<8x64xf32>
    %183 = vector.extract_strided_slice %181 {offsets = [0, 64], sizes = [8, 64], strides = [1, 1]} : vector<8x256xf32> to vector<8x64xf32>
    %184 = vector.extract_strided_slice %181 {offsets = [0, 192], sizes = [8, 64], strides = [1, 1]} : vector<8x256xf32> to vector<8x64xf32>
    %185 = vector.extract_strided_slice %176 {offsets = [0, 128], sizes = [8, 64], strides = [1, 1]} : vector<8x256xf32> to vector<8x64xf32>
    %186 = math.tanh %185 : vector<8x64xf32>
    %187 = arith.mulf %183, %155 : vector<8x64xf32>
    %188 = arith.mulf %182, %186 : vector<8x64xf32>
    %189 = arith.addf %187, %188 : vector<8x64xf32>
    %190 = math.tanh %189 : vector<8x64xf32>
    %191 = arith.mulf %184, %190 : vector<8x64xf32>
    %192 = vector.extract_strided_slice %191 {offsets = [0, 0], sizes = [8, 32], strides = [1, 1]} : vector<8x64xf32> to vector<8x32xf32>
    %193 = arith.index_cast %165 : i32 to index
    %c0_64 = arith.constant 0 : index
    %194 = vector.load %arg13[%193, %c0_64] : memref<64x64xf32, #tpu.memory_space<vmem>>, vector<8x32xf32>
    tpu.vector_store %arg13[%193, %c0_64], %192 {strides = array<i32>} : memref<64x64xf32, #tpu.memory_space<vmem>>, vector<8x32xf32>,
    %195 = vector.extract_strided_slice %191 {offsets = [0, 32], sizes = [8, 32], strides = [1, 1]} : vector<8x64xf32> to vector<8x32xf32>
    %196 = arith.index_cast %168 : i32 to index
    %c32_65 = arith.constant 32 : index
    %197 = vector.load %arg13[%196, %c32_65] : memref<64x64xf32, #tpu.memory_space<vmem>>, vector<8x32xf32>
    tpu.vector_store %arg13[%196, %c32_65], %195 {strides = array<i32>} : memref<64x64xf32, #tpu.memory_space<vmem>>, vector<8x32xf32>,
    %c5_i32 = arith.constant 5 : i32
    %c8_i32_66 = arith.constant 8 : i32
    %198 = arith.muli %c5_i32, %c8_i32_66 : i32
    %199 = tpu.assume_multiple %198, 8 : i32
    %c7_i32_67 = arith.constant 7 : i32
    %200 = arith.subi %c7_i32_67, %c5_i32 : i32
    %c8_i32_68 = arith.constant 8 : i32
    %201 = arith.muli %200, %c8_i32_68 : i32
    %202 = tpu.assume_multiple %201, 8 : i32
    %203 = arith.index_cast %199 : i32 to index
    %c0_69 = arith.constant 0 : index
    %204 = vector.load %arg12[%203, %c0_69] : memref<64x256xf32, #tpu.memory_space<vmem>>, vector<8x256xf32>
    %205 = arith.index_cast %202 : i32 to index
    %c0_70 = arith.constant 0 : index
    %206 = vector.load %arg12[%205, %c0_70] : memref<64x256xf32, #tpu.memory_space<vmem>>, vector<8x256xf32>
    %207 = arith.select %18, %204, %206 : vector<8x256xi1>, vector<8x256xf32>
    %c0_71 = arith.constant 0 : index
    %c0_72 = arith.constant 0 : index
    %208 = vector.load %arg2[%c0_71, %c0_72] : memref<64x256xf32, #tpu.memory_space<vmem>>, vector<64x256xf32>
    %cst_73 = arith.constant dense<0.000000e+00> : vector<8x256xf32>
    %209 = tpu.matmul %191, %208, %cst_73 {dimension_numbers = #tpu.dot_dimension_numbers<[1], [0], [0], [1], [0, 0, 1, 1], [], []>} : vector<8x64xf32>, vector<64x256xf32>, vector<8x256xf32> -> vector<8x256xf32>
    %210 = arith.addf %207, %209 : vector<8x256xf32>
    %211 = arith.negf %210 : vector<8x256xf32>
    %212 = math.exp %211 : vector<8x256xf32>
    %cst_74 = arith.constant 1.000000e+00 : f32
    %213 = vector.broadcast %cst_74 : f32 to vector<8x256xf32>
    %214 = arith.addf %213, %212 : vector<8x256xf32>
    %215 = arith.divf %213, %214 : vector<8x256xf32>
    %216 = vector.extract_strided_slice %215 {offsets = [0, 0], sizes = [8, 64], strides = [1, 1]} : vector<8x256xf32> to vector<8x64xf32>
    %217 = vector.extract_strided_slice %215 {offsets = [0, 64], sizes = [8, 64], strides = [1, 1]} : vector<8x256xf32> to vector<8x64xf32>
    %218 = vector.extract_strided_slice %215 {offsets = [0, 192], sizes = [8, 64], strides = [1, 1]} : vector<8x256xf32> to vector<8x64xf32>
    %219 = vector.extract_strided_slice %210 {offsets = [0, 128], sizes = [8, 64], strides = [1, 1]} : vector<8x256xf32> to vector<8x64xf32>
    %220 = math.tanh %219 : vector<8x64xf32>
    %221 = arith.mulf %217, %189 : vector<8x64xf32>
    %222 = arith.mulf %216, %220 : vector<8x64xf32>
    %223 = arith.addf %221, %222 : vector<8x64xf32>
    %224 = math.tanh %223 : vector<8x64xf32>
    %225 = arith.mulf %218, %224 : vector<8x64xf32>
    %226 = vector.extract_strided_slice %225 {offsets = [0, 0], sizes = [8, 32], strides = [1, 1]} : vector<8x64xf32> to vector<8x32xf32>
    %227 = arith.index_cast %199 : i32 to index
    %c0_75 = arith.constant 0 : index
    %228 = vector.load %arg13[%227, %c0_75] : memref<64x64xf32, #tpu.memory_space<vmem>>, vector<8x32xf32>
    tpu.vector_store %arg13[%227, %c0_75], %226 {strides = array<i32>} : memref<64x64xf32, #tpu.memory_space<vmem>>, vector<8x32xf32>,
    %229 = vector.extract_strided_slice %225 {offsets = [0, 32], sizes = [8, 32], strides = [1, 1]} : vector<8x64xf32> to vector<8x32xf32>
    %230 = arith.index_cast %202 : i32 to index
    %c32_76 = arith.constant 32 : index
    %231 = vector.load %arg13[%230, %c32_76] : memref<64x64xf32, #tpu.memory_space<vmem>>, vector<8x32xf32>
    tpu.vector_store %arg13[%230, %c32_76], %229 {strides = array<i32>} : memref<64x64xf32, #tpu.memory_space<vmem>>, vector<8x32xf32>,
    %c6_i32 = arith.constant 6 : i32
    %c8_i32_77 = arith.constant 8 : i32
    %232 = arith.muli %c6_i32, %c8_i32_77 : i32
    %233 = tpu.assume_multiple %232, 8 : i32
    %c7_i32_78 = arith.constant 7 : i32
    %234 = arith.subi %c7_i32_78, %c6_i32 : i32
    %c8_i32_79 = arith.constant 8 : i32
    %235 = arith.muli %234, %c8_i32_79 : i32
    %236 = tpu.assume_multiple %235, 8 : i32
    %237 = arith.index_cast %233 : i32 to index
    %c0_80 = arith.constant 0 : index
    %238 = vector.load %arg12[%237, %c0_80] : memref<64x256xf32, #tpu.memory_space<vmem>>, vector<8x256xf32>
    %239 = arith.index_cast %236 : i32 to index
    %c0_81 = arith.constant 0 : index
    %240 = vector.load %arg12[%239, %c0_81] : memref<64x256xf32, #tpu.memory_space<vmem>>, vector<8x256xf32>
    %241 = arith.select %18, %238, %240 : vector<8x256xi1>, vector<8x256xf32>
    %c0_82 = arith.constant 0 : index
    %c0_83 = arith.constant 0 : index
    %242 = vector.load %arg2[%c0_82, %c0_83] : memref<64x256xf32, #tpu.memory_space<vmem>>, vector<64x256xf32>
    %cst_84 = arith.constant dense<0.000000e+00> : vector<8x256xf32>
    %243 = tpu.matmul %225, %242, %cst_84 {dimension_numbers = #tpu.dot_dimension_numbers<[1], [0], [0], [1], [0, 0, 1, 1], [], []>} : vector<8x64xf32>, vector<64x256xf32>, vector<8x256xf32> -> vector<8x256xf32>
    %244 = arith.addf %241, %243 : vector<8x256xf32>
    %245 = arith.negf %244 : vector<8x256xf32>
    %246 = math.exp %245 : vector<8x256xf32>
    %cst_85 = arith.constant 1.000000e+00 : f32
    %247 = vector.broadcast %cst_85 : f32 to vector<8x256xf32>
    %248 = arith.addf %247, %246 : vector<8x256xf32>
    %249 = arith.divf %247, %248 : vector<8x256xf32>
    %250 = vector.extract_strided_slice %249 {offsets = [0, 0], sizes = [8, 64], strides = [1, 1]} : vector<8x256xf32> to vector<8x64xf32>
    %251 = vector.extract_strided_slice %249 {offsets = [0, 64], sizes = [8, 64], strides = [1, 1]} : vector<8x256xf32> to vector<8x64xf32>
    %252 = vector.extract_strided_slice %249 {offsets = [0, 192], sizes = [8, 64], strides = [1, 1]} : vector<8x256xf32> to vector<8x64xf32>
    %253 = vector.extract_strided_slice %244 {offsets = [0, 128], sizes = [8, 64], strides = [1, 1]} : vector<8x256xf32> to vector<8x64xf32>
    %254 = math.tanh %253 : vector<8x64xf32>
    %255 = arith.mulf %251, %223 : vector<8x64xf32>
    %256 = arith.mulf %250, %254 : vector<8x64xf32>
    %257 = arith.addf %255, %256 : vector<8x64xf32>
    %258 = math.tanh %257 : vector<8x64xf32>
    %259 = arith.mulf %252, %258 : vector<8x64xf32>
    %260 = vector.extract_strided_slice %259 {offsets = [0, 0], sizes = [8, 32], strides = [1, 1]} : vector<8x64xf32> to vector<8x32xf32>
    %261 = arith.index_cast %233 : i32 to index
    %c0_86 = arith.constant 0 : index
    %262 = vector.load %arg13[%261, %c0_86] : memref<64x64xf32, #tpu.memory_space<vmem>>, vector<8x32xf32>
    tpu.vector_store %arg13[%261, %c0_86], %260 {strides = array<i32>} : memref<64x64xf32, #tpu.memory_space<vmem>>, vector<8x32xf32>,
    %263 = vector.extract_strided_slice %259 {offsets = [0, 32], sizes = [8, 32], strides = [1, 1]} : vector<8x64xf32> to vector<8x32xf32>
    %264 = arith.index_cast %236 : i32 to index
    %c32_87 = arith.constant 32 : index
    %265 = vector.load %arg13[%264, %c32_87] : memref<64x64xf32, #tpu.memory_space<vmem>>, vector<8x32xf32>
    tpu.vector_store %arg13[%264, %c32_87], %263 {strides = array<i32>} : memref<64x64xf32, #tpu.memory_space<vmem>>, vector<8x32xf32>,
    %c7_i32_88 = arith.constant 7 : i32
    %c8_i32_89 = arith.constant 8 : i32
    %266 = arith.muli %c7_i32_88, %c8_i32_89 : i32
    %267 = tpu.assume_multiple %266, 8 : i32
    %c7_i32_90 = arith.constant 7 : i32
    %268 = arith.subi %c7_i32_90, %c7_i32_88 : i32
    %c8_i32_91 = arith.constant 8 : i32
    %269 = arith.muli %268, %c8_i32_91 : i32
    %270 = tpu.assume_multiple %269, 8 : i32
    %271 = arith.index_cast %267 : i32 to index
    %c0_92 = arith.constant 0 : index
    %272 = vector.load %arg12[%271, %c0_92] : memref<64x256xf32, #tpu.memory_space<vmem>>, vector<8x256xf32>
    %273 = arith.index_cast %270 : i32 to index
    %c0_93 = arith.constant 0 : index
    %274 = vector.load %arg12[%273, %c0_93] : memref<64x256xf32, #tpu.memory_space<vmem>>, vector<8x256xf32>
    %275 = arith.select %18, %272, %274 : vector<8x256xi1>, vector<8x256xf32>
    %c0_94 = arith.constant 0 : index
    %c0_95 = arith.constant 0 : index
    %276 = vector.load %arg2[%c0_94, %c0_95] : memref<64x256xf32, #tpu.memory_space<vmem>>, vector<64x256xf32>
    %cst_96 = arith.constant dense<0.000000e+00> : vector<8x256xf32>
    %277 = tpu.matmul %259, %276, %cst_96 {dimension_numbers = #tpu.dot_dimension_numbers<[1], [0], [0], [1], [0, 0, 1, 1], [], []>} : vector<8x64xf32>, vector<64x256xf32>, vector<8x256xf32> -> vector<8x256xf32>
    %278 = arith.addf %275, %277 : vector<8x256xf32>
    %279 = arith.negf %278 : vector<8x256xf32>
    %280 = math.exp %279 : vector<8x256xf32>
    %cst_97 = arith.constant 1.000000e+00 : f32
    %281 = vector.broadcast %cst_97 : f32 to vector<8x256xf32>
    %282 = arith.addf %281, %280 : vector<8x256xf32>
    %283 = arith.divf %281, %282 : vector<8x256xf32>
    %284 = vector.extract_strided_slice %283 {offsets = [0, 0], sizes = [8, 64], strides = [1, 1]} : vector<8x256xf32> to vector<8x64xf32>
    %285 = vector.extract_strided_slice %283 {offsets = [0, 64], sizes = [8, 64], strides = [1, 1]} : vector<8x256xf32> to vector<8x64xf32>
    %286 = vector.extract_strided_slice %283 {offsets = [0, 192], sizes = [8, 64], strides = [1, 1]} : vector<8x256xf32> to vector<8x64xf32>
    %287 = vector.extract_strided_slice %278 {offsets = [0, 128], sizes = [8, 64], strides = [1, 1]} : vector<8x256xf32> to vector<8x64xf32>
    %288 = math.tanh %287 : vector<8x64xf32>
    %289 = arith.mulf %285, %257 : vector<8x64xf32>
    %290 = arith.mulf %284, %288 : vector<8x64xf32>
    %291 = arith.addf %289, %290 : vector<8x64xf32>
    %292 = math.tanh %291 : vector<8x64xf32>
    %293 = arith.mulf %286, %292 : vector<8x64xf32>
    %294 = vector.extract_strided_slice %293 {offsets = [0, 0], sizes = [8, 32], strides = [1, 1]} : vector<8x64xf32> to vector<8x32xf32>
    %295 = arith.index_cast %267 : i32 to index
    %c0_98 = arith.constant 0 : index
    %296 = vector.load %arg13[%295, %c0_98] : memref<64x64xf32, #tpu.memory_space<vmem>>, vector<8x32xf32>
    tpu.vector_store %arg13[%295, %c0_98], %294 {strides = array<i32>} : memref<64x64xf32, #tpu.memory_space<vmem>>, vector<8x32xf32>,
    %297 = vector.extract_strided_slice %293 {offsets = [0, 32], sizes = [8, 32], strides = [1, 1]} : vector<8x64xf32> to vector<8x32xf32>
    %298 = arith.index_cast %270 : i32 to index
    %c32_99 = arith.constant 32 : index
    %299 = vector.load %arg13[%298, %c32_99] : memref<64x64xf32, #tpu.memory_space<vmem>>, vector<8x32xf32>
    tpu.vector_store %arg13[%298, %c32_99], %297 {strides = array<i32>} : memref<64x64xf32, #tpu.memory_space<vmem>>, vector<8x32xf32>,
    %c8_i32_100 = arith.constant 8 : i32
    %c0_101 = arith.constant 0 : index
    %c0_102 = arith.constant 0 : index
    %300 = vector.load %arg13[%c0_101, %c0_102] : memref<64x64xf32, #tpu.memory_space<vmem>>, vector<64x64xf32>
    %c0_103 = arith.constant 0 : index
    %c0_104 = arith.constant 0 : index
    %301 = vector.load %arg4[%c0_103, %c0_104] : memref<64x256xf32, #tpu.memory_space<vmem>>, vector<64x256xf32>
    %cst_105 = arith.constant dense<0.000000e+00> : vector<64x256xf32>
    %302 = tpu.matmul %300, %301, %cst_105 {dimension_numbers = #tpu.dot_dimension_numbers<[1], [0], [0], [1], [0, 0, 1, 1], [], []>} : vector<64x64xf32>, vector<64x256xf32>, vector<64x256xf32> -> vector<64x256xf32>
    %c0_106 = arith.constant 0 : index
    %c0_107 = arith.constant 0 : index
    %303 = vector.load %arg6[%c0_106, %c0_107] : memref<1x256xf32, #tpu.memory_space<vmem>>, vector<1x256xf32>
    %304 = vector.broadcast %303 : vector<1x256xf32> to vector<64x256xf32>
    %305 = arith.addf %302, %304 : vector<64x256xf32>
    %c0_108 = arith.constant 0 : index
    %c0_109 = arith.constant 0 : index
    %306 = vector.load %arg12[%c0_108, %c0_109] : memref<64x256xf32, #tpu.memory_space<vmem>>, vector<64x256xf32>
    tpu.vector_store %arg12[%c0_108, %c0_109], %305 {strides = array<i32>} : memref<64x256xf32, #tpu.memory_space<vmem>>, vector<64x256xf32>,
    %cst_110 = arith.constant 0.000000e+00 : f32
    %307 = vector.broadcast %cst_110 : f32 to vector<8x64xf32>
    %cst_111 = arith.constant 0.000000e+00 : f32
    %308 = vector.broadcast %cst_111 : f32 to vector<8x64xf32>
    %c0_i32_112 = arith.constant 0 : i32
    %c8_i32_113 = arith.constant 8 : i32
    %309 = arith.muli %c0_i32_112, %c8_i32_113 : i32
    %310 = tpu.assume_multiple %309, 8 : i32
    %c7_i32_114 = arith.constant 7 : i32
    %311 = arith.subi %c7_i32_114, %c0_i32_112 : i32
    %c8_i32_115 = arith.constant 8 : i32
    %312 = arith.muli %311, %c8_i32_115 : i32
    %313 = tpu.assume_multiple %312, 8 : i32
    %314 = arith.index_cast %310 : i32 to index
    %c0_116 = arith.constant 0 : index
    %315 = vector.load %arg12[%314, %c0_116] : memref<64x256xf32, #tpu.memory_space<vmem>>, vector<8x256xf32>
    %316 = arith.index_cast %313 : i32 to index
    %c0_117 = arith.constant 0 : index
    %317 = vector.load %arg12[%316, %c0_117] : memref<64x256xf32, #tpu.memory_space<vmem>>, vector<8x256xf32>
    %318 = arith.select %18, %315, %317 : vector<8x256xi1>, vector<8x256xf32>
    %c0_118 = arith.constant 0 : index
    %c0_119 = arith.constant 0 : index
    %319 = vector.load %arg5[%c0_118, %c0_119] : memref<64x256xf32, #tpu.memory_space<vmem>>, vector<64x256xf32>
    %cst_120 = arith.constant dense<0.000000e+00> : vector<8x256xf32>
    %320 = tpu.matmul %307, %319, %cst_120 {dimension_numbers = #tpu.dot_dimension_numbers<[1], [0], [0], [1], [0, 0, 1, 1], [], []>} : vector<8x64xf32>, vector<64x256xf32>, vector<8x256xf32> -> vector<8x256xf32>
    %321 = arith.addf %318, %320 : vector<8x256xf32>
    %322 = arith.negf %321 : vector<8x256xf32>
    %323 = math.exp %322 : vector<8x256xf32>
    %cst_121 = arith.constant 1.000000e+00 : f32
    %324 = vector.broadcast %cst_121 : f32 to vector<8x256xf32>
    %325 = arith.addf %324, %323 : vector<8x256xf32>
    %326 = arith.divf %324, %325 : vector<8x256xf32>
    %327 = vector.extract_strided_slice %326 {offsets = [0, 0], sizes = [8, 64], strides = [1, 1]} : vector<8x256xf32> to vector<8x64xf32>
    %328 = vector.extract_strided_slice %326 {offsets = [0, 64], sizes = [8, 64], strides = [1, 1]} : vector<8x256xf32> to vector<8x64xf32>
    %329 = vector.extract_strided_slice %326 {offsets = [0, 192], sizes = [8, 64], strides = [1, 1]} : vector<8x256xf32> to vector<8x64xf32>
    %330 = vector.extract_strided_slice %321 {offsets = [0, 128], sizes = [8, 64], strides = [1, 1]} : vector<8x256xf32> to vector<8x64xf32>
    %331 = math.tanh %330 : vector<8x64xf32>
    %332 = arith.mulf %328, %308 : vector<8x64xf32>
    %333 = arith.mulf %327, %331 : vector<8x64xf32>
    %334 = arith.addf %332, %333 : vector<8x64xf32>
    %335 = math.tanh %334 : vector<8x64xf32>
    %336 = arith.mulf %329, %335 : vector<8x64xf32>
    %c1_i32_122 = arith.constant 1 : i32
    %c8_i32_123 = arith.constant 8 : i32
    %337 = arith.muli %c1_i32_122, %c8_i32_123 : i32
    %338 = tpu.assume_multiple %337, 8 : i32
    %c7_i32_124 = arith.constant 7 : i32
    %339 = arith.subi %c7_i32_124, %c1_i32_122 : i32
    %c8_i32_125 = arith.constant 8 : i32
    %340 = arith.muli %339, %c8_i32_125 : i32
    %341 = tpu.assume_multiple %340, 8 : i32
    %342 = arith.index_cast %338 : i32 to index
    %c0_126 = arith.constant 0 : index
    %343 = vector.load %arg12[%342, %c0_126] : memref<64x256xf32, #tpu.memory_space<vmem>>, vector<8x256xf32>
    %344 = arith.index_cast %341 : i32 to index
    %c0_127 = arith.constant 0 : index
    %345 = vector.load %arg12[%344, %c0_127] : memref<64x256xf32, #tpu.memory_space<vmem>>, vector<8x256xf32>
    %346 = arith.select %18, %343, %345 : vector<8x256xi1>, vector<8x256xf32>
    %c0_128 = arith.constant 0 : index
    %c0_129 = arith.constant 0 : index
    %347 = vector.load %arg5[%c0_128, %c0_129] : memref<64x256xf32, #tpu.memory_space<vmem>>, vector<64x256xf32>
    %cst_130 = arith.constant dense<0.000000e+00> : vector<8x256xf32>
    %348 = tpu.matmul %336, %347, %cst_130 {dimension_numbers = #tpu.dot_dimension_numbers<[1], [0], [0], [1], [0, 0, 1, 1], [], []>} : vector<8x64xf32>, vector<64x256xf32>, vector<8x256xf32> -> vector<8x256xf32>
    %349 = arith.addf %346, %348 : vector<8x256xf32>
    %350 = arith.negf %349 : vector<8x256xf32>
    %351 = math.exp %350 : vector<8x256xf32>
    %cst_131 = arith.constant 1.000000e+00 : f32
    %352 = vector.broadcast %cst_131 : f32 to vector<8x256xf32>
    %353 = arith.addf %352, %351 : vector<8x256xf32>
    %354 = arith.divf %352, %353 : vector<8x256xf32>
    %355 = vector.extract_strided_slice %354 {offsets = [0, 0], sizes = [8, 64], strides = [1, 1]} : vector<8x256xf32> to vector<8x64xf32>
    %356 = vector.extract_strided_slice %354 {offsets = [0, 64], sizes = [8, 64], strides = [1, 1]} : vector<8x256xf32> to vector<8x64xf32>
    %357 = vector.extract_strided_slice %354 {offsets = [0, 192], sizes = [8, 64], strides = [1, 1]} : vector<8x256xf32> to vector<8x64xf32>
    %358 = vector.extract_strided_slice %349 {offsets = [0, 128], sizes = [8, 64], strides = [1, 1]} : vector<8x256xf32> to vector<8x64xf32>
    %359 = math.tanh %358 : vector<8x64xf32>
    %360 = arith.mulf %356, %334 : vector<8x64xf32>
    %361 = arith.mulf %355, %359 : vector<8x64xf32>
    %362 = arith.addf %360, %361 : vector<8x64xf32>
    %363 = math.tanh %362 : vector<8x64xf32>
    %364 = arith.mulf %357, %363 : vector<8x64xf32>
    %c2_i32_132 = arith.constant 2 : i32
    %c8_i32_133 = arith.constant 8 : i32
    %365 = arith.muli %c2_i32_132, %c8_i32_133 : i32
    %366 = tpu.assume_multiple %365, 8 : i32
    %c7_i32_134 = arith.constant 7 : i32
    %367 = arith.subi %c7_i32_134, %c2_i32_132 : i32
    %c8_i32_135 = arith.constant 8 : i32
    %368 = arith.muli %367, %c8_i32_135 : i32
    %369 = tpu.assume_multiple %368, 8 : i32
    %370 = arith.index_cast %366 : i32 to index
    %c0_136 = arith.constant 0 : index
    %371 = vector.load %arg12[%370, %c0_136] : memref<64x256xf32, #tpu.memory_space<vmem>>, vector<8x256xf32>
    %372 = arith.index_cast %369 : i32 to index
    %c0_137 = arith.constant 0 : index
    %373 = vector.load %arg12[%372, %c0_137] : memref<64x256xf32, #tpu.memory_space<vmem>>, vector<8x256xf32>
    %374 = arith.select %18, %371, %373 : vector<8x256xi1>, vector<8x256xf32>
    %c0_138 = arith.constant 0 : index
    %c0_139 = arith.constant 0 : index
    %375 = vector.load %arg5[%c0_138, %c0_139] : memref<64x256xf32, #tpu.memory_space<vmem>>, vector<64x256xf32>
    %cst_140 = arith.constant dense<0.000000e+00> : vector<8x256xf32>
    %376 = tpu.matmul %364, %375, %cst_140 {dimension_numbers = #tpu.dot_dimension_numbers<[1], [0], [0], [1], [0, 0, 1, 1], [], []>} : vector<8x64xf32>, vector<64x256xf32>, vector<8x256xf32> -> vector<8x256xf32>
    %377 = arith.addf %374, %376 : vector<8x256xf32>
    %378 = arith.negf %377 : vector<8x256xf32>
    %379 = math.exp %378 : vector<8x256xf32>
    %cst_141 = arith.constant 1.000000e+00 : f32
    %380 = vector.broadcast %cst_141 : f32 to vector<8x256xf32>
    %381 = arith.addf %380, %379 : vector<8x256xf32>
    %382 = arith.divf %380, %381 : vector<8x256xf32>
    %383 = vector.extract_strided_slice %382 {offsets = [0, 0], sizes = [8, 64], strides = [1, 1]} : vector<8x256xf32> to vector<8x64xf32>
    %384 = vector.extract_strided_slice %382 {offsets = [0, 64], sizes = [8, 64], strides = [1, 1]} : vector<8x256xf32> to vector<8x64xf32>
    %385 = vector.extract_strided_slice %382 {offsets = [0, 192], sizes = [8, 64], strides = [1, 1]} : vector<8x256xf32> to vector<8x64xf32>
    %386 = vector.extract_strided_slice %377 {offsets = [0, 128], sizes = [8, 64], strides = [1, 1]} : vector<8x256xf32> to vector<8x64xf32>
    %387 = math.tanh %386 : vector<8x64xf32>
    %388 = arith.mulf %384, %362 : vector<8x64xf32>
    %389 = arith.mulf %383, %387 : vector<8x64xf32>
    %390 = arith.addf %388, %389 : vector<8x64xf32>
    %391 = math.tanh %390 : vector<8x64xf32>
    %392 = arith.mulf %385, %391 : vector<8x64xf32>
    %c3_i32_142 = arith.constant 3 : i32
    %c8_i32_143 = arith.constant 8 : i32
    %393 = arith.muli %c3_i32_142, %c8_i32_143 : i32
    %394 = tpu.assume_multiple %393, 8 : i32
    %c7_i32_144 = arith.constant 7 : i32
    %395 = arith.subi %c7_i32_144, %c3_i32_142 : i32
    %c8_i32_145 = arith.constant 8 : i32
    %396 = arith.muli %395, %c8_i32_145 : i32
    %397 = tpu.assume_multiple %396, 8 : i32
    %398 = arith.index_cast %394 : i32 to index
    %c0_146 = arith.constant 0 : index
    %399 = vector.load %arg12[%398, %c0_146] : memref<64x256xf32, #tpu.memory_space<vmem>>, vector<8x256xf32>
    %400 = arith.index_cast %397 : i32 to index
    %c0_147 = arith.constant 0 : index
    %401 = vector.load %arg12[%400, %c0_147] : memref<64x256xf32, #tpu.memory_space<vmem>>, vector<8x256xf32>
    %402 = arith.select %18, %399, %401 : vector<8x256xi1>, vector<8x256xf32>
    %c0_148 = arith.constant 0 : index
    %c0_149 = arith.constant 0 : index
    %403 = vector.load %arg5[%c0_148, %c0_149] : memref<64x256xf32, #tpu.memory_space<vmem>>, vector<64x256xf32>
    %cst_150 = arith.constant dense<0.000000e+00> : vector<8x256xf32>
    %404 = tpu.matmul %392, %403, %cst_150 {dimension_numbers = #tpu.dot_dimension_numbers<[1], [0], [0], [1], [0, 0, 1, 1], [], []>} : vector<8x64xf32>, vector<64x256xf32>, vector<8x256xf32> -> vector<8x256xf32>
    %405 = arith.addf %402, %404 : vector<8x256xf32>
    %406 = arith.negf %405 : vector<8x256xf32>
    %407 = math.exp %406 : vector<8x256xf32>
    %cst_151 = arith.constant 1.000000e+00 : f32
    %408 = vector.broadcast %cst_151 : f32 to vector<8x256xf32>
    %409 = arith.addf %408, %407 : vector<8x256xf32>
    %410 = arith.divf %408, %409 : vector<8x256xf32>
    %411 = vector.extract_strided_slice %410 {offsets = [0, 0], sizes = [8, 64], strides = [1, 1]} : vector<8x256xf32> to vector<8x64xf32>
    %412 = vector.extract_strided_slice %410 {offsets = [0, 64], sizes = [8, 64], strides = [1, 1]} : vector<8x256xf32> to vector<8x64xf32>
    %413 = vector.extract_strided_slice %410 {offsets = [0, 192], sizes = [8, 64], strides = [1, 1]} : vector<8x256xf32> to vector<8x64xf32>
    %414 = vector.extract_strided_slice %405 {offsets = [0, 128], sizes = [8, 64], strides = [1, 1]} : vector<8x256xf32> to vector<8x64xf32>
    %415 = math.tanh %414 : vector<8x64xf32>
    %416 = arith.mulf %412, %390 : vector<8x64xf32>
    %417 = arith.mulf %411, %415 : vector<8x64xf32>
    %418 = arith.addf %416, %417 : vector<8x64xf32>
    %419 = math.tanh %418 : vector<8x64xf32>
    %420 = arith.mulf %413, %419 : vector<8x64xf32>
    %c4_i32_152 = arith.constant 4 : i32
    %c8_i32_153 = arith.constant 8 : i32
    %421 = arith.muli %c4_i32_152, %c8_i32_153 : i32
    %422 = tpu.assume_multiple %421, 8 : i32
    %c7_i32_154 = arith.constant 7 : i32
    %423 = arith.subi %c7_i32_154, %c4_i32_152 : i32
    %c8_i32_155 = arith.constant 8 : i32
    %424 = arith.muli %423, %c8_i32_155 : i32
    %425 = tpu.assume_multiple %424, 8 : i32
    %426 = arith.index_cast %422 : i32 to index
    %c0_156 = arith.constant 0 : index
    %427 = vector.load %arg12[%426, %c0_156] : memref<64x256xf32, #tpu.memory_space<vmem>>, vector<8x256xf32>
    %428 = arith.index_cast %425 : i32 to index
    %c0_157 = arith.constant 0 : index
    %429 = vector.load %arg12[%428, %c0_157] : memref<64x256xf32, #tpu.memory_space<vmem>>, vector<8x256xf32>
    %430 = arith.select %18, %427, %429 : vector<8x256xi1>, vector<8x256xf32>
    %c0_158 = arith.constant 0 : index
    %c0_159 = arith.constant 0 : index
    %431 = vector.load %arg5[%c0_158, %c0_159] : memref<64x256xf32, #tpu.memory_space<vmem>>, vector<64x256xf32>
    %cst_160 = arith.constant dense<0.000000e+00> : vector<8x256xf32>
    %432 = tpu.matmul %420, %431, %cst_160 {dimension_numbers = #tpu.dot_dimension_numbers<[1], [0], [0], [1], [0, 0, 1, 1], [], []>} : vector<8x64xf32>, vector<64x256xf32>, vector<8x256xf32> -> vector<8x256xf32>
    %433 = arith.addf %430, %432 : vector<8x256xf32>
    %434 = arith.negf %433 : vector<8x256xf32>
    %435 = math.exp %434 : vector<8x256xf32>
    %cst_161 = arith.constant 1.000000e+00 : f32
    %436 = vector.broadcast %cst_161 : f32 to vector<8x256xf32>
    %437 = arith.addf %436, %435 : vector<8x256xf32>
    %438 = arith.divf %436, %437 : vector<8x256xf32>
    %439 = vector.extract_strided_slice %438 {offsets = [0, 0], sizes = [8, 64], strides = [1, 1]} : vector<8x256xf32> to vector<8x64xf32>
    %440 = vector.extract_strided_slice %438 {offsets = [0, 64], sizes = [8, 64], strides = [1, 1]} : vector<8x256xf32> to vector<8x64xf32>
    %441 = vector.extract_strided_slice %438 {offsets = [0, 192], sizes = [8, 64], strides = [1, 1]} : vector<8x256xf32> to vector<8x64xf32>
    %442 = vector.extract_strided_slice %433 {offsets = [0, 128], sizes = [8, 64], strides = [1, 1]} : vector<8x256xf32> to vector<8x64xf32>
    %443 = math.tanh %442 : vector<8x64xf32>
    %444 = arith.mulf %440, %418 : vector<8x64xf32>
    %445 = arith.mulf %439, %443 : vector<8x64xf32>
    %446 = arith.addf %444, %445 : vector<8x64xf32>
    %447 = math.tanh %446 : vector<8x64xf32>
    %448 = arith.mulf %441, %447 : vector<8x64xf32>
    %c5_i32_162 = arith.constant 5 : i32
    %c8_i32_163 = arith.constant 8 : i32
    %449 = arith.muli %c5_i32_162, %c8_i32_163 : i32
    %450 = tpu.assume_multiple %449, 8 : i32
    %c7_i32_164 = arith.constant 7 : i32
    %451 = arith.subi %c7_i32_164, %c5_i32_162 : i32
    %c8_i32_165 = arith.constant 8 : i32
    %452 = arith.muli %451, %c8_i32_165 : i32
    %453 = tpu.assume_multiple %452, 8 : i32
    %454 = arith.index_cast %450 : i32 to index
    %c0_166 = arith.constant 0 : index
    %455 = vector.load %arg12[%454, %c0_166] : memref<64x256xf32, #tpu.memory_space<vmem>>, vector<8x256xf32>
    %456 = arith.index_cast %453 : i32 to index
    %c0_167 = arith.constant 0 : index
    %457 = vector.load %arg12[%456, %c0_167] : memref<64x256xf32, #tpu.memory_space<vmem>>, vector<8x256xf32>
    %458 = arith.select %18, %455, %457 : vector<8x256xi1>, vector<8x256xf32>
    %c0_168 = arith.constant 0 : index
    %c0_169 = arith.constant 0 : index
    %459 = vector.load %arg5[%c0_168, %c0_169] : memref<64x256xf32, #tpu.memory_space<vmem>>, vector<64x256xf32>
    %cst_170 = arith.constant dense<0.000000e+00> : vector<8x256xf32>
    %460 = tpu.matmul %448, %459, %cst_170 {dimension_numbers = #tpu.dot_dimension_numbers<[1], [0], [0], [1], [0, 0, 1, 1], [], []>} : vector<8x64xf32>, vector<64x256xf32>, vector<8x256xf32> -> vector<8x256xf32>
    %461 = arith.addf %458, %460 : vector<8x256xf32>
    %462 = arith.negf %461 : vector<8x256xf32>
    %463 = math.exp %462 : vector<8x256xf32>
    %cst_171 = arith.constant 1.000000e+00 : f32
    %464 = vector.broadcast %cst_171 : f32 to vector<8x256xf32>
    %465 = arith.addf %464, %463 : vector<8x256xf32>
    %466 = arith.divf %464, %465 : vector<8x256xf32>
    %467 = vector.extract_strided_slice %466 {offsets = [0, 0], sizes = [8, 64], strides = [1, 1]} : vector<8x256xf32> to vector<8x64xf32>
    %468 = vector.extract_strided_slice %466 {offsets = [0, 64], sizes = [8, 64], strides = [1, 1]} : vector<8x256xf32> to vector<8x64xf32>
    %469 = vector.extract_strided_slice %466 {offsets = [0, 192], sizes = [8, 64], strides = [1, 1]} : vector<8x256xf32> to vector<8x64xf32>
    %470 = vector.extract_strided_slice %461 {offsets = [0, 128], sizes = [8, 64], strides = [1, 1]} : vector<8x256xf32> to vector<8x64xf32>
    %471 = math.tanh %470 : vector<8x64xf32>
    %472 = arith.mulf %468, %446 : vector<8x64xf32>
    %473 = arith.mulf %467, %471 : vector<8x64xf32>
    %474 = arith.addf %472, %473 : vector<8x64xf32>
    %475 = math.tanh %474 : vector<8x64xf32>
    %476 = arith.mulf %469, %475 : vector<8x64xf32>
    %c6_i32_172 = arith.constant 6 : i32
    %c8_i32_173 = arith.constant 8 : i32
    %477 = arith.muli %c6_i32_172, %c8_i32_173 : i32
    %478 = tpu.assume_multiple %477, 8 : i32
    %c7_i32_174 = arith.constant 7 : i32
    %479 = arith.subi %c7_i32_174, %c6_i32_172 : i32
    %c8_i32_175 = arith.constant 8 : i32
    %480 = arith.muli %479, %c8_i32_175 : i32
    %481 = tpu.assume_multiple %480, 8 : i32
    %482 = arith.index_cast %478 : i32 to index
    %c0_176 = arith.constant 0 : index
    %483 = vector.load %arg12[%482, %c0_176] : memref<64x256xf32, #tpu.memory_space<vmem>>, vector<8x256xf32>
    %484 = arith.index_cast %481 : i32 to index
    %c0_177 = arith.constant 0 : index
    %485 = vector.load %arg12[%484, %c0_177] : memref<64x256xf32, #tpu.memory_space<vmem>>, vector<8x256xf32>
    %486 = arith.select %18, %483, %485 : vector<8x256xi1>, vector<8x256xf32>
    %c0_178 = arith.constant 0 : index
    %c0_179 = arith.constant 0 : index
    %487 = vector.load %arg5[%c0_178, %c0_179] : memref<64x256xf32, #tpu.memory_space<vmem>>, vector<64x256xf32>
    %cst_180 = arith.constant dense<0.000000e+00> : vector<8x256xf32>
    %488 = tpu.matmul %476, %487, %cst_180 {dimension_numbers = #tpu.dot_dimension_numbers<[1], [0], [0], [1], [0, 0, 1, 1], [], []>} : vector<8x64xf32>, vector<64x256xf32>, vector<8x256xf32> -> vector<8x256xf32>
    %489 = arith.addf %486, %488 : vector<8x256xf32>
    %490 = arith.negf %489 : vector<8x256xf32>
    %491 = math.exp %490 : vector<8x256xf32>
    %cst_181 = arith.constant 1.000000e+00 : f32
    %492 = vector.broadcast %cst_181 : f32 to vector<8x256xf32>
    %493 = arith.addf %492, %491 : vector<8x256xf32>
    %494 = arith.divf %492, %493 : vector<8x256xf32>
    %495 = vector.extract_strided_slice %494 {offsets = [0, 0], sizes = [8, 64], strides = [1, 1]} : vector<8x256xf32> to vector<8x64xf32>
    %496 = vector.extract_strided_slice %494 {offsets = [0, 64], sizes = [8, 64], strides = [1, 1]} : vector<8x256xf32> to vector<8x64xf32>
    %497 = vector.extract_strided_slice %494 {offsets = [0, 192], sizes = [8, 64], strides = [1, 1]} : vector<8x256xf32> to vector<8x64xf32>
    %498 = vector.extract_strided_slice %489 {offsets = [0, 128], sizes = [8, 64], strides = [1, 1]} : vector<8x256xf32> to vector<8x64xf32>
    %499 = math.tanh %498 : vector<8x64xf32>
    %500 = arith.mulf %496, %474 : vector<8x64xf32>
    %501 = arith.mulf %495, %499 : vector<8x64xf32>
    %502 = arith.addf %500, %501 : vector<8x64xf32>
    %503 = math.tanh %502 : vector<8x64xf32>
    %504 = arith.mulf %497, %503 : vector<8x64xf32>
    %c7_i32_182 = arith.constant 7 : i32
    %c8_i32_183 = arith.constant 8 : i32
    %505 = arith.muli %c7_i32_182, %c8_i32_183 : i32
    %506 = tpu.assume_multiple %505, 8 : i32
    %c7_i32_184 = arith.constant 7 : i32
    %507 = arith.subi %c7_i32_184, %c7_i32_182 : i32
    %c8_i32_185 = arith.constant 8 : i32
    %508 = arith.muli %507, %c8_i32_185 : i32
    %509 = tpu.assume_multiple %508, 8 : i32
    %510 = arith.index_cast %506 : i32 to index
    %c0_186 = arith.constant 0 : index
    %511 = vector.load %arg12[%510, %c0_186] : memref<64x256xf32, #tpu.memory_space<vmem>>, vector<8x256xf32>
    %512 = arith.index_cast %509 : i32 to index
    %c0_187 = arith.constant 0 : index
    %513 = vector.load %arg12[%512, %c0_187] : memref<64x256xf32, #tpu.memory_space<vmem>>, vector<8x256xf32>
    %514 = arith.select %18, %511, %513 : vector<8x256xi1>, vector<8x256xf32>
    %c0_188 = arith.constant 0 : index
    %c0_189 = arith.constant 0 : index
    %515 = vector.load %arg5[%c0_188, %c0_189] : memref<64x256xf32, #tpu.memory_space<vmem>>, vector<64x256xf32>
    %cst_190 = arith.constant dense<0.000000e+00> : vector<8x256xf32>
    %516 = tpu.matmul %504, %515, %cst_190 {dimension_numbers = #tpu.dot_dimension_numbers<[1], [0], [0], [1], [0, 0, 1, 1], [], []>} : vector<8x64xf32>, vector<64x256xf32>, vector<8x256xf32> -> vector<8x256xf32>
    %517 = arith.addf %514, %516 : vector<8x256xf32>
    %518 = arith.negf %517 : vector<8x256xf32>
    %519 = math.exp %518 : vector<8x256xf32>
    %cst_191 = arith.constant 1.000000e+00 : f32
    %520 = vector.broadcast %cst_191 : f32 to vector<8x256xf32>
    %521 = arith.addf %520, %519 : vector<8x256xf32>
    %522 = arith.divf %520, %521 : vector<8x256xf32>
    %523 = vector.extract_strided_slice %522 {offsets = [0, 0], sizes = [8, 64], strides = [1, 1]} : vector<8x256xf32> to vector<8x64xf32>
    %524 = vector.extract_strided_slice %522 {offsets = [0, 64], sizes = [8, 64], strides = [1, 1]} : vector<8x256xf32> to vector<8x64xf32>
    %525 = vector.extract_strided_slice %522 {offsets = [0, 192], sizes = [8, 64], strides = [1, 1]} : vector<8x256xf32> to vector<8x64xf32>
    %526 = vector.extract_strided_slice %517 {offsets = [0, 128], sizes = [8, 64], strides = [1, 1]} : vector<8x256xf32> to vector<8x64xf32>
    %527 = math.tanh %526 : vector<8x64xf32>
    %528 = arith.mulf %524, %502 : vector<8x64xf32>
    %529 = arith.mulf %523, %527 : vector<8x64xf32>
    %530 = arith.addf %528, %529 : vector<8x64xf32>
    %531 = math.tanh %530 : vector<8x64xf32>
    %532 = arith.mulf %525, %531 : vector<8x64xf32>
    %c8_i32_192 = arith.constant 8 : i32
    %c0_193 = arith.constant 0 : index
    %c0_194 = arith.constant 0 : index
    %533 = vector.load %arg7[%c0_193, %c0_194] : memref<64x32xf32, #tpu.memory_space<vmem>>, vector<64x32xf32>
    %cst_195 = arith.constant dense<0.000000e+00> : vector<8x32xf32>
    %534 = tpu.matmul %532, %533, %cst_195 {dimension_numbers = #tpu.dot_dimension_numbers<[1], [0], [0], [1], [0, 0, 1, 1], [], []>} : vector<8x64xf32>, vector<64x32xf32>, vector<8x32xf32> -> vector<8x32xf32>
    %c0_196 = arith.constant 0 : index
    %c0_197 = arith.constant 0 : index
    %535 = vector.load %arg8[%c0_196, %c0_197] : memref<1x32xf32, #tpu.memory_space<vmem>>, vector<1x32xf32>
    %536 = vector.broadcast %535 : vector<1x32xf32> to vector<8x32xf32>
    %537 = arith.addf %534, %536 : vector<8x32xf32>
    %cst_198 = arith.constant 0.000000e+00 : f32
    %538 = vector.broadcast %cst_198 : f32 to vector<8x32xf32>
    %539 = arith.maximumf %537, %538 : vector<8x32xf32>
    %c0_199 = arith.constant 0 : index
    %c0_200 = arith.constant 0 : index
    %540 = vector.load %arg9[%c0_199, %c0_200] : memref<32x128xf32, #tpu.memory_space<vmem>>, vector<32x128xf32>
    %cst_201 = arith.constant dense<0.000000e+00> : vector<8x128xf32>
    %541 = tpu.matmul %539, %540, %cst_201 {dimension_numbers = #tpu.dot_dimension_numbers<[1], [0], [0], [1], [0, 0, 1, 1], [], []>} : vector<8x32xf32>, vector<32x128xf32>, vector<8x128xf32> -> vector<8x128xf32>
    %c0_202 = arith.constant 0 : index
    %c0_203 = arith.constant 0 : index
    %542 = vector.load %arg10[%c0_202, %c0_203] : memref<1x128xf32, #tpu.memory_space<vmem>>, vector<1x128xf32>
    %543 = vector.broadcast %542 : vector<1x128xf32> to vector<8x128xf32>
    %544 = arith.addf %541, %543 : vector<8x128xf32>
    %c0_204 = arith.constant 0 : index
    %c0_205 = arith.constant 0 : index
    %545 = vector.load %arg11[%c0_204, %c0_205] : memref<8x128xf32, #tpu.memory_space<vmem>>, vector<8x128xf32>
    tpu.vector_store %arg11[%c0_204, %c0_205], %544 {strides = array<i32>} : memref<8x128xf32, #tpu.memory_space<vmem>>, vector<8x128xf32>,
    return
  }
}

</mosaic_0001>

<llo_original>
// kernel: multitask_forward.1
$region0: #{multitask_forward.1}
  #allocation0 [shape = 'u32[]', space=smem, size = 0x4, offset = 0x4, fixed_abs, tag = 'smem constant byte address 0x4 - core index']
  #allocation1 [shape = 'u32[72,128]{1,0:T(1,128)}', space=vmem, size = 0x9000, scoped, tag = 'internal scratch']
  #allocation2 [shape = 'f32[64,256]{1,0:T(8,128)}', space=vmem, size = 0x10000, scoped, tag = 'scratch operand']
  #allocation3 [shape = 'f32[64,64]{1,0:T(8,128)}', space=vmem, size = 0x8000, scoped, tag = 'scratch operand']
  %s0 = inlined_call_operand.vmem [shape: f32[64,16], index: 0, kind: input, shape index: {}]
  %s1 = inlined_call_operand.vmem [shape: f32[16,256], index: 1, kind: input, shape index: {}]
  %s2 = inlined_call_operand.vmem [shape: f32[64,256], index: 2, kind: input, shape index: {}]
  %s3 = inlined_call_operand.vmem [shape: f32[1,256], index: 3, kind: input, shape index: {}]
  %s4 = inlined_call_operand.hbm [shape: f32[64,256], index: 4, kind: input, shape index: {}]
  %s5 = inlined_call_operand.hbm [shape: f32[64,256], index: 5, kind: input, shape index: {}]
  %s6 = inlined_call_operand.vmem [shape: f32[1,256], index: 6, kind: input, shape index: {}]
  %s7 = inlined_call_operand.vmem [shape: f32[64,32], index: 7, kind: input, shape index: {}]
  %s8 = inlined_call_operand.vmem [shape: f32[1,32], index: 8, kind: input, shape index: {}]
  %s9 = inlined_call_operand.hbm [shape: f32[32,128], index: 9, kind: input, shape index: {}]
  %s10 = inlined_call_operand.vmem [shape: f32[1,128], index: 10, kind: input, shape index: {}]
  %s11 = inlined_call_operand.vmem [shape: f32[8,128], index: 11, kind: output, shape index: {}]
  %s12 = sld [smem:[#allocation0]]
  $region66: #{multitask_forward.1} parent=0
    _
  %s14 = ssub.s32 1, %s12
  %s15 = scalar_select 0, %s14, %s12
  $region1: #{multitask_forward.1} parent=0
    #allocation4 [shape = 'u8[65536]{0}', space=vmem, size = 0x10000, scoped, tag = 'input window, operand 4, single buffered']
    #allocation5 [shape = 's32[1]{0}', space=sflag, size = 0x4, scoped, tag = 'scoped memory for multitask_forward.1']
    #allocation6 [shape = 'u8[65536]{0}', space=vmem, size = 0x10000, scoped, tag = 'input window, operand 5, single buffered']
    #allocation7 [shape = 's32[1]{0}', space=sflag, size = 0x4, scoped, tag = 'scoped memory for multitask_forward.1']
    #allocation8 [shape = 'u8[16384]{0}', space=vmem, size = 0x4000, scoped, tag = 'input window, operand 9, single buffered']
    %16 = vsyncpa [#allocation5], 0
    %17 = vsyncpa [#allocation7], 0
    // Predicated region
    $region2: #{multitask_forward.1} parent=1 // pred_check
      _
    $region3: #{multitask_forward.1} parent=1 // pred_check_branch
      %19 = sbr.rel (0) target = $region5
    $region4: #{multitask_forward.1} parent=1 // pred_region
      _
    $region5: #{multitask_forward.1} parent=1 // pred_fallthru
      _
    // Predicated region
    $region6: #{multitask_forward.1} parent=1 // pred_check
      _
    $region7: #{multitask_forward.1} parent=1 // pred_check_branch
      %21 = sbr.rel (0) target = $region9
    $region8: #{multitask_forward.1} parent=1 // pred_region
      _
    $region9: #{multitask_forward.1} parent=1 // pred_fallthru
      _
    // Predicated region
    $region10: #{multitask_forward.1} parent=1 // pred_check
      _
    $region11: #{multitask_forward.1} parent=1 // pred_check_branch
      %23 = sbr.rel (0) target = $region13
    $region12: #{multitask_forward.1} parent=1 // pred_region
      _
    $region13: #{multitask_forward.1} parent=1 // pred_fallthru
      _
    // Predicated region
    $region14: #{multitask_forward.1} parent=1 // pred_check
      _
    $region15: #{multitask_forward.1} parent=1 // pred_check_branch
      %25 = sbr.rel (0) target = $region17
    $region16: #{multitask_forward.1} parent=1 // pred_region
      _
    $region17: #{multitask_forward.1} parent=1 // pred_fallthru
      _
    // Predicated region
    $region18: #{multitask_forward.1} parent=1 // pred_check
      _
    $region19: #{multitask_forward.1} parent=1 // pred_check_branch
      %27 = sbr.rel (0) target = $region21
    $region20: #{multitask_forward.1} parent=1 // pred_region
      %29 = vsyncadd [#allocation5], 0
      %s30 = sshll.u32 %s4, 4
      %s31 = int_to_ptr.hbm [resolvable:$true] %s30
      %s32 = sshll.u32 [#allocation4], 4
      %s33 = int_to_ptr.vmem [resolvable:$true] %s32
      %38 = dma.hbm_to_vmem [thread:$0]  %s31, 2048, %s33, [#allocation5], 256, 256, 16
    $region21: #{multitask_forward.1} parent=1 // pred_fallthru
      _
    // Predicated region
    $region22: #{multitask_forward.1} parent=1 // pred_check
      _
    $region23: #{multitask_forward.1} parent=1 // pred_check_branch
      %40 = sbr.rel (0) target = $region25
    $region24: #{multitask_forward.1} parent=1 // pred_region
      %42 = vsyncadd [#allocation7], 0
      %s43 = sshll.u32 %s5, 4
      %s44 = int_to_ptr.hbm [resolvable:$true] %s43
      %s45 = sshll.u32 [#allocation6], 4
      %s46 = int_to_ptr.vmem [resolvable:$true] %s45
      %51 = dma.hbm_to_vmem [thread:$0]  %s44, 2048, %s46, [#allocation7], 256, 256, 16
    $region25: #{multitask_forward.1} parent=1 // pred_fallthru
      _
    // Predicated region
    $region26: #{multitask_forward.1} parent=1 // pred_check
      _
    $region27: #{multitask_forward.1} parent=1 // pred_check_branch
      %53 = sbr.rel (0) target = $region29
    $region28: #{multitask_forward.1} parent=1 // pred_region
      _
    $region29: #{multitask_forward.1} parent=1 // pred_fallthru
      _
    // Predicated region
    $region30: #{multitask_forward.1} parent=1 // pred_check
      _
    $region31: #{multitask_forward.1} parent=1 // pred_check_branch
      %55 = sbr.rel (0) target = $region33
    $region32: #{multitask_forward.1} parent=1 // pred_region
      _
    $region33: #{multitask_forward.1} parent=1 // pred_fallthru
      _
    // Predicated region
    $region34: #{multitask_forward.1} parent=1 // pred_check
      _
    $region35: #{multitask_forward.1} parent=1 // pred_check_branch
      %57 = sbr.rel (0) target = $region37
    $region36: #{multitask_forward.1} parent=1 // pred_region
      _
    $region37: #{multitask_forward.1} parent=1 // pred_fallthru
      _
    // Predicated region
    $region38: #{multitask_forward.1} parent=1 // pred_check
      _
    $region39: #{multitask_forward.1} parent=1 // pred_check_branch
      %59 = sbr.rel (0) target = $region41
    $region40: #{multitask_forward.1} parent=1 // pred_region
      %61 = vsyncadd [#allocation7], 0
      %s62 = sshll.u32 %s9, 4
      %s63 = int_to_ptr.hbm [resolvable:$true] %s62
      %s64 = sshll.u32 [#allocation8], 4
      %s65 = int_to_ptr.vmem [resolvable:$true] %s64
      %70 = dma.hbm_to_vmem [thread:$0]  %s63, 512, %s65, [#allocation7], 128, 128, 8
    $region41: #{multitask_forward.1} parent=1 // pred_fallthru
      _
    // Predicated region
    $region42: #{multitask_forward.1} parent=1 // pred_check
      _
    $region43: #{multitask_forward.1} parent=1 // pred_check_branch
      %72 = sbr.rel (0) target = $region45
    $region44: #{multitask_forward.1} parent=1 // pred_region
      _
    $region45: #{multitask_forward.1} parent=1 // pred_fallthru
      _
    // Predicated region
    $region46: #{multitask_forward.1} parent=1 // pred_check
      _
    $region47: #{multitask_forward.1} parent=1 // pred_check_branch
      %74 = sbr.rel (0) target = $region49
    $region48: #{multitask_forward.1} parent=1 // pred_region
      %76 = dma.done [#allocation5], 2048
    $region49: #{multitask_forward.1} parent=1 // pred_fallthru
      _
    // Predicated region
    $region50: #{multitask_forward.1} parent=1 // pred_check
      _
    $region51: #{multitask_forward.1} parent=1 // pred_check_branch
      %78 = sbr.rel (0) target = $region53
    $region52: #{multitask_forward.1} parent=1 // pred_region
      %80 = dma.done [#allocation7], 2048
    $region53: #{multitask_forward.1} parent=1 // pred_fallthru
      _
    // Predicated region
    $region54: #{multitask_forward.1} parent=1 // pred_check
      _
    $region55: #{multitask_forward.1} parent=1 // pred_check_branch
      %82 = sbr.rel (0) target = $region57
    $region56: #{multitask_forward.1} parent=1 // pred_region
      %84 = dma.done [#allocation7], 512
    $region57: #{multitask_forward.1} parent=1 // pred_fallthru
      _
    %v85 = vlaneseq
    %v86 = vand.u32 %v85, 127
    %v87 = vadd.s32 %v86, 128
    %vm88 = vcmp.lt.s32.totalorder %v86, 0
    %v89 = vsub.s32 0, %v86
    %v90 = vsel %vm88, %v89, %v86
    %v91 = vshrl.u32 %v90, 6
    %v92 = vand.u32 %v90, 63
    %v93 = vsub.s32 0, %v92
    %v94 = vsel %vm88, %v93, %v92
    %vm95 = vcmp.lt.s32.totalorder %v87, 0
    %v96 = vsub.s32 0, %v87
    %v97 = vsel %vm95, %v96, %v87
    %v98 = vshrl.u32 %v97, 6
    %v99 = vand.u32 %v97, 63
    %v100 = vsub.s32 0, %v99
    %v101 = vsel %vm95, %v100, %v99
    %vm102 = vcmp.ne.s32.totalorder %v94, 0
    %vm103 = vcmp.ne.s32.totalorder %v101, 0
    %vm104 = vcmp.lt.s32.totalorder %v94, 0
    %vm105 = vcmp.lt.s32.totalorder %v101, 0
    %vm106 = vmand %vm104, %vm102
    %vm107 = vmand %vm105, %vm103
    %v108 = vadd.s32 %v94, 64
    %v109 = vadd.s32 %v101, 64
    %v110 = vsel %vm106, %v108, %v94
    %v111 = vsel %vm107, %v109, %v101
    %vm112 = vcmp.lt.s32.totalorder %v110, 32
    %vm113 = vcmp.lt.s32.totalorder %v111, 32
    %v114 = vld [vmem:[%s0] sm:$0xff]
    %v115 = vld [vmem:[%s0 + $0x8] sm:$0xff]
    %v116 = vld [vmem:[%s0 + $0x10] sm:$0xff]
    %v117 = vld [vmem:[%s0 + $0x18] sm:$0xff]
    %v118 = vld [vmem:[%s0 + $0x20] sm:$0xff]
    %v119 = vld [vmem:[%s0 + $0x28] sm:$0xff]
    %v120 = vld [vmem:[%s0 + $0x30] sm:$0xff]
    %v121 = vld [vmem:[%s0 + $0x38] sm:$0xff]
    %v122 = vld [vmem:[%s1] sm:$0xff]
    %v123 = vld [vmem:[%s1 + $0x8] sm:$0xff]
    %v124 = vld [vmem:[%s1 + $0x10] sm:$0xff]
    %v125 = vld [vmem:[%s1 + $0x18] sm:$0xff]
    %v126 = vld [vmem:[%s3] sm:$0x3]
    %v128 = vperm.slane %v126, 0
    %v129 = vperm.slane %v126, 1
    %vm132 = vcmask 130048
    %v134 = vsel %vm132, %v114, 0
    %v137 = vsel %vm132, %v115, 0
    %v140 = vsel %vm132, %v116, 0
    %v143 = vsel %vm132, %v117, 0
    %v146 = vsel %vm132, %v118, 0
    %v149 = vsel %vm132, %v119, 0
    %v152 = vsel %vm132, %v120, 0
    %v155 = vsel %vm132, %v121, 0
    %157 = vmatpush.msra.mxu0 0.0
    %158 = vmatpush.msra.mxu0 0.0
    %159 = vmatpush.msra.mxu0 0.0
    %160 = vmatpush.msra.mxu0 0.0
    %161 = vmatpush.msra.mxu0 0.0
    %162 = vmatpush.msra.mxu0 0.0
    %163 = vmatpush.msra.mxu0 0.0
    %164 = vmatpush.msra.mxu0 0.0
    %165 = vmatpush.msra.mxu0 0.0
    %166 = vmatpush.msra.mxu0 0.0
    %167 = vmatpush.msra.mxu0 0.0
    %168 = vmatpush.msra.mxu0 0.0
    %169 = vmatpush.msra.mxu0 0.0
    %170 = vmatpush.msra.mxu0 0.0
    %171 = vmatpush.msra.mxu0 %v124
    %172 = vmatpush.msra.mxu0 %v122
    %173 = vmatmul.f32.gmra.mxu0 %v134
    %v174 = vpop.f32.mrf.mxu0
    %v175 = vadd.f32 %v128, %v174
    %176 = vmatmul.f32.gmra.mxu0 %v137
    %v177 = vpop.f32.mrf.mxu0
    %v178 = vadd.f32 %v128, %v177
    %179 = vmatmul.f32.gmra.mxu0 %v140
    %v180 = vpop.f32.mrf.mxu0
    %v181 = vadd.f32 %v128, %v180
    %182 = vmatmul.f32.gmra.mxu0 %v143
    %v183 = vpop.f32.mrf.mxu0
    %v184 = vadd.f32 %v128, %v183
    %185 = vmatmul.f32.gmra.mxu0 %v146
    %v186 = vpop.f32.mrf.mxu0
    %v187 = vadd.f32 %v128, %v186
    %188 = vmatmul.f32.gmra.mxu0 %v149
    %v189 = vpop.f32.mrf.mxu0
    %v190 = vadd.f32 %v128, %v189
    %191 = vmatmul.f32.gmra.mxu0 %v152
    %v192 = vpop.f32.mrf.mxu0
    %v193 = vadd.f32 %v128, %v192
    %194 = vmatmul.f32.gmra.mxu0 %v155
    %v195 = vpop.f32.mrf.mxu0
    %v196 = vadd.f32 %v128, %v195
    %197 = vdwg.mxu0
    %198 = vmatpush.msra.mxu0 0.0
    %199 = vmatpush.msra.mxu0 0.0
    %200 = vmatpush.msra.mxu0 0.0
    %201 = vmatpush.msra.mxu0 0.0
    %202 = vmatpush.msra.mxu0 0.0
    %203 = vmatpush.msra.mxu0 0.0
    %204 = vmatpush.msra.mxu0 0.0
    %205 = vmatpush.msra.mxu0 0.0
    %206 = vmatpush.msra.mxu0 0.0
    %207 = vmatpush.msra.mxu0 0.0
    %208 = vmatpush.msra.mxu0 0.0
    %209 = vmatpush.msra.mxu0 0.0
    %210 = vmatpush.msra.mxu0 0.0
    %211 = vmatpush.msra.mxu0 0.0
    %212 = vmatpush.msra.mxu0 %v125
    %213 = vmatpush.msra.mxu0 %v123
    %214 = vmatmul.f32.gmra.mxu0 %v134
    %v215 = vpop.f32.mrf.mxu0
    %v216 = vadd.f32 %v129, %v215
    %217 = vmatmul.f32.gmra.mxu0 %v137
    %v218 = vpop.f32.mrf.mxu0
    %v219 = vadd.f32 %v129, %v218
    %220 = vmatmul.f32.gmra.mxu0 %v140
    %v221 = vpop.f32.mrf.mxu0
    %v222 = vadd.f32 %v129, %v221
    %223 = vmatmul.f32.gmra.mxu0 %v143
    %v224 = vpop.f32.mrf.mxu0
    %v225 = vadd.f32 %v129, %v224
    %226 = vmatmul.f32.gmra.mxu0 %v146
    %v227 = vpop.f32.mrf.mxu0
    %v228 = vadd.f32 %v129, %v227
    %229 = vmatmul.f32.gmra.mxu0 %v149
    %v230 = vpop.f32.mrf.mxu0
    %v231 = vadd.f32 %v129, %v230
    %232 = vmatmul.f32.gmra.mxu0 %v152
    %v233 = vpop.f32.mrf.mxu0
    %v234 = vadd.f32 %v129, %v233
    %235 = vmatmul.f32.gmra.mxu0 %v155
    %v236 = vpop.f32.mrf.mxu0
    %v237 = vadd.f32 %v129, %v236
    %238 = vdwg.mxu0
    %239 = vst [vmem:[#allocation2] sm:$0xff] %v175
    %240 = vst [vmem:[#allocation2 + $0x8] sm:$0xff] %v216
    %241 = vst [vmem:[#allocation2 + $0x10] sm:$0xff] %v178
    %242 = vst [vmem:[#allocation2 + $0x18] sm:$0xff] %v219
    %243 = vst [vmem:[#allocation2 + $0x20] sm:$0xff] %v181
    %244 = vst [vmem:[#allocation2 + $0x28] sm:$0xff] %v222
    %245 = vst [vmem:[#allocation2 + $0x30] sm:$0xff] %v184
    %246 = vst [vmem:[#allocation2 + $0x38] sm:$0xff] %v225
    %247 = vst [vmem:[#allocation2 + $0x40] sm:$0xff] %v187
    %248 = vst [vmem:[#allocation2 + $0x48] sm:$0xff] %v228
    %249 = vst [vmem:[#allocation2 + $0x50] sm:$0xff] %v190
    %250 = vst [vmem:[#allocation2 + $0x58] sm:$0xff] %v231
    %251 = vst [vmem:[#allocation2 + $0x60] sm:$0xff] %v193
    %252 = vst [vmem:[#allocation2 + $0x68] sm:$0xff] %v234
    %253 = vst [vmem:[#allocation2 + $0x70] sm:$0xff] %v196
    %254 = vst [vmem:[#allocation2 + $0x78] sm:$0xff] %v237
    %s255 = smul.u32 0, 2
    %s256 = smul.addr %s255, 8
    %s257 = scalar_lea.vmem [#allocation2], %s256
    %v258 = vld [vmem:[%s257] sm:$0xff]
    %v259 = vld [vmem:[%s257 + $0x8] sm:$0xff]
    %s260 = smul.u32 7, 2
    %s261 = smul.addr %s260, 8
    %s262 = scalar_lea.vmem [#allocation2], %s261
    %v263 = vld [vmem:[%s262] sm:$0xff]
    %v264 = vld [vmem:[%s262 + $0x8] sm:$0xff]
    %v265 = vsel %vm112, %v258, %v263
    %v266 = vsel %vm113, %v259, %v264
    %v267 = vld [vmem:[%s2] sm:$0xff]
    %v268 = vld [vmem:[%s2 + $0x8] sm:$0xff]
    %v269 = vld [vmem:[%s2 + $0x10] sm:$0xff]
    %v270 = vld [vmem:[%s2 + $0x18] sm:$0xff]
    %v271 = vld [vmem:[%s2 + $0x20] sm:$0xff]
    %v272 = vld [vmem:[%s2 + $0x28] sm:$0xff]
    %v273 = vld [vmem:[%s2 + $0x30] sm:$0xff]
    %v274 = vld [vmem:[%s2 + $0x38] sm:$0xff]
    %v275 = vld [vmem:[%s2 + $0x40] sm:$0xff]
    %v276 = vld [vmem:[%s2 + $0x48] sm:$0xff]
    %v277 = vld [vmem:[%s2 + $0x50] sm:$0xff]
    %v278 = vld [vmem:[%s2 + $0x58] sm:$0xff]
    %v279 = vld [vmem:[%s2 + $0x60] sm:$0xff]
    %v280 = vld [vmem:[%s2 + $0x68] sm:$0xff]
    %v281 = vld [vmem:[%s2 + $0x70] sm:$0xff]
    %v282 = vld [vmem:[%s2 + $0x78] sm:$0xff]
    %vm283 = vcmask 523264
    %v285 = vsel %vm283, 0.0, 0
    %287 = vmatpush.msra.mxu0 0.0
    %288 = vmatpush.msra.mxu0 0.0
    %289 = vmatpush.msra.mxu0 0.0
    %290 = vmatpush.msra.mxu0 0.0
    %291 = vmatpush.msra.mxu0 0.0
    %292 = vmatpush.msra.mxu0 0.0
    %293 = vmatpush.msra.mxu0 0.0
    %294 = vmatpush.msra.mxu0 0.0
    %295 = vmatpush.msra.mxu0 %v281
    %296 = vmatpush.msra.mxu0 %v279
    %297 = vmatpush.msra.mxu0 %v277
    %298 = vmatpush.msra.mxu0 %v275
    %299 = vmatpush.msra.mxu0 %v273
    %300 = vmatpush.msra.mxu0 %v271
    %301 = vmatpush.msra.mxu0 %v269
    %302 = vmatpush.msra.mxu0 %v267
    %303 = vmatmul.f32.gmra.mxu0 %v285
    %v304 = vpop.f32.mrf.mxu0
    %v305 = vadd.f32 0.0, %v304
    %306 = vdwg.mxu0
    %307 = vmatpush.msra.mxu0 0.0
    %308 = vmatpush.msra.mxu0 0.0
    %309 = vmatpush.msra.mxu0 0.0
    %310 = vmatpush.msra.mxu0 0.0
    %311 = vmatpush.msra.mxu0 0.0
    %312 = vmatpush.msra.mxu0 0.0
    %313 = vmatpush.msra.mxu0 0.0
    %314 = vmatpush.msra.mxu0 0.0
    %315 = vmatpush.msra.mxu0 %v282
    %316 = vmatpush.msra.mxu0 %v280
    %317 = vmatpush.msra.mxu0 %v278
    %318 = vmatpush.msra.mxu0 %v276
    %319 = vmatpush.msra.mxu0 %v274
    %320 = vmatpush.msra.mxu0 %v272
    %321 = vmatpush.msra.mxu0 %v270
    %322 = vmatpush.msra.mxu0 %v268
    %323 = vmatmul.f32.gmra.mxu0 %v285
    %v324 = vpop.f32.mrf.mxu0
    %v325 = vadd.f32 0.0, %v324
    %326 = vdwg.mxu0
    %v327 = vadd.f32 %v265, %v305
    %v328 = vadd.f32 %v266, %v325
    %v329 = vxor.u32 %v327, 2147483648
    %v330 = vxor.u32 %v328, 2147483648
    %v331 = vmul.f32 %v329, 1.442695
    %v332 = vpow.pop %v331
    %v333 = vmul.f32 %v330, 1.442695
    %v334 = vpow.pop %v333
    %v335 = vadd.f32 %v332, 1.0
    %v336 = vadd.f32 %v334, 1.0
    %v337 = vrcp.pop %v335
    %v338 = vmul.f32 %v335, %v337
    %v339 = vsub.f32 1.0, %v338
    %v340 = vmul.f32 %v337, %v339
    %v341 = vadd.f32 %v337, %v340
    %vm342 = vweird.f32 %v335
    %vm343 = vweird.f32 %v337
    %vm344 = vmor %vm342, %vm343
    %v345 = vsel %vm344, %v337, %v341
    %v346 = vand.u32 2147483647, %v335
    %vm347 = vcmp.eq.f32.partialorder %v346, 8.507059e+37
    %v348 = vand.u32 %v335, 2147483648
    %v349 = vor.u32 1.1754944e-38, %v348
    %v350 = vsel %vm347, %v349, %v345
    %v351 = vmul.f32 1.0, %v350
    %v352 = vrcp.pop %v336
    %v353 = vmul.f32 %v336, %v352
    %v354 = vsub.f32 1.0, %v353
    %v355 = vmul.f32 %v352, %v354
    %v356 = vadd.f32 %v352, %v355
    %vm357 = vweird.f32 %v336
    %vm358 = vweird.f32 %v352
    %vm359 = vmor %vm357, %vm358
    %v360 = vsel %vm359, %v352, %v356
    %v361 = vand.u32 2147483647, %v336
    %vm362 = vcmp.eq.f32.partialorder %v361, 8.507059e+37
    %v363 = vand.u32 %v336, 2147483648
    %v364 = vor.u32 1.1754944e-38, %v363
    %v365 = vsel %vm362, %v364, %v360
    %v366 = vmul.f32 1.0, %v365
    %v367 = vtanh.pop %v328
    %v368 = vmul.f32 %v351, 0.0
    %v369 = vmul.f32 %v351, %v367
    %371 = vrot.lane.b32.xlu0 %v369, 64
    %v372 = vpop.permute.xlu0 %371
    %v374 = vadd.f32 %v368, %v372
    %v375 = vtanh.pop %v374
    %v376 = vmul.f32 %v366, %v375
    %378 = vrot.lane.b32.xlu0 %v376, 64
    %v379 = vpop.permute.xlu0 %378
    %vm381 = vcmask 261120
    %382 = vst.msk [vmem:[#allocation3] sm:$0xff] %vm381, %v379
    %s383 = scalar_lea.vmem [#allocation3], 56
    %vm384 = vcmask 523520
    %385 = vst.msk [vmem:[%s383] sm:$0xff] %vm384, %v379
    %s386 = smul.u32 1, 2
    %s387 = smul.addr %s386, 8
    %s388 = scalar_lea.vmem [#allocation2], %s387
    %v389 = vld [vmem:[%s388] sm:$0xff]
    %v390 = vld [vmem:[%s388 + $0x8] sm:$0xff]
    %s391 = smul.u32 6, 2
    %s392 = smul.addr %s391, 8
    %s393 = scalar_lea.vmem [#allocation2], %s392
    %v394 = vld [vmem:[%s393] sm:$0xff]
    %v395 = vld [vmem:[%s393 + $0x8] sm:$0xff]
    %v396 = vsel %vm112, %v389, %v394
    %v397 = vsel %vm113, %v390, %v395
    %v398 = vld [vmem:[%s2] sm:$0xff]
    %v399 = vld [vmem:[%s2 + $0x8] sm:$0xff]
    %v400 = vld [vmem:[%s2 + $0x10] sm:$0xff]
    %v401 = vld [vmem:[%s2 + $0x18] sm:$0xff]
    %v402 = vld [vmem:[%s2 + $0x20] sm:$0xff]
    %v403 = vld [vmem:[%s2 + $0x28] sm:$0xff]
    %v404 = vld [vmem:[%s2 + $0x30] sm:$0xff]
    %v405 = vld [vmem:[%s2 + $0x38] sm:$0xff]
    %v406 = vld [vmem:[%s2 + $0x40] sm:$0xff]
    %v407 = vld [vmem:[%s2 + $0x48] sm:$0xff]
    %v408 = vld [vmem:[%s2 + $0x50] sm:$0xff]
    %v409 = vld [vmem:[%s2 + $0x58] sm:$0xff]
    %v410 = vld [vmem:[%s2 + $0x60] sm:$0xff]
    %v411 = vld [vmem:[%s2 + $0x68] sm:$0xff]
    %v412 = vld [vmem:[%s2 + $0x70] sm:$0xff]
    %v413 = vld [vmem:[%s2 + $0x78] sm:$0xff]
    %v414 = vsel %vm283, %v379, 0
    %416 = vmatpush.msra.mxu0 0.0
    %417 = vmatpush.msra.mxu0 0.0
    %418 = vmatpush.msra.mxu0 0.0
    %419 = vmatpush.msra.mxu0 0.0
    %420 = vmatpush.msra.mxu0 0.0
    %421 = vmatpush.msra.mxu0 0.0
    %422 = vmatpush.msra.mxu0 0.0
    %423 = vmatpush.msra.mxu0 0.0
    %424 = vmatpush.msra.mxu0 %v412
    %425 = vmatpush.msra.mxu0 %v410
    %426 = vmatpush.msra.mxu0 %v408
    %427 = vmatpush.msra.mxu0 %v406
    %428 = vmatpush.msra.mxu0 %v404
    %429 = vmatpush.msra.mxu0 %v402
    %430 = vmatpush.msra.mxu0 %v400
    %431 = vmatpush.msra.mxu0 %v398
    %432 = vmatmul.f32.gmra.mxu0 %v414
    %v433 = vpop.f32.mrf.mxu0
    %v434 = vadd.f32 0.0, %v433
    %435 = vdwg.mxu0
    %436 = vmatpush.msra.mxu0 0.0
    %437 = vmatpush.msra.mxu0 0.0
    %438 = vmatpush.msra.mxu0 0.0
    %439 = vmatpush.msra.mxu0 0.0
    %440 = vmatpush.msra.mxu0 0.0
    %441 = vmatpush.msra.mxu0 0.0
    %442 = vmatpush.msra.mxu0 0.0
    %443 = vmatpush.msra.mxu0 0.0
    %444 = vmatpush.msra.mxu0 %v413
    %445 = vmatpush.msra.mxu0 %v411
    %446 = vmatpush.msra.mxu0 %v409
    %447 = vmatpush.msra.mxu0 %v407
    %448 = vmatpush.msra.mxu0 %v405
    %449 = vmatpush.msra.mxu0 %v403
    %450 = vmatpush.msra.mxu0 %v401
    %451 = vmatpush.msra.mxu0 %v399
    %452 = vmatmul.f32.gmra.mxu0 %v414
    %v453 = vpop.f32.mrf.mxu0
    %v454 = vadd.f32 0.0, %v453
    %455 = vdwg.mxu0
    %v456 = vadd.f32 %v396, %v434
    %v457 = vadd.f32 %v397, %v454
    %v458 = vxor.u32 %v456, 2147483648
    %v459 = vxor.u32 %v457, 2147483648
    %v460 = vmul.f32 %v458, 1.442695
    %v461 = vpow.pop %v460
    %v462 = vmul.f32 %v459, 1.442695
    %v463 = vpow.pop %v462
    %v464 = vadd.f32 %v461, 1.0
    %v465 = vadd.f32 %v463, 1.0
    %v466 = vrcp.pop %v464
    %v467 = vmul.f32 %v464, %v466
    %v468 = vsub.f32 1.0, %v467
    %v469 = vmul.f32 %v466, %v468
    %v470 = vadd.f32 %v466, %v469
    %vm471 = vweird.f32 %v464
    %vm472 = vweird.f32 %v466
    %vm473 = vmor %vm471, %vm472
    %v474 = vsel %vm473, %v466, %v470
    %v475 = vand.u32 2147483647, %v464
    %vm476 = vcmp.eq.f32.partialorder %v475, 8.507059e+37
    %v477 = vand.u32 %v464, 2147483648
    %v478 = vor.u32 1.1754944e-38, %v477
    %v479 = vsel %vm476, %v478, %v474
    %v480 = vmul.f32 1.0, %v479
    %v481 = vrcp.pop %v465
    %v482 = vmul.f32 %v465, %v481
    %v483 = vsub.f32 1.0, %v482
    %v484 = vmul.f32 %v481, %v483
    %v485 = vadd.f32 %v481, %v484
    %vm486 = vweird.f32 %v465
    %vm487 = vweird.f32 %v481
    %vm488 = vmor %vm486, %vm487
    %v489 = vsel %vm488, %v481, %v485
    %v490 = vand.u32 2147483647, %v465
    %vm491 = vcmp.eq.f32.partialorder %v490, 8.507059e+37
    %v492 = vand.u32 %v465, 2147483648
    %v493 = vor.u32 1.1754944e-38, %v492
    %v494 = vsel %vm491, %v493, %v489
    %v495 = vmul.f32 1.0, %v494
    %v496 = vtanh.pop %v457
    %v497 = vmul.f32 %v480, %v374
    %v498 = vmul.f32 %v480, %v496
    %500 = vrot.lane.b32.xlu0 %v498, 64
    %v501 = vpop.permute.xlu0 %500
    %v503 = vadd.f32 %v497, %v501
    %v504 = vtanh.pop %v503
    %v505 = vmul.f32 %v495, %v504
    %507 = vrot.lane.b32.xlu0 %v505, 64
    %v508 = vpop.permute.xlu0 %507
    %s510 = scalar_lea.vmem [#allocation3], 8
    %511 = vst.msk [vmem:[%s510] sm:$0xff] %vm381, %v508
    %s512 = scalar_lea.vmem [#allocation3], 48
    %513 = vst.msk [vmem:[%s512] sm:$0xff] %vm384, %v508
    %s514 = smul.u32 2, 2
    %s515 = smul.addr %s514, 8
    %s516 = scalar_lea.vmem [#allocation2], %s515
    %v517 = vld [vmem:[%s516] sm:$0xff]
    %v518 = vld [vmem:[%s516 + $0x8] sm:$0xff]
    %s519 = smul.u32 5, 2
    %s520 = smul.addr %s519, 8
    %s521 = scalar_lea.vmem [#allocation2], %s520
    %v522 = vld [vmem:[%s521] sm:$0xff]
    %v523 = vld [vmem:[%s521 + $0x8] sm:$0xff]
    %v524 = vsel %vm112, %v517, %v522
    %v525 = vsel %vm113, %v518, %v523
    %v526 = vld [vmem:[%s2] sm:$0xff]
    %v527 = vld [vmem:[%s2 + $0x8] sm:$0xff]
    %v528 = vld [vmem:[%s2 + $0x10] sm:$0xff]
    %v529 = vld [vmem:[%s2 + $0x18] sm:$0xff]
    %v530 = vld [vmem:[%s2 + $0x20] sm:$0xff]
    %v531 = vld [vmem:[%s2 + $0x28] sm:$0xff]
    %v532 = vld [vmem:[%s2 + $0x30] sm:$0xff]
    %v533 = vld [vmem:[%s2 + $0x38] sm:$0xff]
    %v534 = vld [vmem:[%s2 + $0x40] sm:$0xff]
    %v535 = vld [vmem:[%s2 + $0x48] sm:$0xff]
    %v536 = vld [vmem:[%s2 + $0x50] sm:$0xff]
    %v537 = vld [vmem:[%s2 + $0x58] sm:$0xff]
    %v538 = vld [vmem:[%s2 + $0x60] sm:$0xff]
    %v539 = vld [vmem:[%s2 + $0x68] sm:$0xff]
    %v540 = vld [vmem:[%s2 + $0x70] sm:$0xff]
    %v541 = vld [vmem:[%s2 + $0x78] sm:$0xff]
    %v542 = vsel %vm283, %v508, 0
    %544 = vmatpush.msra.mxu0 0.0
    %545 = vmatpush.msra.mxu0 0.0
    %546 = vmatpush.msra.mxu0 0.0
    %547 = vmatpush.msra.mxu0 0.0
    %548 = vmatpush.msra.mxu0 0.0
    %549 = vmatpush.msra.mxu0 0.0
    %550 = vmatpush.msra.mxu0 0.0
    %551 = vmatpush.msra.mxu0 0.0
    %552 = vmatpush.msra.mxu0 %v540
    %553 = vmatpush.msra.mxu0 %v538
    %554 = vmatpush.msra.mxu0 %v536
    %555 = vmatpush.msra.mxu0 %v534
    %556 = vmatpush.msra.mxu0 %v532
    %557 = vmatpush.msra.mxu0 %v530
    %558 = vmatpush.msra.mxu0 %v528
    %559 = vmatpush.msra.mxu0 %v526
    %560 = vmatmul.f32.gmra.mxu0 %v542
    %v561 = vpop.f32.mrf.mxu0
    %v562 = vadd.f32 0.0, %v561
    %563 = vdwg.mxu0
    %564 = vmatpush.msra.mxu0 0.0
    %565 = vmatpush.msra.mxu0 0.0
    %566 = vmatpush.msra.mxu0 0.0
    %567 = vmatpush.msra.mxu0 0.0
    %568 = vmatpush.msra.mxu0 0.0
    %569 = vmatpush.msra.mxu0 0.0
    %570 = vmatpush.msra.mxu0 0.0
    %571 = vmatpush.msra.mxu0 0.0
    %572 = vmatpush.msra.mxu0 %v541
    %573 = vmatpush.msra.mxu0 %v539
    %574 = vmatpush.msra.mxu0 %v537
    %575 = vmatpush.msra.mxu0 %v535
    %576 = vmatpush.msra.mxu0 %v533
    %577 = vmatpush.msra.mxu0 %v531
    %578 = vmatpush.msra.mxu0 %v529
    %579 = vmatpush.msra.mxu0 %v527
    %580 = vmatmul.f32.gmra.mxu0 %v542
    %v581 = vpop.f32.mrf.mxu0
    %v582 = vadd.f32 0.0, %v581
    %583 = vdwg.mxu0
    %v584 = vadd.f32 %v524, %v562
    %v585 = vadd.f32 %v525, %v582
    %v586 = vxor.u32 %v584, 2147483648
    %v587 = vxor.u32 %v585, 2147483648
    %v588 = vmul.f32 %v586, 1.442695
    %v589 = vpow.pop %v588
    %v590 = vmul.f32 %v587, 1.442695
    %v591 = vpow.pop %v590
    %v592 = vadd.f32 %v589, 1.0
    %v593 = vadd.f32 %v591, 1.0
    %v594 = vrcp.pop %v592
    %v595 = vmul.f32 %v592, %v594
    %v596 = vsub.f32 1.0, %v595
    %v597 = vmul.f32 %v594, %v596
    %v598 = vadd.f32 %v594, %v597
    %vm599 = vweird.f32 %v592
    %vm600 = vweird.f32 %v594
    %vm601 = vmor %vm599, %vm600
    %v602 = vsel %vm601, %v594, %v598
    %v603 = vand.u32 2147483647, %v592
    %vm604 = vcmp.eq.f32.partialorder %v603, 8.507059e+37
    %v605 = vand.u32 %v592, 2147483648
    %v606 = vor.u32 1.1754944e-38, %v605
    %v607 = vsel %vm604, %v606, %v602
    %v608 = vmul.f32 1.0, %v607
    %v609 = vrcp.pop %v593
    %v610 = vmul.f32 %v593, %v609
    %v611 = vsub.f32 1.0, %v610
    %v612 = vmul.f32 %v609, %v611
    %v613 = vadd.f32 %v609, %v612
    %vm614 = vweird.f32 %v593
    %vm615 = vweird.f32 %v609
    %vm616 = vmor %vm614, %vm615
    %v617 = vsel %vm616, %v609, %v613
    %v618 = vand.u32 2147483647, %v593
    %vm619 = vcmp.eq.f32.partialorder %v618, 8.507059e+37
    %v620 = vand.u32 %v593, 2147483648
    %v621 = vor.u32 1.1754944e-38, %v620
    %v622 = vsel %vm619, %v621, %v617
    %v623 = vmul.f32 1.0, %v622
    %v624 = vtanh.pop %v585
    %v625 = vmul.f32 %v608, %v503
    %v626 = vmul.f32 %v608, %v624
    %628 = vrot.lane.b32.xlu0 %v626, 64
    %v629 = vpop.permute.xlu0 %628
    %v631 = vadd.f32 %v625, %v629
    %v632 = vtanh.pop %v631
    %v633 = vmul.f32 %v623, %v632
    %635 = vrot.lane.b32.xlu0 %v633, 64
    %v636 = vpop.permute.xlu0 %635
    %s638 = scalar_lea.vmem [#allocation3], 16
    %639 = vst.msk [vmem:[%s638] sm:$0xff] %vm381, %v636
    %s640 = scalar_lea.vmem [#allocation3], 40
    %641 = vst.msk [vmem:[%s640] sm:$0xff] %vm384, %v636
    %s642 = smul.u32 3, 2
    %s643 = smul.addr %s642, 8
    %s644 = scalar_lea.vmem [#allocation2], %s643
    %v645 = vld [vmem:[%s644] sm:$0xff]
    %v646 = vld [vmem:[%s644 + $0x8] sm:$0xff]
    %s647 = smul.u32 4, 2
    %s648 = smul.addr %s647, 8
    %s649 = scalar_lea.vmem [#allocation2], %s648
    %v650 = vld [vmem:[%s649] sm:$0xff]
    %v651 = vld [vmem:[%s649 + $0x8] sm:$0xff]
    %v652 = vsel %vm112, %v645, %v650
    %v653 = vsel %vm113, %v646, %v651
    %v654 = vld [vmem:[%s2] sm:$0xff]
    %v655 = vld [vmem:[%s2 + $0x8] sm:$0xff]
    %v656 = vld [vmem:[%s2 + $0x10] sm:$0xff]
    %v657 = vld [vmem:[%s2 + $0x18] sm:$0xff]
    %v658 = vld [vmem:[%s2 + $0x20] sm:$0xff]
    %v659 = vld [vmem:[%s2 + $0x28] sm:$0xff]
    %v660 = vld [vmem:[%s2 + $0x30] sm:$0xff]
    %v661 = vld [vmem:[%s2 + $0x38] sm:$0xff]
    %v662 = vld [vmem:[%s2 + $0x40] sm:$0xff]
    %v663 = vld [vmem:[%s2 + $0x48] sm:$0xff]
    %v664 = vld [vmem:[%s2 + $0x50] sm:$0xff]
    %v665 = vld [vmem:[%s2 + $0x58] sm:$0xff]
    %v666 = vld [vmem:[%s2 + $0x60] sm:$0xff]
    %v667 = vld [vmem:[%s2 + $0x68] sm:$0xff]
    %v668 = vld [vmem:[%s2 + $0x70] sm:$0xff]
    %v669 = vld [vmem:[%s2 + $0x78] sm:$0xff]
    %v670 = vsel %vm283, %v636, 0
    %672 = vmatpush.msra.mxu0 0.0
    %673 = vmatpush.msra.mxu0 0.0
    %674 = vmatpush.msra.mxu0 0.0
    %675 = vmatpush.msra.mxu0 0.0
    %676 = vmatpush.msra.mxu0 0.0
    %677 = vmatpush.msra.mxu0 0.0
    %678 = vmatpush.msra.mxu0 0.0
    %679 = vmatpush.msra.mxu0 0.0
    %680 = vmatpush.msra.mxu0 %v668
    %681 = vmatpush.msra.mxu0 %v666
    %682 = vmatpush.msra.mxu0 %v664
    %683 = vmatpush.msra.mxu0 %v662
    %684 = vmatpush.msra.mxu0 %v660
    %685 = vmatpush.msra.mxu0 %v658
    %686 = vmatpush.msra.mxu0 %v656
    %687 = vmatpush.msra.mxu0 %v654
    %688 = vmatmul.f32.gmra.mxu0 %v670
    %v689 = vpop.f32.mrf.mxu0
    %v690 = vadd.f32 0.0, %v689
    %691 = vdwg.mxu0
    %692 = vmatpush.msra.mxu0 0.0
    %693 = vmatpush.msra.mxu0 0.0
    %694 = vmatpush.msra.mxu0 0.0
    %695 = vmatpush.msra.mxu0 0.0
    %696 = vmatpush.msra.mxu0 0.0
    %697 = vmatpush.msra.mxu0 0.0
    %698 = vmatpush.msra.mxu0 0.0
    %699 = vmatpush.msra.mxu0 0.0
    %700 = vmatpush.msra.mxu0 %v669
    %701 = vmatpush.msra.mxu0 %v667
    %702 = vmatpush.msra.mxu0 %v665
    %703 = vmatpush.msra.mxu0 %v663
    %704 = vmatpush.msra.mxu0 %v661
    %705 = vmatpush.msra.mxu0 %v659
    %706 = vmatpush.msra.mxu0 %v657
    %707 = vmatpush.msra.mxu0 %v655
    %708 = vmatmul.f32.gmra.mxu0 %v670
    %v709 = vpop.f32.mrf.mxu0
    %v710 = vadd.f32 0.0, %v709
    %711 = vdwg.mxu0
    %v712 = vadd.f32 %v652, %v690
    %v713 = vadd.f32 %v653, %v710
    %v714 = vxor.u32 %v712, 2147483648
    %v715 = vxor.u32 %v713, 2147483648
    %v716 = vmul.f32 %v714, 1.442695
    %v717 = vpow.pop %v716
    %v718 = vmul.f32 %v715, 1.442695
    %v719 = vpow.pop %v718
    %v720 = vadd.f32 %v717, 1.0
    %v721 = vadd.f32 %v719, 1.0
    %v722 = vrcp.pop %v720
    %v723 = vmul.f32 %v720, %v722
    %v724 = vsub.f32 1.0, %v723
    %v725 = vmul.f32 %v722, %v724
    %v726 = vadd.f32 %v722, %v725
    %vm727 = vweird.f32 %v720
    %vm728 = vweird.f32 %v722
    %vm729 = vmor %vm727, %vm728
    %v730 = vsel %vm729, %v722, %v726
    %v731 = vand.u32 2147483647, %v720
    %vm732 = vcmp.eq.f32.partialorder %v731, 8.507059e+37
    %v733 = vand.u32 %v720, 2147483648
    %v734 = vor.u32 1.1754944e-38, %v733
    %v735 = vsel %vm732, %v734, %v730
    %v736 = vmul.f32 1.0, %v735
    %v737 = vrcp.pop %v721
    %v738 = vmul.f32 %v721, %v737
    %v739 = vsub.f32 1.0, %v738
    %v740 = vmul.f32 %v737, %v739
    %v741 = vadd.f32 %v737, %v740
    %vm742 = vweird.f32 %v721
    %vm743 = vweird.f32 %v737
    %vm744 = vmor %vm742, %vm743
    %v745 = vsel %vm744, %v737, %v741
    %v746 = vand.u32 2147483647, %v721
    %vm747 = vcmp.eq.f32.partialorder %v746, 8.507059e+37
    %v748 = vand.u32 %v721, 2147483648
    %v749 = vor.u32 1.1754944e-38, %v748
    %v750 = vsel %vm747, %v749, %v745
    %v751 = vmul.f32 1.0, %v750
    %v752 = vtanh.pop %v713
    %v753 = vmul.f32 %v736, %v631
    %v754 = vmul.f32 %v736, %v752
    %756 = vrot.lane.b32.xlu0 %v754, 64
    %v757 = vpop.permute.xlu0 %756
    %v759 = vadd.f32 %v753, %v757
    %v760 = vtanh.pop %v759
    %v761 = vmul.f32 %v751, %v760
    %763 = vrot.lane.b32.xlu0 %v761, 64
    %v764 = vpop.permute.xlu0 %763
    %s766 = scalar_lea.vmem [#allocation3], 24
    %767 = vst.msk [vmem:[%s766] sm:$0xff] %vm381, %v764
    %s768 = scalar_lea.vmem [#allocation3], 32
    %769 = vst.msk [vmem:[%s768] sm:$0xff] %vm384, %v764
    %v770 = vld [vmem:[%s649] sm:$0xff]
    %v771 = vld [vmem:[%s649 + $0x8] sm:$0xff]
    %v772 = vld [vmem:[%s644] sm:$0xff]
    %v773 = vld [vmem:[%s644 + $0x8] sm:$0xff]
    %v774 = vsel %vm112, %v770, %v772
    %v775 = vsel %vm113, %v771, %v773
    %v776 = vld [vmem:[%s2] sm:$0xff]
    %v777 = vld [vmem:[%s2 + $0x8] sm:$0xff]
    %v778 = vld [vmem:[%s2 + $0x10] sm:$0xff]
    %v779 = vld [vmem:[%s2 + $0x18] sm:$0xff]
    %v780 = vld [vmem:[%s2 + $0x20] sm:$0xff]
    %v781 = vld [vmem:[%s2 + $0x28] sm:$0xff]
    %v782 = vld [vmem:[%s2 + $0x30] sm:$0xff]
    %v783 = vld [vmem:[%s2 + $0x38] sm:$0xff]
    %v784 = vld [vmem:[%s2 + $0x40] sm:$0xff]
    %v785 = vld [vmem:[%s2 + $0x48] sm:$0xff]
    %v786 = vld [vmem:[%s2 + $0x50] sm:$0xff]
    %v787 = vld [vmem:[%s2 + $0x58] sm:$0xff]
    %v788 = vld [vmem:[%s2 + $0x60] sm:$0xff]
    %v789 = vld [vmem:[%s2 + $0x68] sm:$0xff]
    %v790 = vld [vmem:[%s2 + $0x70] sm:$0xff]
    %v791 = vld [vmem:[%s2 + $0x78] sm:$0xff]
    %v792 = vsel %vm283, %v764, 0
    %794 = vmatpush.msra.mxu0 0.0
    %795 = vmatpush.msra.mxu0 0.0
    %796 = vmatpush.msra.mxu0 0.0
    %797 = vmatpush.msra.mxu0 0.0
    %798 = vmatpush.msra.mxu0 0.0
    %799 = vmatpush.msra.mxu0 0.0
    %800 = vmatpush.msra.mxu0 0.0
    %801 = vmatpush.msra.mxu0 0.0
    %802 = vmatpush.msra.mxu0 %v790
    %803 = vmatpush.msra.mxu0 %v788
    %804 = vmatpush.msra.mxu0 %v786
    %805 = vmatpush.msra.mxu0 %v784
    %806 = vmatpush.msra.mxu0 %v782
    %807 = vmatpush.msra.mxu0 %v780
    %808 = vmatpush.msra.mxu0 %v778
    %809 = vmatpush.msra.mxu0 %v776
    %810 = vmatmul.f32.gmra.mxu0 %v792
    %v811 = vpop.f32.mrf.mxu0
    %v812 = vadd.f32 0.0, %v811
    %813 = vdwg.mxu0
    %814 = vmatpush.msra.mxu0 0.0
    %815 = vmatpush.msra.mxu0 0.0
    %816 = vmatpush.msra.mxu0 0.0
    %817 = vmatpush.msra.mxu0 0.0
    %818 = vmatpush.msra.mxu0 0.0
    %819 = vmatpush.msra.mxu0 0.0
    %820 = vmatpush.msra.mxu0 0.0
    %821 = vmatpush.msra.mxu0 0.0
    %822 = vmatpush.msra.mxu0 %v791
    %823 = vmatpush.msra.mxu0 %v789
    %824 = vmatpush.msra.mxu0 %v787
    %825 = vmatpush.msra.mxu0 %v785
    %826 = vmatpush.msra.mxu0 %v783
    %827 = vmatpush.msra.mxu0 %v781
    %828 = vmatpush.msra.mxu0 %v779
    %829 = vmatpush.msra.mxu0 %v777
    %830 = vmatmul.f32.gmra.mxu0 %v792
    %v831 = vpop.f32.mrf.mxu0
    %v832 = vadd.f32 0.0, %v831
    %833 = vdwg.mxu0
    %v834 = vadd.f32 %v774, %v812
    %v835 = vadd.f32 %v775, %v832
    %v836 = vxor.u32 %v834, 2147483648
    %v837 = vxor.u32 %v835, 2147483648
    %v838 = vmul.f32 %v836, 1.442695
    %v839 = vpow.pop %v838
    %v840 = vmul.f32 %v837, 1.442695
    %v841 = vpow.pop %v840
    %v842 = vadd.f32 %v839, 1.0
    %v843 = vadd.f32 %v841, 1.0
    %v844 = vrcp.pop %v842
    %v845 = vmul.f32 %v842, %v844
    %v846 = vsub.f32 1.0, %v845
    %v847 = vmul.f32 %v844, %v846
    %v848 = vadd.f32 %v844, %v847
    %vm849 = vweird.f32 %v842
    %vm850 = vweird.f32 %v844
    %vm851 = vmor %vm849, %vm850
    %v852 = vsel %vm851, %v844, %v848
    %v853 = vand.u32 2147483647, %v842
    %vm854 = vcmp.eq.f32.partialorder %v853, 8.507059e+37
    %v855 = vand.u32 %v842, 2147483648
    %v856 = vor.u32 1.1754944e-38, %v855
    %v857 = vsel %vm854, %v856, %v852
    %v858 = vmul.f32 1.0, %v857
    %v859 = vrcp.pop %v843
    %v860 = vmul.f32 %v843, %v859
    %v861 = vsub.f32 1.0, %v860
    %v862 = vmul.f32 %v859, %v861
    %v863 = vadd.f32 %v859, %v862
    %vm864 = vweird.f32 %v843
    %vm865 = vweird.f32 %v859
    %vm866 = vmor %vm864, %vm865
    %v867 = vsel %vm866, %v859, %v863
    %v868 = vand.u32 2147483647, %v843
    %vm869 = vcmp.eq.f32.partialorder %v868, 8.507059e+37
    %v870 = vand.u32 %v843, 2147483648
    %v871 = vor.u32 1.1754944e-38, %v870
    %v872 = vsel %vm869, %v871, %v867
    %v873 = vmul.f32 1.0, %v872
    %v874 = vtanh.pop %v835
    %v875 = vmul.f32 %v858, %v759
    %v876 = vmul.f32 %v858, %v874
    %878 = vrot.lane.b32.xlu0 %v876, 64
    %v879 = vpop.permute.xlu0 %878
    %v881 = vadd.f32 %v875, %v879
    %v882 = vtanh.pop %v881
    %v883 = vmul.f32 %v873, %v882
    %885 = vrot.lane.b32.xlu0 %v883, 64
    %v886 = vpop.permute.xlu0 %885
    %888 = vst.msk [vmem:[%s768] sm:$0xff] %vm381, %v886
    %889 = vst.msk [vmem:[%s766] sm:$0xff] %vm384, %v886
    %v890 = vld [vmem:[%s521] sm:$0xff]
    %v891 = vld [vmem:[%s521 + $0x8] sm:$0xff]
    %v892 = vld [vmem:[%s516] sm:$0xff]
    %v893 = vld [vmem:[%s516 + $0x8] sm:$0xff]
    %v894 = vsel %vm112, %v890, %v892
    %v895 = vsel %vm113, %v891, %v893
    %v896 = vld [vmem:[%s2] sm:$0xff]
    %v897 = vld [vmem:[%s2 + $0x8] sm:$0xff]
    %v898 = vld [vmem:[%s2 + $0x10] sm:$0xff]
    %v899 = vld [vmem:[%s2 + $0x18] sm:$0xff]
    %v900 = vld [vmem:[%s2 + $0x20] sm:$0xff]
    %v901 = vld [vmem:[%s2 + $0x28] sm:$0xff]
    %v902 = vld [vmem:[%s2 + $0x30] sm:$0xff]
    %v903 = vld [vmem:[%s2 + $0x38] sm:$0xff]
    %v904 = vld [vmem:[%s2 + $0x40] sm:$0xff]
    %v905 = vld [vmem:[%s2 + $0x48] sm:$0xff]
    %v906 = vld [vmem:[%s2 + $0x50] sm:$0xff]
    %v907 = vld [vmem:[%s2 + $0x58] sm:$0xff]
    %v908 = vld [vmem:[%s2 + $0x60] sm:$0xff]
    %v909 = vld [vmem:[%s2 + $0x68] sm:$0xff]
    %v910 = vld [vmem:[%s2 + $0x70] sm:$0xff]
    %v911 = vld [vmem:[%s2 + $0x78] sm:$0xff]
    %v912 = vsel %vm283, %v886, 0
    %914 = vmatpush.msra.mxu0 0.0
    %915 = vmatpush.msra.mxu0 0.0
    %916 = vmatpush.msra.mxu0 0.0
    %917 = vmatpush.msra.mxu0 0.0
    %918 = vmatpush.msra.mxu0 0.0
    %919 = vmatpush.msra.mxu0 0.0
    %920 = vmatpush.msra.mxu0 0.0
    %921 = vmatpush.msra.mxu0 0.0
    %922 = vmatpush.msra.mxu0 %v910
    %923 = vmatpush.msra.mxu0 %v908
    %924 = vmatpush.msra.mxu0 %v906
    %925 = vmatpush.msra.mxu0 %v904
    %926 = vmatpush.msra.mxu0 %v902
    %927 = vmatpush.msra.mxu0 %v900
    %928 = vmatpush.msra.mxu0 %v898
    %929 = vmatpush.msra.mxu0 %v896
    %930 = vmatmul.f32.gmra.mxu0 %v912
    %v931 = vpop.f32.mrf.mxu0
    %v932 = vadd.f32 0.0, %v931
    %933 = vdwg.mxu0
    %934 = vmatpush.msra.mxu0 0.0
    %935 = vmatpush.msra.mxu0 0.0
    %936 = vmatpush.msra.mxu0 0.0
    %937 = vmatpush.msra.mxu0 0.0
    %938 = vmatpush.msra.mxu0 0.0
    %939 = vmatpush.msra.mxu0 0.0
    %940 = vmatpush.msra.mxu0 0.0
    %941 = vmatpush.msra.mxu0 0.0
    %942 = vmatpush.msra.mxu0 %v911
    %943 = vmatpush.msra.mxu0 %v909
    %944 = vmatpush.msra.mxu0 %v907
    %945 = vmatpush.msra.mxu0 %v905
    %946 = vmatpush.msra.mxu0 %v903
    %947 = vmatpush.msra.mxu0 %v901
    %948 = vmatpush.msra.mxu0 %v899
    %949 = vmatpush.msra.mxu0 %v897
    %950 = vmatmul.f32.gmra.mxu0 %v912
    %v951 = vpop.f32.mrf.mxu0
    %v952 = vadd.f32 0.0, %v951
    %953 = vdwg.mxu0
    %v954 = vadd.f32 %v894, %v932
    %v955 = vadd.f32 %v895, %v952
    %v956 = vxor.u32 %v954, 2147483648
    %v957 = vxor.u32 %v955, 2147483648
    %v958 = vmul.f32 %v956, 1.442695
    %v959 = vpow.pop %v958
    %v960 = vmul.f32 %v957, 1.442695
    %v961 = vpow.pop %v960
    %v962 = vadd.f32 %v959, 1.0
    %v963 = vadd.f32 %v961, 1.0
    %v964 = vrcp.pop %v962
    %v965 = vmul.f32 %v962, %v964
    %v966 = vsub.f32 1.0, %v965
    %v967 = vmul.f32 %v964, %v966
    %v968 = vadd.f32 %v964, %v967
    %vm969 = vweird.f32 %v962
    %vm970 = vweird.f32 %v964
    %vm971 = vmor %vm969, %vm970
    %v972 = vsel %vm971, %v964, %v968
    %v973 = vand.u32 2147483647, %v962
    %vm974 = vcmp.eq.f32.partialorder %v973, 8.507059e+37
    %v975 = vand.u32 %v962, 2147483648
    %v976 = vor.u32 1.1754944e-38, %v975
    %v977 = vsel %vm974, %v976, %v972
    %v978 = vmul.f32 1.0, %v977
    %v979 = vrcp.pop %v963
    %v980 = vmul.f32 %v963, %v979
    %v981 = vsub.f32 1.0, %v980
    %v982 = vmul.f32 %v979, %v981
    %v983 = vadd.f32 %v979, %v982
    %vm984 = vweird.f32 %v963
    %vm985 = vweird.f32 %v979
    %vm986 = vmor %vm984, %vm985
    %v987 = vsel %vm986, %v979, %v983
    %v988 = vand.u32 2147483647, %v963
    %vm989 = vcmp.eq.f32.partialorder %v988, 8.507059e+37
    %v990 = vand.u32 %v963, 2147483648
    %v991 = vor.u32 1.1754944e-38, %v990
    %v992 = vsel %vm989, %v991, %v987
    %v993 = vmul.f32 1.0, %v992
    %v994 = vtanh.pop %v955
    %v995 = vmul.f32 %v978, %v881
    %v996 = vmul.f32 %v978, %v994
    %998 = vrot.lane.b32.xlu0 %v996, 64
    %v999 = vpop.permute.xlu0 %998
    %v1001 = vadd.f32 %v995, %v999
    %v1002 = vtanh.pop %v1001
    %v1003 = vmul.f32 %v993, %v1002
    %1005 = vrot.lane.b32.xlu0 %v1003, 64
    %v1006 = vpop.permute.xlu0 %1005
    %1008 = vst.msk [vmem:[%s640] sm:$0xff] %vm381, %v1006
    %1009 = vst.msk [vmem:[%s638] sm:$0xff] %vm384, %v1006
    %v1010 = vld [vmem:[%s393] sm:$0xff]
    %v1011 = vld [vmem:[%s393 + $0x8] sm:$0xff]
    %v1012 = vld [vmem:[%s388] sm:$0xff]
    %v1013 = vld [vmem:[%s388 + $0x8] sm:$0xff]
    %v1014 = vsel %vm112, %v1010, %v1012
    %v1015 = vsel %vm113, %v1011, %v1013
    %v1016 = vld [vmem:[%s2] sm:$0xff]
    %v1017 = vld [vmem:[%s2 + $0x8] sm:$0xff]
    %v1018 = vld [vmem:[%s2 + $0x10] sm:$0xff]
    %v1019 = vld [vmem:[%s2 + $0x18] sm:$0xff]
    %v1020 = vld [vmem:[%s2 + $0x20] sm:$0xff]
    %v1021 = vld [vmem:[%s2 + $0x28] sm:$0xff]
    %v1022 = vld [vmem:[%s2 + $0x30] sm:$0xff]
    %v1023 = vld [vmem:[%s2 + $0x38] sm:$0xff]
    %v1024 = vld [vmem:[%s2 + $0x40] sm:$0xff]
    %v1025 = vld [vmem:[%s2 + $0x48] sm:$0xff]
    %v1026 = vld [vmem:[%s2 + $0x50] sm:$0xff]
    %v1027 = vld [vmem:[%s2 + $0x58] sm:$0xff]
    %v1028 = vld [vmem:[%s2 + $0x60] sm:$0xff]
    %v1029 = vld [vmem:[%s2 + $0x68] sm:$0xff]
    %v1030 = vld [vmem:[%s2 + $0x70] sm:$0xff]
    %v1031 = vld [vmem:[%s2 + $0x78] sm:$0xff]
    %v1032 = vsel %vm283, %v1006, 0
    %1034 = vmatpush.msra.mxu0 0.0
    %1035 = vmatpush.msra.mxu0 0.0
    %1036 = vmatpush.msra.mxu0 0.0
    %1037 = vmatpush.msra.mxu0 0.0
    %1038 = vmatpush.msra.mxu0 0.0
    %1039 = vmatpush.msra.mxu0 0.0
    %1040 = vmatpush.msra.mxu0 0.0
    %1041 = vmatpush.msra.mxu0 0.0
    %1042 = vmatpush.msra.mxu0 %v1030
    %1043 = vmatpush.msra.mxu0 %v1028
    %1044 = vmatpush.msra.mxu0 %v1026
    %1045 = vmatpush.msra.mxu0 %v1024
    %1046 = vmatpush.msra.mxu0 %v1022
    %1047 = vmatpush.msra.mxu0 %v1020
    %1048 = vmatpush.msra.mxu0 %v1018
    %1049 = vmatpush.msra.mxu0 %v1016
    %1050 = vmatmul.f32.gmra.mxu0 %v1032
    %v1051 = vpop.f32.mrf.mxu0
    %v1052 = vadd.f32 0.0, %v1051
    %1053 = vdwg.mxu0
    %1054 = vmatpush.msra.mxu0 0.0
    %1055 = vmatpush.msra.mxu0 0.0
    %1056 = vmatpush.msra.mxu0 0.0
    %1057 = vmatpush.msra.mxu0 0.0
    %1058 = vmatpush.msra.mxu0 0.0
    %1059 = vmatpush.msra.mxu0 0.0
    %1060 = vmatpush.msra.mxu0 0.0
    %1061 = vmatpush.msra.mxu0 0.0
    %1062 = vmatpush.msra.mxu0 %v1031
    %1063 = vmatpush.msra.mxu0 %v1029
    %1064 = vmatpush.msra.mxu0 %v1027
    %1065 = vmatpush.msra.mxu0 %v1025
    %1066 = vmatpush.msra.mxu0 %v1023
    %1067 = vmatpush.msra.mxu0 %v1021
    %1068 = vmatpush.msra.mxu0 %v1019
    %1069 = vmatpush.msra.mxu0 %v1017
    %1070 = vmatmul.f32.gmra.mxu0 %v1032
    %v1071 = vpop.f32.mrf.mxu0
    %v1072 = vadd.f32 0.0, %v1071
    %1073 = vdwg.mxu0
    %v1074 = vadd.f32 %v1014, %v1052
    %v1075 = vadd.f32 %v1015, %v1072
    %v1076 = vxor.u32 %v1074, 2147483648
    %v1077 = vxor.u32 %v1075, 2147483648
    %v1078 = vmul.f32 %v1076, 1.442695
    %v1079 = vpow.pop %v1078
    %v1080 = vmul.f32 %v1077, 1.442695
    %v1081 = vpow.pop %v1080
    %v1082 = vadd.f32 %v1079, 1.0
    %v1083 = vadd.f32 %v1081, 1.0
    %v1084 = vrcp.pop %v1082
    %v1085 = vmul.f32 %v1082, %v1084
    %v1086 = vsub.f32 1.0, %v1085
    %v1087 = vmul.f32 %v1084, %v1086
    %v1088 = vadd.f32 %v1084, %v1087
    %vm1089 = vweird.f32 %v1082
    %vm1090 = vweird.f32 %v1084
    %vm1091 = vmor %vm1089, %vm1090
    %v1092 = vsel %vm1091, %v1084, %v1088
    %v1093 = vand.u32 2147483647, %v1082
    %vm1094 = vcmp.eq.f32.partialorder %v1093, 8.507059e+37
    %v1095 = vand.u32 %v1082, 2147483648
    %v1096 = vor.u32 1.1754944e-38, %v1095
    %v1097 = vsel %vm1094, %v1096, %v1092
    %v1098 = vmul.f32 1.0, %v1097
    %v1099 = vrcp.pop %v1083
    %v1100 = vmul.f32 %v1083, %v1099
    %v1101 = vsub.f32 1.0, %v1100
    %v1102 = vmul.f32 %v1099, %v1101
    %v1103 = vadd.f32 %v1099, %v1102
    %vm1104 = vweird.f32 %v1083
    %vm1105 = vweird.f32 %v1099
    %vm1106 = vmor %vm1104, %vm1105
    %v1107 = vsel %vm1106, %v1099, %v1103
    %v1108 = vand.u32 2147483647, %v1083
    %vm1109 = vcmp.eq.f32.partialorder %v1108, 8.507059e+37
    %v1110 = vand.u32 %v1083, 2147483648
    %v1111 = vor.u32 1.1754944e-38, %v1110
    %v1112 = vsel %vm1109, %v1111, %v1107
    %v1113 = vmul.f32 1.0, %v1112
    %v1114 = vtanh.pop %v1075
    %v1115 = vmul.f32 %v1098, %v1001
    %v1116 = vmul.f32 %v1098, %v1114
    %1118 = vrot.lane.b32.xlu0 %v1116, 64
    %v1119 = vpop.permute.xlu0 %1118
    %v1121 = vadd.f32 %v1115, %v1119
    %v1122 = vtanh.pop %v1121
    %v1123 = vmul.f32 %v1113, %v1122
    %1125 = vrot.lane.b32.xlu0 %v1123, 64
    %v1126 = vpop.permute.xlu0 %1125
    %1128 = vst.msk [vmem:[%s512] sm:$0xff] %vm381, %v1126
    %1129 = vst.msk [vmem:[%s510] sm:$0xff] %vm384, %v1126
    %v1130 = vld [vmem:[%s262] sm:$0xff]
    %v1131 = vld [vmem:[%s262 + $0x8] sm:$0xff]
    %v1132 = vld [vmem:[%s257] sm:$0xff]
    %v1133 = vld [vmem:[%s257 + $0x8] sm:$0xff]
    %v1134 = vsel %vm112, %v1130, %v1132
    %v1135 = vsel %vm113, %v1131, %v1133
    %v1136 = vld [vmem:[%s2] sm:$0xff]
    %v1137 = vld [vmem:[%s2 + $0x8] sm:$0xff]
    %v1138 = vld [vmem:[%s2 + $0x10] sm:$0xff]
    %v1139 = vld [vmem:[%s2 + $0x18] sm:$0xff]
    %v1140 = vld [vmem:[%s2 + $0x20] sm:$0xff]
    %v1141 = vld [vmem:[%s2 + $0x28] sm:$0xff]
    %v1142 = vld [vmem:[%s2 + $0x30] sm:$0xff]
    %v1143 = vld [vmem:[%s2 + $0x38] sm:$0xff]
    %v1144 = vld [vmem:[%s2 + $0x40] sm:$0xff]
    %v1145 = vld [vmem:[%s2 + $0x48] sm:$0xff]
    %v1146 = vld [vmem:[%s2 + $0x50] sm:$0xff]
    %v1147 = vld [vmem:[%s2 + $0x58] sm:$0xff]
    %v1148 = vld [vmem:[%s2 + $0x60] sm:$0xff]
    %v1149 = vld [vmem:[%s2 + $0x68] sm:$0xff]
    %v1150 = vld [vmem:[%s2 + $0x70] sm:$0xff]
    %v1151 = vld [vmem:[%s2 + $0x78] sm:$0xff]
    %v1152 = vsel %vm283, %v1126, 0
    %1154 = vmatpush.msra.mxu0 0.0
    %1155 = vmatpush.msra.mxu0 0.0
    %1156 = vmatpush.msra.mxu0 0.0
    %1157 = vmatpush.msra.mxu0 0.0
    %1158 = vmatpush.msra.mxu0 0.0
    %1159 = vmatpush.msra.mxu0 0.0
    %1160 = vmatpush.msra.mxu0 0.0
    %1161 = vmatpush.msra.mxu0 0.0
    %1162 = vmatpush.msra.mxu0 %v1150
    %1163 = vmatpush.msra.mxu0 %v1148
    %1164 = vmatpush.msra.mxu0 %v1146
    %1165 = vmatpush.msra.mxu0 %v1144
    %1166 = vmatpush.msra.mxu0 %v1142
    %1167 = vmatpush.msra.mxu0 %v1140
    %1168 = vmatpush.msra.mxu0 %v1138
    %1169 = vmatpush.msra.mxu0 %v1136
    %1170 = vmatmul.f32.gmra.mxu0 %v1152
    %v1171 = vpop.f32.mrf.mxu0
    %v1172 = vadd.f32 0.0, %v1171
    %1173 = vdwg.mxu0
    %1174 = vmatpush.msra.mxu0 0.0
    %1175 = vmatpush.msra.mxu0 0.0
    %1176 = vmatpush.msra.mxu0 0.0
    %1177 = vmatpush.msra.mxu0 0.0
    %1178 = vmatpush.msra.mxu0 0.0
    %1179 = vmatpush.msra.mxu0 0.0
    %1180 = vmatpush.msra.mxu0 0.0
    %1181 = vmatpush.msra.mxu0 0.0
    %1182 = vmatpush.msra.mxu0 %v1151
    %1183 = vmatpush.msra.mxu0 %v1149
    %1184 = vmatpush.msra.mxu0 %v1147
    %1185 = vmatpush.msra.mxu0 %v1145
    %1186 = vmatpush.msra.mxu0 %v1143
    %1187 = vmatpush.msra.mxu0 %v1141
    %1188 = vmatpush.msra.mxu0 %v1139
    %1189 = vmatpush.msra.mxu0 %v1137
    %1190 = vmatmul.f32.gmra.mxu0 %v1152
    %v1191 = vpop.f32.mrf.mxu0
    %v1192 = vadd.f32 0.0, %v1191
    %1193 = vdwg.mxu0
    %v1194 = vadd.f32 %v1134, %v1172
    %v1195 = vadd.f32 %v1135, %v1192
    %v1196 = vxor.u32 %v1194, 2147483648
    %v1197 = vxor.u32 %v1195, 2147483648
    %v1198 = vmul.f32 %v1196, 1.442695
    %v1199 = vpow.pop %v1198
    %v1200 = vmul.f32 %v1197, 1.442695
    %v1201 = vpow.pop %v1200
    %v1202 = vadd.f32 %v1199, 1.0
    %v1203 = vadd.f32 %v1201, 1.0
    %v1204 = vrcp.pop %v1202
    %v1205 = vmul.f32 %v1202, %v1204
    %v1206 = vsub.f32 1.0, %v1205
    %v1207 = vmul.f32 %v1204, %v1206
    %v1208 = vadd.f32 %v1204, %v1207
    %vm1209 = vweird.f32 %v1202
    %vm1210 = vweird.f32 %v1204
    %vm1211 = vmor %vm1209, %vm1210
    %v1212 = vsel %vm1211, %v1204, %v1208
    %v1213 = vand.u32 2147483647, %v1202
    %vm1214 = vcmp.eq.f32.partialorder %v1213, 8.507059e+37
    %v1215 = vand.u32 %v1202, 2147483648
    %v1216 = vor.u32 1.1754944e-38, %v1215
    %v1217 = vsel %vm1214, %v1216, %v1212
    %v1218 = vmul.f32 1.0, %v1217
    %v1219 = vrcp.pop %v1203
    %v1220 = vmul.f32 %v1203, %v1219
    %v1221 = vsub.f32 1.0, %v1220
    %v1222 = vmul.f32 %v1219, %v1221
    %v1223 = vadd.f32 %v1219, %v1222
    %vm1224 = vweird.f32 %v1203
    %vm1225 = vweird.f32 %v1219
    %vm1226 = vmor %vm1224, %vm1225
    %v1227 = vsel %vm1226, %v1219, %v1223
    %v1228 = vand.u32 2147483647, %v1203
    %vm1229 = vcmp.eq.f32.partialorder %v1228, 8.507059e+37
    %v1230 = vand.u32 %v1203, 2147483648
    %v1231 = vor.u32 1.1754944e-38, %v1230
    %v1232 = vsel %vm1229, %v1231, %v1227
    %v1233 = vmul.f32 1.0, %v1232
    %v1234 = vtanh.pop %v1195
    %v1235 = vmul.f32 %v1218, %v1121
    %v1236 = vmul.f32 %v1218, %v1234
    %1238 = vrot.lane.b32.xlu0 %v1236, 64
    %v1239 = vpop.permute.xlu0 %1238
    %v1241 = vadd.f32 %v1235, %v1239
    %v1242 = vtanh.pop %v1241
    %v1243 = vmul.f32 %v1233, %v1242
    %1245 = vrot.lane.b32.xlu0 %v1243, 64
    %v1246 = vpop.permute.xlu0 %1245
    %1248 = vst.msk [vmem:[%s383] sm:$0xff] %vm381, %v1246
    %1249 = vst.msk [vmem:[#allocation3] sm:$0xff] %vm384, %v1246
    %v1250 = vld [vmem:[#allocation3] sm:$0xff]
    %v1251 = vld [vmem:[#allocation3 + $0x8] sm:$0xff]
    %v1252 = vld [vmem:[#allocation3 + $0x10] sm:$0xff]
    %v1253 = vld [vmem:[#allocation3 + $0x18] sm:$0xff]
    %v1254 = vld [vmem:[#allocation3 + $0x20] sm:$0xff]
    %v1255 = vld [vmem:[#allocation3 + $0x28] sm:$0xff]
    %v1256 = vld [vmem:[#allocation3 + $0x30] sm:$0xff]
    %v1257 = vld [vmem:[#allocation3 + $0x38] sm:$0xff]
    %v1258 = vld [vmem:[#allocation4] sm:$0xff]
    %v1259 = vld [vmem:[#allocation4 + $0x8] sm:$0xff]
    %v1260 = vld [vmem:[#allocation4 + $0x10] sm:$0xff]
    %v1261 = vld [vmem:[#allocation4 + $0x18] sm:$0xff]
    %v1262 = vld [vmem:[#allocation4 + $0x20] sm:$0xff]
    %v1263 = vld [vmem:[#allocation4 + $0x28] sm:$0xff]
    %v1264 = vld [vmem:[#allocation4 + $0x30] sm:$0xff]
    %v1265 = vld [vmem:[#allocation4 + $0x38] sm:$0xff]
    %v1266 = vld [vmem:[#allocation4 + $0x40] sm:$0xff]
    %v1267 = vld [vmem:[#allocation4 + $0x48] sm:$0xff]
    %v1268 = vld [vmem:[#allocation4 + $0x50] sm:$0xff]
    %v1269 = vld [vmem:[#allocation4 + $0x58] sm:$0xff]
    %v1270 = vld [vmem:[#allocation4 + $0x60] sm:$0xff]
    %v1271 = vld [vmem:[#allocation4 + $0x68] sm:$0xff]
    %v1272 = vld [vmem:[#allocation4 + $0x70] sm:$0xff]
    %v1273 = vld [vmem:[#allocation4 + $0x78] sm:$0xff]
    %v1274 = vld [vmem:[%s6] sm:$0x3]
    %v1276 = vperm.slane %v1274, 0
    %v1277 = vperm.slane %v1274, 1
    %v1281 = vsel %vm283, %v1250, 0
    %v1284 = vsel %vm283, %v1251, 0
    %v1287 = vsel %vm283, %v1252, 0
    %v1290 = vsel %vm283, %v1253, 0
    %v1293 = vsel %vm283, %v1254, 0
    %v1296 = vsel %vm283, %v1255, 0
    %v1299 = vsel %vm283, %v1256, 0
    %v1302 = vsel %vm283, %v1257, 0
    %1304 = vmatpush.msra.mxu0 0.0
    %1305 = vmatpush.msra.mxu0 0.0
    %1306 = vmatpush.msra.mxu0 0.0
    %1307 = vmatpush.msra.mxu0 0.0
    %1308 = vmatpush.msra.mxu0 0.0
    %1309 = vmatpush.msra.mxu0 0.0
    %1310 = vmatpush.msra.mxu0 0.0
    %1311 = vmatpush.msra.mxu0 0.0
    %1312 = vmatpush.msra.mxu0 %v1272
    %1313 = vmatpush.msra.mxu0 %v1270
    %1314 = vmatpush.msra.mxu0 %v1268
    %1315 = vmatpush.msra.mxu0 %v1266
    %1316 = vmatpush.msra.mxu0 %v1264
    %1317 = vmatpush.msra.mxu0 %v1262
    %1318 = vmatpush.msra.mxu0 %v1260
    %1319 = vmatpush.msra.mxu0 %v1258
    %1320 = vmatmul.f32.gmra.mxu0 %v1281
    %v1321 = vpop.f32.mrf.mxu0
    %v1322 = vadd.f32 %v1276, %v1321
    %1323 = vmatmul.f32.gmra.mxu0 %v1284
    %v1324 = vpop.f32.mrf.mxu0
    %v1325 = vadd.f32 %v1276, %v1324
    %1326 = vmatmul.f32.gmra.mxu0 %v1287
    %v1327 = vpop.f32.mrf.mxu0
    %v1328 = vadd.f32 %v1276, %v1327
    %1329 = vmatmul.f32.gmra.mxu0 %v1290
    %v1330 = vpop.f32.mrf.mxu0
    %v1331 = vadd.f32 %v1276, %v1330
    %1332 = vmatmul.f32.gmra.mxu0 %v1293
    %v1333 = vpop.f32.mrf.mxu0
    %v1334 = vadd.f32 %v1276, %v1333
    %1335 = vmatmul.f32.gmra.mxu0 %v1296
    %v1336 = vpop.f32.mrf.mxu0
    %v1337 = vadd.f32 %v1276, %v1336
    %1338 = vmatmul.f32.gmra.mxu0 %v1299
    %v1339 = vpop.f32.mrf.mxu0
    %v1340 = vadd.f32 %v1276, %v1339
    %1341 = vmatmul.f32.gmra.mxu0 %v1302
    %v1342 = vpop.f32.mrf.mxu0
    %v1343 = vadd.f32 %v1276, %v1342
    %1344 = vdwg.mxu0
    %1345 = vmatpush.msra.mxu0 0.0
    %1346 = vmatpush.msra.mxu0 0.0
    %1347 = vmatpush.msra.mxu0 0.0
    %1348 = vmatpush.msra.mxu0 0.0
    %1349 = vmatpush.msra.mxu0 0.0
    %1350 = vmatpush.msra.mxu0 0.0
    %1351 = vmatpush.msra.mxu0 0.0
    %1352 = vmatpush.msra.mxu0 0.0
    %1353 = vmatpush.msra.mxu0 %v1273
    %1354 = vmatpush.msra.mxu0 %v1271
    %1355 = vmatpush.msra.mxu0 %v1269
    %1356 = vmatpush.msra.mxu0 %v1267
    %1357 = vmatpush.msra.mxu0 %v1265
    %1358 = vmatpush.msra.mxu0 %v1263
    %1359 = vmatpush.msra.mxu0 %v1261
    %1360 = vmatpush.msra.mxu0 %v1259
    %1361 = vmatmul.f32.gmra.mxu0 %v1281
    %v1362 = vpop.f32.mrf.mxu0
    %v1363 = vadd.f32 %v1277, %v1362
    %1364 = vmatmul.f32.gmra.mxu0 %v1284
    %v1365 = vpop.f32.mrf.mxu0
    %v1366 = vadd.f32 %v1277, %v1365
    %1367 = vmatmul.f32.gmra.mxu0 %v1287
    %v1368 = vpop.f32.mrf.mxu0
    %v1369 = vadd.f32 %v1277, %v1368
    %1370 = vmatmul.f32.gmra.mxu0 %v1290
    %v1371 = vpop.f32.mrf.mxu0
    %v1372 = vadd.f32 %v1277, %v1371
    %1373 = vmatmul.f32.gmra.mxu0 %v1293
    %v1374 = vpop.f32.mrf.mxu0
    %v1375 = vadd.f32 %v1277, %v1374
    %1376 = vmatmul.f32.gmra.mxu0 %v1296
    %v1377 = vpop.f32.mrf.mxu0
    %v1378 = vadd.f32 %v1277, %v1377
    %1379 = vmatmul.f32.gmra.mxu0 %v1299
    %v1380 = vpop.f32.mrf.mxu0
    %v1381 = vadd.f32 %v1277, %v1380
    %1382 = vmatmul.f32.gmra.mxu0 %v1302
    %v1383 = vpop.f32.mrf.mxu0
    %v1384 = vadd.f32 %v1277, %v1383
    %1385 = vdwg.mxu0
    %1386 = vst [vmem:[#allocation2] sm:$0xff] %v1322
    %1387 = vst [vmem:[#allocation2 + $0x8] sm:$0xff] %v1363
    %1388 = vst [vmem:[#allocation2 + $0x10] sm:$0xff] %v1325
    %1389 = vst [vmem:[#allocation2 + $0x18] sm:$0xff] %v1366
    %1390 = vst [vmem:[#allocation2 + $0x20] sm:$0xff] %v1328
    %1391 = vst [vmem:[#allocation2 + $0x28] sm:$0xff] %v1369
    %1392 = vst [vmem:[#allocation2 + $0x30] sm:$0xff] %v1331
    %1393 = vst [vmem:[#allocation2 + $0x38] sm:$0xff] %v1372
    %1394 = vst [vmem:[#allocation2 + $0x40] sm:$0xff] %v1334
    %1395 = vst [vmem:[#allocation2 + $0x48] sm:$0xff] %v1375
    %1396 = vst [vmem:[#allocation2 + $0x50] sm:$0xff] %v1337
    %1397 = vst [vmem:[#allocation2 + $0x58] sm:$0xff] %v1378
    %1398 = vst [vmem:[#allocation2 + $0x60] sm:$0xff] %v1340
    %1399 = vst [vmem:[#allocation2 + $0x68] sm:$0xff] %v1381
    %1400 = vst [vmem:[#allocation2 + $0x70] sm:$0xff] %v1343
    %1401 = vst [vmem:[#allocation2 + $0x78] sm:$0xff] %v1384
    %v1402 = vld [vmem:[%s257] sm:$0xff]
    %v1403 = vld [vmem:[%s257 + $0x8] sm:$0xff]
    %v1404 = vld [vmem:[%s262] sm:$0xff]
    %v1405 = vld [vmem:[%s262 + $0x8] sm:$0xff]
    %v1406 = vsel %vm112, %v1402, %v1404
    %v1407 = vsel %vm113, %v1403, %v1405
    %v1408 = vld [vmem:[#allocation6] sm:$0xff]
    %v1409 = vld [vmem:[#allocation6 + $0x8] sm:$0xff]
    %v1410 = vld [vmem:[#allocation6 + $0x10] sm:$0xff]
    %v1411 = vld [vmem:[#allocation6 + $0x18] sm:$0xff]
    %v1412 = vld [vmem:[#allocation6 + $0x20] sm:$0xff]
    %v1413 = vld [vmem:[#allocation6 + $0x28] sm:$0xff]
    %v1414 = vld [vmem:[#allocation6 + $0x30] sm:$0xff]
    %v1415 = vld [vmem:[#allocation6 + $0x38] sm:$0xff]
    %v1416 = vld [vmem:[#allocation6 + $0x40] sm:$0xff]
    %v1417 = vld [vmem:[#allocation6 + $0x48] sm:$0xff]
    %v1418 = vld [vmem:[#allocation6 + $0x50] sm:$0xff]
    %v1419 = vld [vmem:[#allocation6 + $0x58] sm:$0xff]
    %v1420 = vld [vmem:[#allocation6 + $0x60] sm:$0xff]
    %v1421 = vld [vmem:[#allocation6 + $0x68] sm:$0xff]
    %v1422 = vld [vmem:[#allocation6 + $0x70] sm:$0xff]
    %v1423 = vld [vmem:[#allocation6 + $0x78] sm:$0xff]
    %1424 = vmatpush.msra.mxu0 0.0
    %1425 = vmatpush.msra.mxu0 0.0
    %1426 = vmatpush.msra.mxu0 0.0
    %1427 = vmatpush.msra.mxu0 0.0
    %1428 = vmatpush.msra.mxu0 0.0
    %1429 = vmatpush.msra.mxu0 0.0
    %1430 = vmatpush.msra.mxu0 0.0
    %1431 = vmatpush.msra.mxu0 0.0
    %1432 = vmatpush.msra.mxu0 %v1422
    %1433 = vmatpush.msra.mxu0 %v1420
    %1434 = vmatpush.msra.mxu0 %v1418
    %1435 = vmatpush.msra.mxu0 %v1416
    %1436 = vmatpush.msra.mxu0 %v1414
    %1437 = vmatpush.msra.mxu0 %v1412
    %1438 = vmatpush.msra.mxu0 %v1410
    %1439 = vmatpush.msra.mxu0 %v1408
    %1440 = vmatmul.f32.gmra.mxu0 %v285
    %v1441 = vpop.f32.mrf.mxu0
    %v1442 = vadd.f32 0.0, %v1441
    %1443 = vdwg.mxu0
    %1444 = vmatpush.msra.mxu0 0.0
    %1445 = vmatpush.msra.mxu0 0.0
    %1446 = vmatpush.msra.mxu0 0.0
    %1447 = vmatpush.msra.mxu0 0.0
    %1448 = vmatpush.msra.mxu0 0.0
    %1449 = vmatpush.msra.mxu0 0.0
    %1450 = vmatpush.msra.mxu0 0.0
    %1451 = vmatpush.msra.mxu0 0.0
    %1452 = vmatpush.msra.mxu0 %v1423
    %1453 = vmatpush.msra.mxu0 %v1421
    %1454 = vmatpush.msra.mxu0 %v1419
    %1455 = vmatpush.msra.mxu0 %v1417
    %1456 = vmatpush.msra.mxu0 %v1415
    %1457 = vmatpush.msra.mxu0 %v1413
    %1458 = vmatpush.msra.mxu0 %v1411
    %1459 = vmatpush.msra.mxu0 %v1409
    %1460 = vmatmul.f32.gmra.mxu0 %v285
    %v1461 = vpop.f32.mrf.mxu0
    %v1462 = vadd.f32 0.0, %v1461
    %1463 = vdwg.mxu0
    %v1464 = vadd.f32 %v1406, %v1442
    %v1465 = vadd.f32 %v1407, %v1462
    %v1466 = vxor.u32 %v1464, 2147483648
    %v1467 = vxor.u32 %v1465, 2147483648
    %v1468 = vmul.f32 %v1466, 1.442695
    %v1469 = vpow.pop %v1468
    %v1470 = vmul.f32 %v1467, 1.442695
    %v1471 = vpow.pop %v1470
    %v1472 = vadd.f32 %v1469, 1.0
    %v1473 = vadd.f32 %v1471, 1.0
    %v1474 = vrcp.pop %v1472
    %v1475 = vmul.f32 %v1472, %v1474
    %v1476 = vsub.f32 1.0, %v1475
    %v1477 = vmul.f32 %v1474, %v1476
    %v1478 = vadd.f32 %v1474, %v1477
    %vm1479 = vweird.f32 %v1472
    %vm1480 = vweird.f32 %v1474
    %vm1481 = vmor %vm1479, %vm1480
    %v1482 = vsel %vm1481, %v1474, %v1478
    %v1483 = vand.u32 2147483647, %v1472
    %vm1484 = vcmp.eq.f32.partialorder %v1483, 8.507059e+37
    %v1485 = vand.u32 %v1472, 2147483648
    %v1486 = vor.u32 1.1754944e-38, %v1485
    %v1487 = vsel %vm1484, %v1486, %v1482
    %v1488 = vmul.f32 1.0, %v1487
    %v1489 = vrcp.pop %v1473
    %v1490 = vmul.f32 %v1473, %v1489
    %v1491 = vsub.f32 1.0, %v1490
    %v1492 = vmul.f32 %v1489, %v1491
    %v1493 = vadd.f32 %v1489, %v1492
    %vm1494 = vweird.f32 %v1473
    %vm1495 = vweird.f32 %v1489
    %vm1496 = vmor %vm1494, %vm1495
    %v1497 = vsel %vm1496, %v1489, %v1493
    %v1498 = vand.u32 2147483647, %v1473
    %vm1499 = vcmp.eq.f32.partialorder %v1498, 8.507059e+37
    %v1500 = vand.u32 %v1473, 2147483648
    %v1501 = vor.u32 1.1754944e-38, %v1500
    %v1502 = vsel %vm1499, %v1501, %v1497
    %v1503 = vmul.f32 1.0, %v1502
    %v1504 = vtanh.pop %v1465
    %v1505 = vmul.f32 %v1488, 0.0
    %v1506 = vmul.f32 %v1488, %v1504
    %1508 = vrot.lane.b32.xlu0 %v1506, 64
    %v1509 = vpop.permute.xlu0 %1508
    %v1511 = vadd.f32 %v1505, %v1509
    %v1512 = vtanh.pop %v1511
    %v1513 = vmul.f32 %v1503, %v1512
    %v1514 = vld [vmem:[%s388] sm:$0xff]
    %v1515 = vld [vmem:[%s388 + $0x8] sm:$0xff]
    %v1516 = vld [vmem:[%s393] sm:$0xff]
    %v1517 = vld [vmem:[%s393 + $0x8] sm:$0xff]
    %v1518 = vsel %vm112, %v1514, %v1516
    %v1519 = vsel %vm113, %v1515, %v1517
    %1521 = vrot.lane.b32.xlu0 %v1513, 64
    %v1522 = vpop.permute.xlu0 %1521
    %v1523 = vsel %vm283, %v1522, 0
    %1525 = vmatpush.msra.mxu0 0.0
    %1526 = vmatpush.msra.mxu0 0.0
    %1527 = vmatpush.msra.mxu0 0.0
    %1528 = vmatpush.msra.mxu0 0.0
    %1529 = vmatpush.msra.mxu0 0.0
    %1530 = vmatpush.msra.mxu0 0.0
    %1531 = vmatpush.msra.mxu0 0.0
    %1532 = vmatpush.msra.mxu0 0.0
    %1533 = vmatpush.msra.mxu0 %v1422
    %1534 = vmatpush.msra.mxu0 %v1420
    %1535 = vmatpush.msra.mxu0 %v1418
    %1536 = vmatpush.msra.mxu0 %v1416
    %1537 = vmatpush.msra.mxu0 %v1414
    %1538 = vmatpush.msra.mxu0 %v1412
    %1539 = vmatpush.msra.mxu0 %v1410
    %1540 = vmatpush.msra.mxu0 %v1408
    %1541 = vmatmul.f32.gmra.mxu0 %v1523
    %v1542 = vpop.f32.mrf.mxu0
    %v1543 = vadd.f32 0.0, %v1542
    %1544 = vdwg.mxu0
    %1545 = vmatpush.msra.mxu0 0.0
    %1546 = vmatpush.msra.mxu0 0.0
    %1547 = vmatpush.msra.mxu0 0.0
    %1548 = vmatpush.msra.mxu0 0.0
    %1549 = vmatpush.msra.mxu0 0.0
    %1550 = vmatpush.msra.mxu0 0.0
    %1551 = vmatpush.msra.mxu0 0.0
    %1552 = vmatpush.msra.mxu0 0.0
    %1553 = vmatpush.msra.mxu0 %v1423
    %1554 = vmatpush.msra.mxu0 %v1421
    %1555 = vmatpush.msra.mxu0 %v1419
    %1556 = vmatpush.msra.mxu0 %v1417
    %1557 = vmatpush.msra.mxu0 %v1415
    %1558 = vmatpush.msra.mxu0 %v1413
    %1559 = vmatpush.msra.mxu0 %v1411
    %1560 = vmatpush.msra.mxu0 %v1409
    %1561 = vmatmul.f32.gmra.mxu0 %v1523
    %v1562 = vpop.f32.mrf.mxu0
    %v1563 = vadd.f32 0.0, %v1562
    %1564 = vdwg.mxu0
    %v1565 = vadd.f32 %v1518, %v1543
    %v1566 = vadd.f32 %v1519, %v1563
    %v1567 = vxor.u32 %v1565, 2147483648
    %v1568 = vxor.u32 %v1566, 2147483648
    %v1569 = vmul.f32 %v1567, 1.442695
    %v1570 = vpow.pop %v1569
    %v1571 = vmul.f32 %v1568, 1.442695
    %v1572 = vpow.pop %v1571
    %v1573 = vadd.f32 %v1570, 1.0
    %v1574 = vadd.f32 %v1572, 1.0
    %v1575 = vrcp.pop %v1573
    %v1576 = vmul.f32 %v1573, %v1575
    %v1577 = vsub.f32 1.0, %v1576
    %v1578 = vmul.f32 %v1575, %v1577
    %v1579 = vadd.f32 %v1575, %v1578
    %vm1580 = vweird.f32 %v1573
    %vm1581 = vweird.f32 %v1575
    %vm1582 = vmor %vm1580, %vm1581
    %v1583 = vsel %vm1582, %v1575, %v1579
    %v1584 = vand.u32 2147483647, %v1573
    %vm1585 = vcmp.eq.f32.partialorder %v1584, 8.507059e+37
    %v1586 = vand.u32 %v1573, 2147483648
    %v1587 = vor.u32 1.1754944e-38, %v1586
    %v1588 = vsel %vm1585, %v1587, %v1583
    %v1589 = vmul.f32 1.0, %v1588
    %v1590 = vrcp.pop %v1574
    %v1591 = vmul.f32 %v1574, %v1590
    %v1592 = vsub.f32 1.0, %v1591
    %v1593 = vmul.f32 %v1590, %v1592
    %v1594 = vadd.f32 %v1590, %v1593
    %vm1595 = vweird.f32 %v1574
    %vm1596 = vweird.f32 %v1590
    %vm1597 = vmor %vm1595, %vm1596
    %v1598 = vsel %vm1597, %v1590, %v1594
    %v1599 = vand.u32 2147483647, %v1574
    %vm1600 = vcmp.eq.f32.partialorder %v1599, 8.507059e+37
    %v1601 = vand.u32 %v1574, 2147483648
    %v1602 = vor.u32 1.1754944e-38, %v1601
    %v1603 = vsel %vm1600, %v1602, %v1598
    %v1604 = vmul.f32 1.0, %v1603
    %v1605 = vtanh.pop %v1566
    %v1606 = vmul.f32 %v1589, %v1511
    %v1607 = vmul.f32 %v1589, %v1605
    %1609 = vrot.lane.b32.xlu0 %v1607, 64
    %v1610 = vpop.permute.xlu0 %1609
    %v1612 = vadd.f32 %v1606, %v1610
    %v1613 = vtanh.pop %v1612
    %v1614 = vmul.f32 %v1604, %v1613
    %v1615 = vld [vmem:[%s516] sm:$0xff]
    %v1616 = vld [vmem:[%s516 + $0x8] sm:$0xff]
    %v1617 = vld [vmem:[%s521] sm:$0xff]
    %v1618 = vld [vmem:[%s521 + $0x8] sm:$0xff]
    %v1619 = vsel %vm112, %v1615, %v1617
    %v1620 = vsel %vm113, %v1616, %v1618
    %1622 = vrot.lane.b32.xlu0 %v1614, 64
    %v1623 = vpop.permute.xlu0 %1622
    %v1624 = vsel %vm283, %v1623, 0
    %1626 = vmatpush.msra.mxu0 0.0
    %1627 = vmatpush.msra.mxu0 0.0
    %1628 = vmatpush.msra.mxu0 0.0
    %1629 = vmatpush.msra.mxu0 0.0
    %1630 = vmatpush.msra.mxu0 0.0
    %1631 = vmatpush.msra.mxu0 0.0
    %1632 = vmatpush.msra.mxu0 0.0
    %1633 = vmatpush.msra.mxu0 0.0
    %1634 = vmatpush.msra.mxu0 %v1422
    %1635 = vmatpush.msra.mxu0 %v1420
    %1636 = vmatpush.msra.mxu0 %v1418
    %1637 = vmatpush.msra.mxu0 %v1416
    %1638 = vmatpush.msra.mxu0 %v1414
    %1639 = vmatpush.msra.mxu0 %v1412
    %1640 = vmatpush.msra.mxu0 %v1410
    %1641 = vmatpush.msra.mxu0 %v1408
    %1642 = vmatmul.f32.gmra.mxu0 %v1624
    %v1643 = vpop.f32.mrf.mxu0
    %v1644 = vadd.f32 0.0, %v1643
    %1645 = vdwg.mxu0
    %1646 = vmatpush.msra.mxu0 0.0
    %1647 = vmatpush.msra.mxu0 0.0
    %1648 = vmatpush.msra.mxu0 0.0
    %1649 = vmatpush.msra.mxu0 0.0
    %1650 = vmatpush.msra.mxu0 0.0
    %1651 = vmatpush.msra.mxu0 0.0
    %1652 = vmatpush.msra.mxu0 0.0
    %1653 = vmatpush.msra.mxu0 0.0
    %1654 = vmatpush.msra.mxu0 %v1423
    %1655 = vmatpush.msra.mxu0 %v1421
    %1656 = vmatpush.msra.mxu0 %v1419
    %1657 = vmatpush.msra.mxu0 %v1417
    %1658 = vmatpush.msra.mxu0 %v1415
    %1659 = vmatpush.msra.mxu0 %v1413
    %1660 = vmatpush.msra.mxu0 %v1411
    %1661 = vmatpush.msra.mxu0 %v1409
    %1662 = vmatmul.f32.gmra.mxu0 %v1624
    %v1663 = vpop.f32.mrf.mxu0
    %v1664 = vadd.f32 0.0, %v1663
    %1665 = vdwg.mxu0
    %v1666 = vadd.f32 %v1619, %v1644
    %v1667 = vadd.f32 %v1620, %v1664
    %v1668 = vxor.u32 %v1666, 2147483648
    %v1669 = vxor.u32 %v1667, 2147483648
    %v1670 = vmul.f32 %v1668, 1.442695
    %v1671 = vpow.pop %v1670
    %v1672 = vmul.f32 %v1669, 1.442695
    %v1673 = vpow.pop %v1672
    %v1674 = vadd.f32 %v1671, 1.0
    %v1675 = vadd.f32 %v1673, 1.0
    %v1676 = vrcp.pop %v1674
    %v1677 = vmul.f32 %v1674, %v1676
    %v1678 = vsub.f32 1.0, %v1677
    %v1679 = vmul.f32 %v1676, %v1678
    %v1680 = vadd.f32 %v1676, %v1679
    %vm1681 = vweird.f32 %v1674
    %vm1682 = vweird.f32 %v1676
    %vm1683 = vmor %vm1681, %vm1682
    %v1684 = vsel %vm1683, %v1676, %v1680
    %v1685 = vand.u32 2147483647, %v1674
    %vm1686 = vcmp.eq.f32.partialorder %v1685, 8.507059e+37
    %v1687 = vand.u32 %v1674, 2147483648
    %v1688 = vor.u32 1.1754944e-38, %v1687
    %v1689 = vsel %vm1686, %v1688, %v1684
    %v1690 = vmul.f32 1.0, %v1689
    %v1691 = vrcp.pop %v1675
    %v1692 = vmul.f32 %v1675, %v1691
    %v1693 = vsub.f32 1.0, %v1692
    %v1694 = vmul.f32 %v1691, %v1693
    %v1695 = vadd.f32 %v1691, %v1694
    %vm1696 = vweird.f32 %v1675
    %vm1697 = vweird.f32 %v1691
    %vm1698 = vmor %vm1696, %vm1697
    %v1699 = vsel %vm1698, %v1691, %v1695
    %v1700 = vand.u32 2147483647, %v1675
    %vm1701 = vcmp.eq.f32.partialorder %v1700, 8.507059e+37
    %v1702 = vand.u32 %v1675, 2147483648
    %v1703 = vor.u32 1.1754944e-38, %v1702
    %v1704 = vsel %vm1701, %v1703, %v1699
    %v1705 = vmul.f32 1.0, %v1704
    %v1706 = vtanh.pop %v1667
    %v1707 = vmul.f32 %v1690, %v1612
    %v1708 = vmul.f32 %v1690, %v1706
    %1710 = vrot.lane.b32.xlu0 %v1708, 64
    %v1711 = vpop.permute.xlu0 %1710
    %v1713 = vadd.f32 %v1707, %v1711
    %v1714 = vtanh.pop %v1713
    %v1715 = vmul.f32 %v1705, %v1714
    %v1716 = vld [vmem:[%s644] sm:$0xff]
    %v1717 = vld [vmem:[%s644 + $0x8] sm:$0xff]
    %v1718 = vld [vmem:[%s649] sm:$0xff]
    %v1719 = vld [vmem:[%s649 + $0x8] sm:$0xff]
    %v1720 = vsel %vm112, %v1716, %v1718
    %v1721 = vsel %vm113, %v1717, %v1719
    %1723 = vrot.lane.b32.xlu0 %v1715, 64
    %v1724 = vpop.permute.xlu0 %1723
    %v1725 = vsel %vm283, %v1724, 0
    %1727 = vmatpush.msra.mxu0 0.0
    %1728 = vmatpush.msra.mxu0 0.0
    %1729 = vmatpush.msra.mxu0 0.0
    %1730 = vmatpush.msra.mxu0 0.0
    %1731 = vmatpush.msra.mxu0 0.0
    %1732 = vmatpush.msra.mxu0 0.0
    %1733 = vmatpush.msra.mxu0 0.0
    %1734 = vmatpush.msra.mxu0 0.0
    %1735 = vmatpush.msra.mxu0 %v1422
    %1736 = vmatpush.msra.mxu0 %v1420
    %1737 = vmatpush.msra.mxu0 %v1418
    %1738 = vmatpush.msra.mxu0 %v1416
    %1739 = vmatpush.msra.mxu0 %v1414
    %1740 = vmatpush.msra.mxu0 %v1412
    %1741 = vmatpush.msra.mxu0 %v1410
    %1742 = vmatpush.msra.mxu0 %v1408
    %1743 = vmatmul.f32.gmra.mxu0 %v1725
    %v1744 = vpop.f32.mrf.mxu0
    %v1745 = vadd.f32 0.0, %v1744
    %1746 = vdwg.mxu0
    %1747 = vmatpush.msra.mxu0 0.0
    %1748 = vmatpush.msra.mxu0 0.0
    %1749 = vmatpush.msra.mxu0 0.0
    %1750 = vmatpush.msra.mxu0 0.0
    %1751 = vmatpush.msra.mxu0 0.0
    %1752 = vmatpush.msra.mxu0 0.0
    %1753 = vmatpush.msra.mxu0 0.0
    %1754 = vmatpush.msra.mxu0 0.0
    %1755 = vmatpush.msra.mxu0 %v1423
    %1756 = vmatpush.msra.mxu0 %v1421
    %1757 = vmatpush.msra.mxu0 %v1419
    %1758 = vmatpush.msra.mxu0 %v1417
    %1759 = vmatpush.msra.mxu0 %v1415
    %1760 = vmatpush.msra.mxu0 %v1413
    %1761 = vmatpush.msra.mxu0 %v1411
    %1762 = vmatpush.msra.mxu0 %v1409
    %1763 = vmatmul.f32.gmra.mxu0 %v1725
    %v1764 = vpop.f32.mrf.mxu0
    %v1765 = vadd.f32 0.0, %v1764
    %1766 = vdwg.mxu0
    %v1767 = vadd.f32 %v1720, %v1745
    %v1768 = vadd.f32 %v1721, %v1765
    %v1769 = vxor.u32 %v1767, 2147483648
    %v1770 = vxor.u32 %v1768, 2147483648
    %v1771 = vmul.f32 %v1769, 1.442695
    %v1772 = vpow.pop %v1771
    %v1773 = vmul.f32 %v1770, 1.442695
    %v1774 = vpow.pop %v1773
    %v1775 = vadd.f32 %v1772, 1.0
    %v1776 = vadd.f32 %v1774, 1.0
    %v1777 = vrcp.pop %v1775
    %v1778 = vmul.f32 %v1775, %v1777
    %v1779 = vsub.f32 1.0, %v1778
    %v1780 = vmul.f32 %v1777, %v1779
    %v1781 = vadd.f32 %v1777, %v1780
    %vm1782 = vweird.f32 %v1775
    %vm1783 = vweird.f32 %v1777
    %vm1784 = vmor %vm1782, %vm1783
    %v1785 = vsel %vm1784, %v1777, %v1781
    %v1786 = vand.u32 2147483647, %v1775
    %vm1787 = vcmp.eq.f32.partialorder %v1786, 8.507059e+37
    %v1788 = vand.u32 %v1775, 2147483648
    %v1789 = vor.u32 1.1754944e-38, %v1788
    %v1790 = vsel %vm1787, %v1789, %v1785
    %v1791 = vmul.f32 1.0, %v1790
    %v1792 = vrcp.pop %v1776
    %v1793 = vmul.f32 %v1776, %v1792
    %v1794 = vsub.f32 1.0, %v1793
    %v1795 = vmul.f32 %v1792, %v1794
    %v1796 = vadd.f32 %v1792, %v1795
    %vm1797 = vweird.f32 %v1776
    %vm1798 = vweird.f32 %v1792
    %vm1799 = vmor %vm1797, %vm1798
    %v1800 = vsel %vm1799, %v1792, %v1796
    %v1801 = vand.u32 2147483647, %v1776
    %vm1802 = vcmp.eq.f32.partialorder %v1801, 8.507059e+37
    %v1803 = vand.u32 %v1776, 2147483648
    %v1804 = vor.u32 1.1754944e-38, %v1803
    %v1805 = vsel %vm1802, %v1804, %v1800
    %v1806 = vmul.f32 1.0, %v1805
    %v1807 = vtanh.pop %v1768
    %v1808 = vmul.f32 %v1791, %v1713
    %v1809 = vmul.f32 %v1791, %v1807
    %1811 = vrot.lane.b32.xlu0 %v1809, 64
    %v1812 = vpop.permute.xlu0 %1811
    %v1814 = vadd.f32 %v1808, %v1812
    %v1815 = vtanh.pop %v1814
    %v1816 = vmul.f32 %v1806, %v1815
    %v1817 = vsel %vm112, %v1718, %v1716
    %v1818 = vsel %vm113, %v1719, %v1717
    %1820 = vrot.lane.b32.xlu0 %v1816, 64
    %v1821 = vpop.permute.xlu0 %1820
    %v1822 = vsel %vm283, %v1821, 0
    %1824 = vmatpush.msra.mxu0 0.0
    %1825 = vmatpush.msra.mxu0 0.0
    %1826 = vmatpush.msra.mxu0 0.0
    %1827 = vmatpush.msra.mxu0 0.0
    %1828 = vmatpush.msra.mxu0 0.0
    %1829 = vmatpush.msra.mxu0 0.0
    %1830 = vmatpush.msra.mxu0 0.0
    %1831 = vmatpush.msra.mxu0 0.0
    %1832 = vmatpush.msra.mxu0 %v1422
    %1833 = vmatpush.msra.mxu0 %v1420
    %1834 = vmatpush.msra.mxu0 %v1418
    %1835 = vmatpush.msra.mxu0 %v1416
    %1836 = vmatpush.msra.mxu0 %v1414
    %1837 = vmatpush.msra.mxu0 %v1412
    %1838 = vmatpush.msra.mxu0 %v1410
    %1839 = vmatpush.msra.mxu0 %v1408
    %1840 = vmatmul.f32.gmra.mxu0 %v1822
    %v1841 = vpop.f32.mrf.mxu0
    %v1842 = vadd.f32 0.0, %v1841
    %1843 = vdwg.mxu0
    %1844 = vmatpush.msra.mxu0 0.0
    %1845 = vmatpush.msra.mxu0 0.0
    %1846 = vmatpush.msra.mxu0 0.0
    %1847 = vmatpush.msra.mxu0 0.0
    %1848 = vmatpush.msra.mxu0 0.0
    %1849 = vmatpush.msra.mxu0 0.0
    %1850 = vmatpush.msra.mxu0 0.0
    %1851 = vmatpush.msra.mxu0 0.0
    %1852 = vmatpush.msra.mxu0 %v1423
    %1853 = vmatpush.msra.mxu0 %v1421
    %1854 = vmatpush.msra.mxu0 %v1419
    %1855 = vmatpush.msra.mxu0 %v1417
    %1856 = vmatpush.msra.mxu0 %v1415
    %1857 = vmatpush.msra.mxu0 %v1413
    %1858 = vmatpush.msra.mxu0 %v1411
    %1859 = vmatpush.msra.mxu0 %v1409
    %1860 = vmatmul.f32.gmra.mxu0 %v1822
    %v1861 = vpop.f32.mrf.mxu0
    %v1862 = vadd.f32 0.0, %v1861
    %1863 = vdwg.mxu0
    %v1864 = vadd.f32 %v1817, %v1842
    %v1865 = vadd.f32 %v1818, %v1862
    %v1866 = vxor.u32 %v1864, 2147483648
    %v1867 = vxor.u32 %v1865, 2147483648
    %v1868 = vmul.f32 %v1866, 1.442695
    %v1869 = vpow.pop %v1868
    %v1870 = vmul.f32 %v1867, 1.442695
    %v1871 = vpow.pop %v1870
    %v1872 = vadd.f32 %v1869, 1.0
    %v1873 = vadd.f32 %v1871, 1.0
    %v1874 = vrcp.pop %v1872
    %v1875 = vmul.f32 %v1872, %v1874
    %v1876 = vsub.f32 1.0, %v1875
    %v1877 = vmul.f32 %v1874, %v1876
    %v1878 = vadd.f32 %v1874, %v1877
    %vm1879 = vweird.f32 %v1872
    %vm1880 = vweird.f32 %v1874
    %vm1881 = vmor %vm1879, %vm1880
    %v1882 = vsel %vm1881, %v1874, %v1878
    %v1883 = vand.u32 2147483647, %v1872
    %vm1884 = vcmp.eq.f32.partialorder %v1883, 8.507059e+37
    %v1885 = vand.u32 %v1872, 2147483648
    %v1886 = vor.u32 1.1754944e-38, %v1885
    %v1887 = vsel %vm1884, %v1886, %v1882
    %v1888 = vmul.f32 1.0, %v1887
    %v1889 = vrcp.pop %v1873
    %v1890 = vmul.f32 %v1873, %v1889
    %v1891 = vsub.f32 1.0, %v1890
    %v1892 = vmul.f32 %v1889, %v1891
    %v1893 = vadd.f32 %v1889, %v1892
    %vm1894 = vweird.f32 %v1873
    %vm1895 = vweird.f32 %v1889
    %vm1896 = vmor %vm1894, %vm1895
    %v1897 = vsel %vm1896, %v1889, %v1893
    %v1898 = vand.u32 2147483647, %v1873
    %vm1899 = vcmp.eq.f32.partialorder %v1898, 8.507059e+37
    %v1900 = vand.u32 %v1873, 2147483648
    %v1901 = vor.u32 1.1754944e-38, %v1900
    %v1902 = vsel %vm1899, %v1901, %v1897
    %v1903 = vmul.f32 1.0, %v1902
    %v1904 = vtanh.pop %v1865
    %v1905 = vmul.f32 %v1888, %v1814
    %v1906 = vmul.f32 %v1888, %v1904
    %1908 = vrot.lane.b32.xlu0 %v1906, 64
    %v1909 = vpop.permute.xlu0 %1908
    %v1911 = vadd.f32 %v1905, %v1909
    %v1912 = vtanh.pop %v1911
    %v1913 = vmul.f32 %v1903, %v1912
    %v1914 = vsel %vm112, %v1617, %v1615
    %v1915 = vsel %vm113, %v1618, %v1616
    %1917 = vrot.lane.b32.xlu0 %v1913, 64
    %v1918 = vpop.permute.xlu0 %1917
    %v1919 = vsel %vm283, %v1918, 0
    %1921 = vmatpush.msra.mxu0 0.0
    %1922 = vmatpush.msra.mxu0 0.0
    %1923 = vmatpush.msra.mxu0 0.0
    %1924 = vmatpush.msra.mxu0 0.0
    %1925 = vmatpush.msra.mxu0 0.0
    %1926 = vmatpush.msra.mxu0 0.0
    %1927 = vmatpush.msra.mxu0 0.0
    %1928 = vmatpush.msra.mxu0 0.0
    %1929 = vmatpush.msra.mxu0 %v1422
    %1930 = vmatpush.msra.mxu0 %v1420
    %1931 = vmatpush.msra.mxu0 %v1418
    %1932 = vmatpush.msra.mxu0 %v1416
    %1933 = vmatpush.msra.mxu0 %v1414
    %1934 = vmatpush.msra.mxu0 %v1412
    %1935 = vmatpush.msra.mxu0 %v1410
    %1936 = vmatpush.msra.mxu0 %v1408
    %1937 = vmatmul.f32.gmra.mxu0 %v1919
    %v1938 = vpop.f32.mrf.mxu0
    %v1939 = vadd.f32 0.0, %v1938
    %1940 = vdwg.mxu0
    %1941 = vmatpush.msra.mxu0 0.0
    %1942 = vmatpush.msra.mxu0 0.0
    %1943 = vmatpush.msra.mxu0 0.0
    %1944 = vmatpush.msra.mxu0 0.0
    %1945 = vmatpush.msra.mxu0 0.0
    %1946 = vmatpush.msra.mxu0 0.0
    %1947 = vmatpush.msra.mxu0 0.0
    %1948 = vmatpush.msra.mxu0 0.0
    %1949 = vmatpush.msra.mxu0 %v1423
    %1950 = vmatpush.msra.mxu0 %v1421
    %1951 = vmatpush.msra.mxu0 %v1419
    %1952 = vmatpush.msra.mxu0 %v1417
    %1953 = vmatpush.msra.mxu0 %v1415
    %1954 = vmatpush.msra.mxu0 %v1413
    %1955 = vmatpush.msra.mxu0 %v1411
    %1956 = vmatpush.msra.mxu0 %v1409
    %1957 = vmatmul.f32.gmra.mxu0 %v1919
    %v1958 = vpop.f32.mrf.mxu0
    %v1959 = vadd.f32 0.0, %v1958
    %1960 = vdwg.mxu0
    %v1961 = vadd.f32 %v1914, %v1939
    %v1962 = vadd.f32 %v1915, %v1959
    %v1963 = vxor.u32 %v1961, 2147483648
    %v1964 = vxor.u32 %v1962, 2147483648
    %v1965 = vmul.f32 %v1963, 1.442695
    %v1966 = vpow.pop %v1965
    %v1967 = vmul.f32 %v1964, 1.442695
    %v1968 = vpow.pop %v1967
    %v1969 = vadd.f32 %v1966, 1.0
    %v1970 = vadd.f32 %v1968, 1.0
    %v1971 = vrcp.pop %v1969
    %v1972 = vmul.f32 %v1969, %v1971
    %v1973 = vsub.f32 1.0, %v1972
    %v1974 = vmul.f32 %v1971, %v1973
    %v1975 = vadd.f32 %v1971, %v1974
    %vm1976 = vweird.f32 %v1969
    %vm1977 = vweird.f32 %v1971
    %vm1978 = vmor %vm1976, %vm1977
    %v1979 = vsel %vm1978, %v1971, %v1975
    %v1980 = vand.u32 2147483647, %v1969
    %vm1981 = vcmp.eq.f32.partialorder %v1980, 8.507059e+37
    %v1982 = vand.u32 %v1969, 2147483648
    %v1983 = vor.u32 1.1754944e-38, %v1982
    %v1984 = vsel %vm1981, %v1983, %v1979
    %v1985 = vmul.f32 1.0, %v1984
    %v1986 = vrcp.pop %v1970
    %v1987 = vmul.f32 %v1970, %v1986
    %v1988 = vsub.f32 1.0, %v1987
    %v1989 = vmul.f32 %v1986, %v1988
    %v1990 = vadd.f32 %v1986, %v1989
    %vm1991 = vweird.f32 %v1970
    %vm1992 = vweird.f32 %v1986
    %vm1993 = vmor %vm1991, %vm1992
    %v1994 = vsel %vm1993, %v1986, %v1990
    %v1995 = vand.u32 2147483647, %v1970
    %vm1996 = vcmp.eq.f32.partialorder %v1995, 8.507059e+37
    %v1997 = vand.u32 %v1970, 2147483648
    %v1998 = vor.u32 1.1754944e-38, %v1997
    %v1999 = vsel %vm1996, %v1998, %v1994
    %v2000 = vmul.f32 1.0, %v1999
    %v2001 = vtanh.pop %v1962
    %v2002 = vmul.f32 %v1985, %v1911
    %v2003 = vmul.f32 %v1985, %v2001
    %2005 = vrot.lane.b32.xlu0 %v2003, 64
    %v2006 = vpop.permute.xlu0 %2005
    %v2008 = vadd.f32 %v2002, %v2006
    %v2009 = vtanh.pop %v2008
    %v2010 = vmul.f32 %v2000, %v2009
    %v2011 = vsel %vm112, %v1516, %v1514
    %v2012 = vsel %vm113, %v1517, %v1515
    %2014 = vrot.lane.b32.xlu0 %v2010, 64
    %v2015 = vpop.permute.xlu0 %2014
    %v2016 = vsel %vm283, %v2015, 0
    %2018 = vmatpush.msra.mxu0 0.0
    %2019 = vmatpush.msra.mxu0 0.0
    %2020 = vmatpush.msra.mxu0 0.0
    %2021 = vmatpush.msra.mxu0 0.0
    %2022 = vmatpush.msra.mxu0 0.0
    %2023 = vmatpush.msra.mxu0 0.0
    %2024 = vmatpush.msra.mxu0 0.0
    %2025 = vmatpush.msra.mxu0 0.0
    %2026 = vmatpush.msra.mxu0 %v1422
    %2027 = vmatpush.msra.mxu0 %v1420
    %2028 = vmatpush.msra.mxu0 %v1418
    %2029 = vmatpush.msra.mxu0 %v1416
    %2030 = vmatpush.msra.mxu0 %v1414
    %2031 = vmatpush.msra.mxu0 %v1412
    %2032 = vmatpush.msra.mxu0 %v1410
    %2033 = vmatpush.msra.mxu0 %v1408
    %2034 = vmatmul.f32.gmra.mxu0 %v2016
    %v2035 = vpop.f32.mrf.mxu0
    %v2036 = vadd.f32 0.0, %v2035
    %2037 = vdwg.mxu0
    %2038 = vmatpush.msra.mxu0 0.0
    %2039 = vmatpush.msra.mxu0 0.0
    %2040 = vmatpush.msra.mxu0 0.0
    %2041 = vmatpush.msra.mxu0 0.0
    %2042 = vmatpush.msra.mxu0 0.0
    %2043 = vmatpush.msra.mxu0 0.0
    %2044 = vmatpush.msra.mxu0 0.0
    %2045 = vmatpush.msra.mxu0 0.0
    %2046 = vmatpush.msra.mxu0 %v1423
    %2047 = vmatpush.msra.mxu0 %v1421
    %2048 = vmatpush.msra.mxu0 %v1419
    %2049 = vmatpush.msra.mxu0 %v1417
    %2050 = vmatpush.msra.mxu0 %v1415
    %2051 = vmatpush.msra.mxu0 %v1413
    %2052 = vmatpush.msra.mxu0 %v1411
    %2053 = vmatpush.msra.mxu0 %v1409
    %2054 = vmatmul.f32.gmra.mxu0 %v2016
    %v2055 = vpop.f32.mrf.mxu0
    %v2056 = vadd.f32 0.0, %v2055
    %2057 = vdwg.mxu0
    %v2058 = vadd.f32 %v2011, %v2036
    %v2059 = vadd.f32 %v2012, %v2056
    %v2060 = vxor.u32 %v2058, 2147483648
    %v2061 = vxor.u32 %v2059, 2147483648
    %v2062 = vmul.f32 %v2060, 1.442695
    %v2063 = vpow.pop %v2062
    %v2064 = vmul.f32 %v2061, 1.442695
    %v2065 = vpow.pop %v2064
    %v2066 = vadd.f32 %v2063, 1.0
    %v2067 = vadd.f32 %v2065, 1.0
    %v2068 = vrcp.pop %v2066
    %v2069 = vmul.f32 %v2066, %v2068
    %v2070 = vsub.f32 1.0, %v2069
    %v2071 = vmul.f32 %v2068, %v2070
    %v2072 = vadd.f32 %v2068, %v2071
    %vm2073 = vweird.f32 %v2066
    %vm2074 = vweird.f32 %v2068
    %vm2075 = vmor %vm2073, %vm2074
    %v2076 = vsel %vm2075, %v2068, %v2072
    %v2077 = vand.u32 2147483647, %v2066
    %vm2078 = vcmp.eq.f32.partialorder %v2077, 8.507059e+37
    %v2079 = vand.u32 %v2066, 2147483648
    %v2080 = vor.u32 1.1754944e-38, %v2079
    %v2081 = vsel %vm2078, %v2080, %v2076
    %v2082 = vmul.f32 1.0, %v2081
    %v2083 = vrcp.pop %v2067
    %v2084 = vmul.f32 %v2067, %v2083
    %v2085 = vsub.f32 1.0, %v2084
    %v2086 = vmul.f32 %v2083, %v2085
    %v2087 = vadd.f32 %v2083, %v2086
    %vm2088 = vweird.f32 %v2067
    %vm2089 = vweird.f32 %v2083
    %vm2090 = vmor %vm2088, %vm2089
    %v2091 = vsel %vm2090, %v2083, %v2087
    %v2092 = vand.u32 2147483647, %v2067
    %vm2093 = vcmp.eq.f32.partialorder %v2092, 8.507059e+37
    %v2094 = vand.u32 %v2067, 2147483648
    %v2095 = vor.u32 1.1754944e-38, %v2094
    %v2096 = vsel %vm2093, %v2095, %v2091
    %v2097 = vmul.f32 1.0, %v2096
    %v2098 = vtanh.pop %v2059
    %v2099 = vmul.f32 %v2082, %v2008
    %v2100 = vmul.f32 %v2082, %v2098
    %2102 = vrot.lane.b32.xlu0 %v2100, 64
    %v2103 = vpop.permute.xlu0 %2102
    %v2105 = vadd.f32 %v2099, %v2103
    %v2106 = vtanh.pop %v2105
    %v2107 = vmul.f32 %v2097, %v2106
    %v2108 = vsel %vm112, %v1404, %v1402
    %v2109 = vsel %vm113, %v1405, %v1403
    %2111 = vrot.lane.b32.xlu0 %v2107, 64
    %v2112 = vpop.permute.xlu0 %2111
    %v2113 = vsel %vm283, %v2112, 0
    %2115 = vmatpush.msra.mxu0 0.0
    %2116 = vmatpush.msra.mxu0 0.0
    %2117 = vmatpush.msra.mxu0 0.0
    %2118 = vmatpush.msra.mxu0 0.0
    %2119 = vmatpush.msra.mxu0 0.0
    %2120 = vmatpush.msra.mxu0 0.0
    %2121 = vmatpush.msra.mxu0 0.0
    %2122 = vmatpush.msra.mxu0 0.0
    %2123 = vmatpush.msra.mxu0 %v1422
    %2124 = vmatpush.msra.mxu0 %v1420
    %2125 = vmatpush.msra.mxu0 %v1418
    %2126 = vmatpush.msra.mxu0 %v1416
    %2127 = vmatpush.msra.mxu0 %v1414
    %2128 = vmatpush.msra.mxu0 %v1412
    %2129 = vmatpush.msra.mxu0 %v1410
    %2130 = vmatpush.msra.mxu0 %v1408
    %2131 = vmatmul.f32.gmra.mxu0 %v2113
    %v2132 = vpop.f32.mrf.mxu0
    %v2133 = vadd.f32 0.0, %v2132
    %2134 = vdwg.mxu0
    %2135 = vmatpush.msra.mxu0 0.0
    %2136 = vmatpush.msra.mxu0 0.0
    %2137 = vmatpush.msra.mxu0 0.0
    %2138 = vmatpush.msra.mxu0 0.0
    %2139 = vmatpush.msra.mxu0 0.0
    %2140 = vmatpush.msra.mxu0 0.0
    %2141 = vmatpush.msra.mxu0 0.0
    %2142 = vmatpush.msra.mxu0 0.0
    %2143 = vmatpush.msra.mxu0 %v1423
    %2144 = vmatpush.msra.mxu0 %v1421
    %2145 = vmatpush.msra.mxu0 %v1419
    %2146 = vmatpush.msra.mxu0 %v1417
    %2147 = vmatpush.msra.mxu0 %v1415
    %2148 = vmatpush.msra.mxu0 %v1413
    %2149 = vmatpush.msra.mxu0 %v1411
    %2150 = vmatpush.msra.mxu0 %v1409
    %2151 = vmatmul.f32.gmra.mxu0 %v2113
    %v2152 = vpop.f32.mrf.mxu0
    %v2153 = vadd.f32 0.0, %v2152
    %2154 = vdwg.mxu0
    %v2155 = vadd.f32 %v2108, %v2133
    %v2156 = vadd.f32 %v2109, %v2153
    %v2157 = vxor.u32 %v2155, 2147483648
    %v2158 = vxor.u32 %v2156, 2147483648
    %v2159 = vmul.f32 %v2157, 1.442695
    %v2160 = vpow.pop %v2159
    %v2161 = vmul.f32 %v2158, 1.442695
    %v2162 = vpow.pop %v2161
    %v2163 = vadd.f32 %v2160, 1.0
    %v2164 = vadd.f32 %v2162, 1.0
    %v2165 = vrcp.pop %v2163
    %v2166 = vmul.f32 %v2163, %v2165
    %v2167 = vsub.f32 1.0, %v2166
    %v2168 = vmul.f32 %v2165, %v2167
    %v2169 = vadd.f32 %v2165, %v2168
    %vm2170 = vweird.f32 %v2163
    %vm2171 = vweird.f32 %v2165
    %vm2172 = vmor %vm2170, %vm2171
    %v2173 = vsel %vm2172, %v2165, %v2169
    %v2174 = vand.u32 2147483647, %v2163
    %vm2175 = vcmp.eq.f32.partialorder %v2174, 8.507059e+37
    %v2176 = vand.u32 %v2163, 2147483648
    %v2177 = vor.u32 1.1754944e-38, %v2176
    %v2178 = vsel %vm2175, %v2177, %v2173
    %v2179 = vmul.f32 1.0, %v2178
    %v2180 = vrcp.pop %v2164
    %v2181 = vmul.f32 %v2164, %v2180
    %v2182 = vsub.f32 1.0, %v2181
    %v2183 = vmul.f32 %v2180, %v2182
    %v2184 = vadd.f32 %v2180, %v2183
    %vm2185 = vweird.f32 %v2164
    %vm2186 = vweird.f32 %v2180
    %vm2187 = vmor %vm2185, %vm2186
    %v2188 = vsel %vm2187, %v2180, %v2184
    %v2189 = vand.u32 2147483647, %v2164
    %vm2190 = vcmp.eq.f32.partialorder %v2189, 8.507059e+37
    %v2191 = vand.u32 %v2164, 2147483648
    %v2192 = vor.u32 1.1754944e-38, %v2191
    %v2193 = vsel %vm2190, %v2192, %v2188
    %v2194 = vmul.f32 1.0, %v2193
    %v2195 = vtanh.pop %v2156
    %v2196 = vmul.f32 %v2179, %v2105
    %v2197 = vmul.f32 %v2179, %v2195
    %2199 = vrot.lane.b32.xlu0 %v2197, 64
    %v2200 = vpop.permute.xlu0 %2199
    %v2202 = vadd.f32 %v2196, %v2200
    %v2203 = vtanh.pop %v2202
    %v2204 = vmul.f32 %v2194, %v2203
    %v2205 = vld [vmem:[%s7] sm:$0xff]
    %v2206 = vld [vmem:[%s7 + $0x8] sm:$0xff]
    %v2207 = vld [vmem:[%s7 + $0x10] sm:$0xff]
    %v2208 = vld [vmem:[%s7 + $0x18] sm:$0xff]
    %v2209 = vld [vmem:[%s7 + $0x20] sm:$0xff]
    %v2210 = vld [vmem:[%s7 + $0x28] sm:$0xff]
    %v2211 = vld [vmem:[%s7 + $0x30] sm:$0xff]
    %v2212 = vld [vmem:[%s7 + $0x38] sm:$0xff]
    %v2213 = vld [vmem:[%s8] sm:$0x1]
    %v2215 = vperm.slane %v2213, 0
    %2218 = vrot.lane.b32.xlu0 %v2204, 64
    %v2219 = vpop.permute.xlu0 %2218
    %v2220 = vsel %vm283, %v2219, 0
    %2222 = vmatpush.msra.mxu0 0.0
    %2223 = vmatpush.msra.mxu0 0.0
    %2224 = vmatpush.msra.mxu0 0.0
    %2225 = vmatpush.msra.mxu0 0.0
    %2226 = vmatpush.msra.mxu0 0.0
    %2227 = vmatpush.msra.mxu0 0.0
    %2228 = vmatpush.msra.mxu0 0.0
    %2229 = vmatpush.msra.mxu0 0.0
    %2230 = vmatpush.msra.mxu0 %v2212
    %2231 = vmatpush.msra.mxu0 %v2211
    %2232 = vmatpush.msra.mxu0 %v2210
    %2233 = vmatpush.msra.mxu0 %v2209
    %2234 = vmatpush.msra.mxu0 %v2208
    %2235 = vmatpush.msra.mxu0 %v2207
    %2236 = vmatpush.msra.mxu0 %v2206
    %2237 = vmatpush.msra.mxu0 %v2205
    %2238 = vmatmul.f32.gmra.mxu0 %v2220
    %v2239 = vpop.f32.mrf.mxu0
    %v2240 = vadd.f32 %v2215, %v2239
    %2241 = vdwg.mxu0
    %v2242 = vmax.f32 %v2240, 0.0
    %v2243 = vld [vmem:[#allocation8] sm:$0xff]
    %v2244 = vld [vmem:[#allocation8 + $0x8] sm:$0xff]
    %v2245 = vld [vmem:[#allocation8 + $0x10] sm:$0xff]
    %v2246 = vld [vmem:[#allocation8 + $0x18] sm:$0xff]
    %v2247 = vld [vmem:[%s10] sm:$0x1]
    %v2249 = vperm.slane %v2247, 0
    %v2252 = vsel %vm381, %v2242, 0
    %2254 = vmatpush.msra.mxu0 0.0
    %2255 = vmatpush.msra.mxu0 0.0
    %2256 = vmatpush.msra.mxu0 0.0
    %2257 = vmatpush.msra.mxu0 0.0
    %2258 = vmatpush.msra.mxu0 0.0
    %2259 = vmatpush.msra.mxu0 0.0
    %2260 = vmatpush.msra.mxu0 0.0
    %2261 = vmatpush.msra.mxu0 0.0
    %2262 = vmatpush.msra.mxu0 0.0
    %2263 = vmatpush.msra.mxu0 0.0
    %2264 = vmatpush.msra.mxu0 0.0
    %2265 = vmatpush.msra.mxu0 0.0
    %2266 = vmatpush.msra.mxu0 %v2246
    %2267 = vmatpush.msra.mxu0 %v2245
    %2268 = vmatpush.msra.mxu0 %v2244
    %2269 = vmatpush.msra.mxu0 %v2243
    %2270 = vmatmul.f32.gmra.mxu0 %v2252
    %v2271 = vpop.f32.mrf.mxu0
    %v2272 = vadd.f32 %v2249, %v2271
    %2273 = vdwg.mxu0
    %2274 = vst [vmem:[%s11] sm:$0xff] %v2272
    // Predicated region
    $region58: #{multitask_forward.1} parent=1 // pred_check
      _
    $region59: #{multitask_forward.1} parent=1 // pred_check_branch
      %2276 = sbr.rel (0) target = $region61
    $region60: #{multitask_forward.1} parent=1 // pred_region
      _
    $region61: #{multitask_forward.1} parent=1 // pred_fallthru
      _
    // Predicated region
    $region62: #{multitask_forward.1} parent=1 // pred_check
      _
    $region63: #{multitask_forward.1} parent=1 // pred_check_branch
      %2278 = sbr.rel (0) target = $region65
    $region64: #{multitask_forward.1} parent=1 // pred_region
      _
    $region65: #{multitask_forward.1} parent=1 // pred_fallthru
      _
    %2279 = vsyncpa [#allocation5], 1
    %2280 = vsyncpa [#allocation7], 1

</llo_original>
